<compile_context>
chip_gen: v6e
topology: v6e:2x2x1
jax: 0.10.0
libtpu: 0.0.40
codegen_flags: <defaults>
</compile_context>

<pallas_src>
import functools

import jax
import jax.numpy as jnp
from jax import lax
from jax.experimental import pallas as pl
from jax.experimental.pallas import tpu as pltpu


def _make_fused_sru_kernel(depth, T, B, d):
    """Kernel computing `depth` bidirectional SRU layers in one invocation.

    Ref layout (float32, batch padded to B=multiple of 8, TB = T*B, time-major):
      inputs : mask (TB, 1)          1.0 == padded step
               c0   (depth*B, 2d)    initial cell state [fwd | bwd] per layer
               x0   (TB, d)          layer-0 input
               per layer, per direction: W (n_in, k*d), b (2, d)  [b_f ; b_r]
      outputs: out_f (TB, d), out_b (TB, d)   (natural time order)
               c_out (depth*B, 2d)
      scratch: F, G, R, Q (2*TB, d)  precomputed gate planes; rows [0, TB) are
               the forward direction, rows [TB, 2TB) the backward direction,
               both indexed by real (natural) time.
    NOTE: for very long sequences (esp. v7x 64 MiB VMEM) the gate planes would
    need a time-chunked grid axis; at these shapes everything fits trivially.
    """
    TB = T * B

    def kernel(*refs):
        mask_ref, c0_ref, x0_ref = refs[0], refs[1], refs[2]
        wb_refs = refs[3:3 + 4 * depth]                 # [w_f, b_f, w_b, b_b] / layer
        outf_ref = refs[3 + 4 * depth]
        outb_ref = refs[4 + 4 * depth]
        cout_ref = refs[5 + 4 * depth]
        f_sc, g_sc, r_sc, q_sc = refs[6 + 4 * depth:6 + 4 * depth + 4]

        m = mask_ref[...]                               # (TB, 1); 1.0 on padded steps
        nm = 1.0 - m

        for l in range(depth):
            w_f, b_f, w_b, b_b = wb_refs[4 * l:4 * l + 4]

            # Layer input (natural time order).  Layers > 0 read the previous
            # layer's activations straight out of the VMEM-resident output refs.
            if l == 0:
                x_parts = (x0_ref[...],)
            else:
                x_parts = (outf_ref[...], outb_ref[...])

            # ---- Vectorized precompute over the whole sequence (off the serial
            #      path): gate biases and the padding mask are folded in here.
            for dr in range(2):
                w_ref, b_ref = (w_f, b_f) if dr == 0 else (w_b, b_b)
                if l == 0:
                    u = jnp.dot(x_parts[0], w_ref[...],
                                preferred_element_type=jnp.float32)      # (TB, 4d)
                    x_res = u[:, 3 * d:4 * d]     # learned highway projection (k=4)
                else:
                    u = (jnp.dot(x_parts[0], w_ref[0:d, :],
                                 preferred_element_type=jnp.float32) +
                         jnp.dot(x_parts[1], w_ref[d:2 * d, :],
                                 preferred_element_type=jnp.float32))    # (TB, 3d)
                    x_res = x_parts[dr]           # matching input half (k=3)
                x_tilde = u[:, 0:d]
                f = jax.nn.sigmoid(u[:, d:2 * d] + b_ref[0:1, :])
                r = jax.nn.sigmoid(u[:, 2 * d:3 * d] + b_ref[1:2, :])
                r0 = dr * TB
                f_sc[r0:r0 + TB, :] = f * nm + m           # == 1 on pads -> c carries
                g_sc[r0:r0 + TB, :] = nm * (1.0 - f) * x_tilde
                r_sc[r0:r0 + TB, :] = nm * r               # == 0 on pads -> h = 0
                q_sc[r0:r0 + TB, :] = nm * (1.0 - r) * x_res

            # ---- Serial recurrence: both directions in one fully-unrolled loop,
            #      cell states kept in the loop carry (vregs), h written straight
            #      into the output refs (which double as next-layer input).
            c0_f = c0_ref[l * B:(l + 1) * B, 0:d]
            c0_b = c0_ref[l * B:(l + 1) * B, d:2 * d]

            def step(t, carry):
                c_f, c_b = carry
                of = pl.multiple_of(t * B, B)                  # fwd planes: time t
                ob = pl.multiple_of((2 * T - 1 - t) * B, B)    # bwd planes: time T-1-t
                oh = pl.multiple_of((T - 1 - t) * B, B)        # bwd output rows
                c_f = f_sc[pl.ds(of, B), :] * c_f + g_sc[pl.ds(of, B), :]
                c_b = f_sc[pl.ds(ob, B), :] * c_b + g_sc[pl.ds(ob, B), :]
                h_f = r_sc[pl.ds(of, B), :] * jnp.tanh(c_f) + q_sc[pl.ds(of, B), :]
                h_b = r_sc[pl.ds(ob, B), :] * jnp.tanh(c_b) + q_sc[pl.ds(ob, B), :]
                outf_ref[pl.ds(of, B), :] = h_f
                outb_ref[pl.ds(oh, B), :] = h_b
                return (c_f, c_b)

            c_f, c_b = lax.fori_loop(0, T, step, (c0_f, c0_b), unroll=True)
            cout_ref[l * B:(l + 1) * B, 0:d] = c_f
            cout_ref[l * B:(l + 1) * B, d:2 * d] = c_b

    return kernel


def init_params(key, embedding_dim, depth, highway_bias=-3.0):
    """Deterministic synthetic SRU parameters (uniform +-sqrt(3/n_in))."""
    d = embedding_dim
    params = []
    for l in range(depth):
        n_in = d if l == 0 else 2 * d
        k = 4 if l == 0 else 3                    # k=4: learned highway projection
        val_range = (3.0 / n_in) ** 0.5
        key, kf, kb = jax.random.split(key, 3)
        layer = []
        for kk in (kf, kb):
            w = jax.random.uniform(kk, (n_in, k * d), jnp.float32,
                                   -val_range, val_range)
            b = jnp.stack([jnp.zeros((d,), jnp.float32),
                           jnp.full((d,), highway_bias, jnp.float32)])   # (2, d)
            layer.extend([w, b])
        params.append(tuple(layer))
    return params


def model_forward(emb, hidden, mask, params, *, embedding_dim, depth):
    """emb: (B, T, D); hidden: (depth, B, 2D); mask: (B, T) with 1 = real token.
    Returns (out_forward (T,B,D), out_backward (T,B,D), hidden (depth,B,2D))."""
    d = embedding_dim
    B, T, _ = emb.shape
    Bp = max(8, ((B + 7) // 8) * 8)               # pad batch to a sublane multiple
    pad = Bp - B

    x = jnp.transpose(emb, (1, 0, 2)).astype(jnp.float32)        # emb.permute(1,0,2)
    mask_pad = (1.0 - mask.T.astype(jnp.float32))[:, :, None]    # (T, B, 1), 1 = pad
    hid = hidden.astype(jnp.float32)
    if pad:
        x = jnp.pad(x, ((0, 0), (0, pad), (0, 0)))
        mask_pad = jnp.pad(mask_pad, ((0, 0), (0, pad), (0, 0)),
                           constant_values=1.0)
        hid = jnp.pad(hid, ((0, 0), (0, pad), (0, 0)))

    TB = T * Bp
    flat_args = [mask_pad.reshape(TB, 1),
                 hid.reshape(depth * Bp, 2 * d),
                 x.reshape(TB, d)]
    for layer in params:
        flat_args.extend(layer)                                   # w_f, b_f, w_b, b_b

    kernel = _make_fused_sru_kernel(depth, T, Bp, d)
    out_f, out_b, c_out = pl.pallas_call(
        kernel,
        out_shape=(jax.ShapeDtypeStruct((TB, d), jnp.float32),
                   jax.ShapeDtypeStruct((TB, d), jnp.float32),
                   jax.ShapeDtypeStruct((depth * Bp, 2 * d), jnp.float32)),
        scratch_shapes=[pltpu.VMEM((2 * TB, d), jnp.float32) for _ in range(4)],
    )(*flat_args)

    out_forward = out_f.reshape(T, Bp, d)[:, :B, :]
    out_backward = out_b.reshape(T, Bp, d)[:, :B, :]
    hidden_out = c_out.reshape(depth, Bp, 2 * d)[:, :B, :]
    # nn.Dropout in eval mode is the identity.
    # TODO(synk): trainable=False in the reference module, so the output_layer
    # (nn.Linear) branch is never executed in forward.
    return out_forward, out_backward, hidden_out


def reference_forward(emb, hidden, mask, params, *, embedding_dim, depth):
    """Pure-JAX reference with identical SRU v1 eval-mode semantics."""
    d = embedding_dim
    B, T, _ = emb.shape
    x = jnp.transpose(emb, (1, 0, 2)).astype(jnp.float32)        # (T, B, n_in)
    m_pad = (1.0 - mask.T.astype(jnp.float32))[:, :, None]       # (T, B, 1), 1 = pad
    new_hidden = []
    for l in range(depth):
        w_f, b_f, w_b, b_b = params[l]
        outs, lasts = [], []
        for dr, (w, b) in enumerate(((w_f, b_f), (w_b, b_b))):
            xs = x if dr == 0 else x[::-1]
            ms = m_pad if dr == 0 else m_pad[::-1]
            u = jnp.einsum('tbi,ij->tbj', xs, w)
            x_tilde = u[..., 0:d]
            f = jax.nn.sigmoid(u[..., d:2 * d] + b[0])
            r = jax.nn.sigmoid(u[..., 2 * d:3 * d] + b[1])
            x_res = u[..., 3 * d:4 * d] if l == 0 else xs[..., dr * d:(dr + 1) * d]
            c = hidden[l, :, dr * d:(dr + 1) * d].astype(jnp.float32)
            hs = []
            for t in range(T):
                c_new = f[t] * c + (1.0 - f[t]) * x_tilde[t]
                c = c_new * (1.0 - ms[t]) + c * ms[t]
                h = (r[t] * jnp.tanh(c) + (1.0 - r[t]) * x_res[t]) * (1.0 - ms[t])
                hs.append(h)
            h_seq = jnp.stack(hs)
            outs.append(h_seq if dr == 0 else h_seq[::-1])
            lasts.append(c)
        x = jnp.concatenate(outs, axis=-1)
        new_hidden.append(jnp.concatenate(lasts, axis=-1))
    return x[..., :d], x[..., d:], jnp.stack(new_hidden)


if __name__ == "__main__":
    B, T, D, depth = 2, 8, 32, 2
    key = jax.random.PRNGKey(0)
    k_emb, k_par = jax.random.split(key)

    emb = jax.random.normal(k_emb, (B, T, D), jnp.float32)
    hidden = jnp.zeros((depth, B, 2 * D), jnp.float32)            # init_hidden()
    mask = jnp.ones((B, T), jnp.float32).at[1, T - 3:].set(0.0)   # item 1 has padding
    params = init_params(k_par, D, depth, highway_bias=-3.0)

    fwd = jax.jit(functools.partial(model_forward, embedding_dim=D, depth=depth))
    out_f, out_b, hid = fwd(emb, hidden, mask, params)
    jax.block_until_ready((out_f, out_b, hid))

    assert out_f.shape == (T, B, D)
    assert out_b.shape == (T, B, D)
    assert hid.shape == (depth, B, 2 * D)
    assert bool(jnp.all(jnp.isfinite(out_f))) and bool(jnp.all(jnp.isfinite(out_b)))
    # padded timesteps of batch item 1 must produce exactly zero outputs
    assert bool(jnp.all(out_f[T - 3:, 1, :] == 0.0))
    assert bool(jnp.all(out_b[T - 3:, 1, :] == 0.0))

    # cross-check against the pure-JAX reference
    ref_f, ref_b, ref_h = reference_forward(emb, hidden, mask, params,
                                            embedding_dim=D, depth=depth)
    assert bool(jnp.allclose(out_f, ref_f, atol=1e-2, rtol=1e-2))
    assert bool(jnp.allclose(out_b, ref_b, atol=1e-2, rtol=1e-2))
    assert bool(jnp.allclose(hid, ref_h, atol=1e-2, rtol=1e-2))
    print("KERNEL_OK")
</pallas_src>

<mosaic_0001>
module attributes {stable_mosaic.version = 11 : i64} {
  func.func @kernel(%arg0: memref<64x1xf32, #tpu.memory_space<vmem>>, %arg1: memref<16x64xf32, #tpu.memory_space<vmem>>, %arg2: memref<64x32xf32, #tpu.memory_space<vmem>>, %arg3: memref<32x128xf32, #tpu.memory_space<vmem>>, %arg4: memref<2x32xf32, #tpu.memory_space<vmem>>, %arg5: memref<32x128xf32, #tpu.memory_space<vmem>>, %arg6: memref<2x32xf32, #tpu.memory_space<vmem>>, %arg7: memref<64x96xf32, #tpu.memory_space<vmem>>, %arg8: memref<2x32xf32, #tpu.memory_space<vmem>>, %arg9: memref<64x96xf32, #tpu.memory_space<vmem>>, %arg10: memref<2x32xf32, #tpu.memory_space<vmem>>, %arg11: memref<64x32xf32, #tpu.memory_space<vmem>>, %arg12: memref<64x32xf32, #tpu.memory_space<vmem>>, %arg13: memref<16x64xf32, #tpu.memory_space<vmem>>, %arg14: memref<128x32xf32, #tpu.memory_space<vmem>>, %arg15: memref<128x32xf32, #tpu.memory_space<vmem>>, %arg16: memref<128x32xf32, #tpu.memory_space<vmem>>, %arg17: memref<128x32xf32, #tpu.memory_space<vmem>>) attributes {dimension_semantics = [], scalar_prefetch = 0 : i64, scratch_operands = 4 : i64, tpu.core_type = #tpu.core_type<tc>} {
    %c0 = arith.constant 0 : index
    %c0_0 = arith.constant 0 : index
    %0 = vector.load %arg0[%c0, %c0_0] : memref<64x1xf32, #tpu.memory_space<vmem>>, vector<64x1xf32>
    %cst = arith.constant 1.000000e+00 : f32
    %1 = vector.broadcast %cst : f32 to vector<64x1xf32>
    %2 = arith.subf %1, %0 : vector<64x1xf32>
    %c0_1 = arith.constant 0 : index
    %c0_2 = arith.constant 0 : index
    %3 = vector.load %arg2[%c0_1, %c0_2] : memref<64x32xf32, #tpu.memory_space<vmem>>, vector<64x32xf32>
    %c0_3 = arith.constant 0 : index
    %c0_4 = arith.constant 0 : index
    %4 = vector.load %arg3[%c0_3, %c0_4] : memref<32x128xf32, #tpu.memory_space<vmem>>, vector<32x128xf32>
    %cst_5 = arith.constant dense<0.000000e+00> : vector<64x128xf32>
    %5 = tpu.matmul %3, %4, %cst_5 {dimension_numbers = #tpu.dot_dimension_numbers<[1], [0], [0], [1], [0, 0, 1, 1], [], []>} : vector<64x32xf32>, vector<32x128xf32>, vector<64x128xf32> -> vector<64x128xf32>
    %6 = vector.extract_strided_slice %5 {offsets = [0, 96], sizes = [64, 32], strides = [1, 1]} : vector<64x128xf32> to vector<64x32xf32>
    %7 = vector.extract_strided_slice %5 {offsets = [0, 0], sizes = [64, 32], strides = [1, 1]} : vector<64x128xf32> to vector<64x32xf32>
    %8 = vector.extract_strided_slice %5 {offsets = [0, 32], sizes = [64, 32], strides = [1, 1]} : vector<64x128xf32> to vector<64x32xf32>
    %c0_6 = arith.constant 0 : index
    %c0_7 = arith.constant 0 : index
    %9 = vector.load %arg4[%c0_6, %c0_7] : memref<2x32xf32, #tpu.memory_space<vmem>>, vector<1x32xf32>
    %10 = vector.broadcast %9 : vector<1x32xf32> to vector<64x32xf32>
    %11 = arith.addf %8, %10 : vector<64x32xf32>
    %12 = arith.negf %11 : vector<64x32xf32>
    %13 = math.exp %12 : vector<64x32xf32>
    %cst_8 = arith.constant 1.000000e+00 : f32
    %14 = vector.broadcast %cst_8 : f32 to vector<64x32xf32>
    %15 = arith.addf %14, %13 : vector<64x32xf32>
    %16 = arith.divf %14, %15 : vector<64x32xf32>
    %17 = vector.extract_strided_slice %5 {offsets = [0, 64], sizes = [64, 32], strides = [1, 1]} : vector<64x128xf32> to vector<64x32xf32>
    %c1 = arith.constant 1 : index
    %c0_9 = arith.constant 0 : index
    %18 = vector.load %arg4[%c1, %c0_9] : memref<2x32xf32, #tpu.memory_space<vmem>>, vector<1x32xf32>
    %19 = vector.broadcast %18 : vector<1x32xf32> to vector<64x32xf32>
    %20 = arith.addf %17, %19 : vector<64x32xf32>
    %21 = arith.negf %20 : vector<64x32xf32>
    %22 = math.exp %21 : vector<64x32xf32>
    %cst_10 = arith.constant 1.000000e+00 : f32
    %23 = vector.broadcast %cst_10 : f32 to vector<64x32xf32>
    %24 = arith.addf %23, %22 : vector<64x32xf32>
    %25 = arith.divf %23, %24 : vector<64x32xf32>
    %26 = vector.broadcast %2 : vector<64x1xf32> to vector<64x32xf32>
    %27 = arith.mulf %16, %26 : vector<64x32xf32>
    %28 = vector.broadcast %0 : vector<64x1xf32> to vector<64x32xf32>
    %29 = arith.addf %27, %28 : vector<64x32xf32>
    %c0_11 = arith.constant 0 : index
    %c0_12 = arith.constant 0 : index
    %30 = vector.load %arg14[%c0_11, %c0_12] : memref<128x32xf32, #tpu.memory_space<vmem>>, vector<64x32xf32>
    tpu.vector_store %arg14[%c0_11, %c0_12], %29 {strides = array<i32>} : memref<128x32xf32, #tpu.memory_space<vmem>>, vector<64x32xf32>,
    %cst_13 = arith.constant 1.000000e+00 : f32
    %31 = vector.broadcast %cst_13 : f32 to vector<64x32xf32>
    %32 = arith.subf %31, %16 : vector<64x32xf32>
    %33 = vector.broadcast %2 : vector<64x1xf32> to vector<64x32xf32>
    %34 = arith.mulf %33, %32 : vector<64x32xf32>
    %35 = arith.mulf %34, %7 : vector<64x32xf32>
    %c0_14 = arith.constant 0 : index
    %c0_15 = arith.constant 0 : index
    %36 = vector.load %arg15[%c0_14, %c0_15] : memref<128x32xf32, #tpu.memory_space<vmem>>, vector<64x32xf32>
    tpu.vector_store %arg15[%c0_14, %c0_15], %35 {strides = array<i32>} : memref<128x32xf32, #tpu.memory_space<vmem>>, vector<64x32xf32>,
    %37 = vector.broadcast %2 : vector<64x1xf32> to vector<64x32xf32>
    %38 = arith.mulf %37, %25 : vector<64x32xf32>
    %c0_16 = arith.constant 0 : index
    %c0_17 = arith.constant 0 : index
    %39 = vector.load %arg16[%c0_16, %c0_17] : memref<128x32xf32, #tpu.memory_space<vmem>>, vector<64x32xf32>
    tpu.vector_store %arg16[%c0_16, %c0_17], %38 {strides = array<i32>} : memref<128x32xf32, #tpu.memory_space<vmem>>, vector<64x32xf32>,
    %cst_18 = arith.constant 1.000000e+00 : f32
    %40 = vector.broadcast %cst_18 : f32 to vector<64x32xf32>
    %41 = arith.subf %40, %25 : vector<64x32xf32>
    %42 = vector.broadcast %2 : vector<64x1xf32> to vector<64x32xf32>
    %43 = arith.mulf %42, %41 : vector<64x32xf32>
    %44 = arith.mulf %43, %6 : vector<64x32xf32>
    %c0_19 = arith.constant 0 : index
    %c0_20 = arith.constant 0 : index
    %45 = vector.load %arg17[%c0_19, %c0_20] : memref<128x32xf32, #tpu.memory_space<vmem>>, vector<64x32xf32>
    tpu.vector_store %arg17[%c0_19, %c0_20], %44 {strides = array<i32>} : memref<128x32xf32, #tpu.memory_space<vmem>>, vector<64x32xf32>,
    %c0_21 = arith.constant 0 : index
    %c0_22 = arith.constant 0 : index
    %46 = vector.load %arg5[%c0_21, %c0_22] : memref<32x128xf32, #tpu.memory_space<vmem>>, vector<32x128xf32>
    %cst_23 = arith.constant dense<0.000000e+00> : vector<64x128xf32>
    %47 = tpu.matmul %3, %46, %cst_23 {dimension_numbers = #tpu.dot_dimension_numbers<[1], [0], [0], [1], [0, 0, 1, 1], [], []>} : vector<64x32xf32>, vector<32x128xf32>, vector<64x128xf32> -> vector<64x128xf32>
    %48 = vector.extract_strided_slice %47 {offsets = [0, 96], sizes = [64, 32], strides = [1, 1]} : vector<64x128xf32> to vector<64x32xf32>
    %49 = vector.extract_strided_slice %47 {offsets = [0, 0], sizes = [64, 32], strides = [1, 1]} : vector<64x128xf32> to vector<64x32xf32>
    %50 = vector.extract_strided_slice %47 {offsets = [0, 32], sizes = [64, 32], strides = [1, 1]} : vector<64x128xf32> to vector<64x32xf32>
    %c0_24 = arith.constant 0 : index
    %c0_25 = arith.constant 0 : index
    %51 = vector.load %arg6[%c0_24, %c0_25] : memref<2x32xf32, #tpu.memory_space<vmem>>, vector<1x32xf32>
    %52 = vector.broadcast %51 : vector<1x32xf32> to vector<64x32xf32>
    %53 = arith.addf %50, %52 : vector<64x32xf32>
    %54 = arith.negf %53 : vector<64x32xf32>
    %55 = math.exp %54 : vector<64x32xf32>
    %cst_26 = arith.constant 1.000000e+00 : f32
    %56 = vector.broadcast %cst_26 : f32 to vector<64x32xf32>
    %57 = arith.addf %56, %55 : vector<64x32xf32>
    %58 = arith.divf %56, %57 : vector<64x32xf32>
    %59 = vector.extract_strided_slice %47 {offsets = [0, 64], sizes = [64, 32], strides = [1, 1]} : vector<64x128xf32> to vector<64x32xf32>
    %c1_27 = arith.constant 1 : index
    %c0_28 = arith.constant 0 : index
    %60 = vector.load %arg6[%c1_27, %c0_28] : memref<2x32xf32, #tpu.memory_space<vmem>>, vector<1x32xf32>
    %61 = vector.broadcast %60 : vector<1x32xf32> to vector<64x32xf32>
    %62 = arith.addf %59, %61 : vector<64x32xf32>
    %63 = arith.negf %62 : vector<64x32xf32>
    %64 = math.exp %63 : vector<64x32xf32>
    %cst_29 = arith.constant 1.000000e+00 : f32
    %65 = vector.broadcast %cst_29 : f32 to vector<64x32xf32>
    %66 = arith.addf %65, %64 : vector<64x32xf32>
    %67 = arith.divf %65, %66 : vector<64x32xf32>
    %68 = vector.broadcast %2 : vector<64x1xf32> to vector<64x32xf32>
    %69 = arith.mulf %58, %68 : vector<64x32xf32>
    %70 = vector.broadcast %0 : vector<64x1xf32> to vector<64x32xf32>
    %71 = arith.addf %69, %70 : vector<64x32xf32>
    %c64 = arith.constant 64 : index
    %c0_30 = arith.constant 0 : index
    %72 = vector.load %arg14[%c64, %c0_30] : memref<128x32xf32, #tpu.memory_space<vmem>>, vector<64x32xf32>
    tpu.vector_store %arg14[%c64, %c0_30], %71 {strides = array<i32>} : memref<128x32xf32, #tpu.memory_space<vmem>>, vector<64x32xf32>,
    %cst_31 = arith.constant 1.000000e+00 : f32
    %73 = vector.broadcast %cst_31 : f32 to vector<64x32xf32>
    %74 = arith.subf %73, %58 : vector<64x32xf32>
    %75 = vector.broadcast %2 : vector<64x1xf32> to vector<64x32xf32>
    %76 = arith.mulf %75, %74 : vector<64x32xf32>
    %77 = arith.mulf %76, %49 : vector<64x32xf32>
    %c64_32 = arith.constant 64 : index
    %c0_33 = arith.constant 0 : index
    %78 = vector.load %arg15[%c64_32, %c0_33] : memref<128x32xf32, #tpu.memory_space<vmem>>, vector<64x32xf32>
    tpu.vector_store %arg15[%c64_32, %c0_33], %77 {strides = array<i32>} : memref<128x32xf32, #tpu.memory_space<vmem>>, vector<64x32xf32>,
    %79 = vector.broadcast %2 : vector<64x1xf32> to vector<64x32xf32>
    %80 = arith.mulf %79, %67 : vector<64x32xf32>
    %c64_34 = arith.constant 64 : index
    %c0_35 = arith.constant 0 : index
    %81 = vector.load %arg16[%c64_34, %c0_35] : memref<128x32xf32, #tpu.memory_space<vmem>>, vector<64x32xf32>
    tpu.vector_store %arg16[%c64_34, %c0_35], %80 {strides = array<i32>} : memref<128x32xf32, #tpu.memory_space<vmem>>, vector<64x32xf32>,
    %cst_36 = arith.constant 1.000000e+00 : f32
    %82 = vector.broadcast %cst_36 : f32 to vector<64x32xf32>
    %83 = arith.subf %82, %67 : vector<64x32xf32>
    %84 = vector.broadcast %2 : vector<64x1xf32> to vector<64x32xf32>
    %85 = arith.mulf %84, %83 : vector<64x32xf32>
    %86 = arith.mulf %85, %48 : vector<64x32xf32>
    %c64_37 = arith.constant 64 : index
    %c0_38 = arith.constant 0 : index
    %87 = vector.load %arg17[%c64_37, %c0_38] : memref<128x32xf32, #tpu.memory_space<vmem>>, vector<64x32xf32>
    tpu.vector_store %arg17[%c64_37, %c0_38], %86 {strides = array<i32>} : memref<128x32xf32, #tpu.memory_space<vmem>>, vector<64x32xf32>,
    %c0_39 = arith.constant 0 : index
    %c0_40 = arith.constant 0 : index
    %88 = vector.load %arg1[%c0_39, %c0_40] : memref<16x64xf32, #tpu.memory_space<vmem>>, vector<8x32xf32>
    %c0_41 = arith.constant 0 : index
    %c32 = arith.constant 32 : index
    %89 = vector.load %arg1[%c0_41, %c32] : memref<16x64xf32, #tpu.memory_space<vmem>>, vector<8x32xf32>
    %c0_i32 = arith.constant 0 : i32
    %c8_i32 = arith.constant 8 : i32
    %90 = arith.muli %c0_i32, %c8_i32 : i32
    %91 = tpu.assume_multiple %90, 8 : i32
    %c15_i32 = arith.constant 15 : i32
    %92 = arith.subi %c15_i32, %c0_i32 : i32
    %c8_i32_42 = arith.constant 8 : i32
    %93 = arith.muli %92, %c8_i32_42 : i32
    %94 = tpu.assume_multiple %93, 8 : i32
    %c7_i32 = arith.constant 7 : i32
    %95 = arith.subi %c7_i32, %c0_i32 : i32
    %c8_i32_43 = arith.constant 8 : i32
    %96 = arith.muli %95, %c8_i32_43 : i32
    %97 = tpu.assume_multiple %96, 8 : i32
    %98 = arith.index_cast %91 : i32 to index
    %c0_44 = arith.constant 0 : index
    %99 = vector.load %arg14[%98, %c0_44] : memref<128x32xf32, #tpu.memory_space<vmem>>, vector<8x32xf32>
    %100 = arith.mulf %99, %88 : vector<8x32xf32>
    %101 = arith.index_cast %91 : i32 to index
    %c0_45 = arith.constant 0 : index
    %102 = vector.load %arg15[%101, %c0_45] : memref<128x32xf32, #tpu.memory_space<vmem>>, vector<8x32xf32>
    %103 = arith.addf %100, %102 : vector<8x32xf32>
    %104 = arith.index_cast %94 : i32 to index
    %c0_46 = arith.constant 0 : index
    %105 = vector.load %arg14[%104, %c0_46] : memref<128x32xf32, #tpu.memory_space<vmem>>, vector<8x32xf32>
    %106 = arith.mulf %105, %89 : vector<8x32xf32>
    %107 = arith.index_cast %94 : i32 to index
    %c0_47 = arith.constant 0 : index
    %108 = vector.load %arg15[%107, %c0_47] : memref<128x32xf32, #tpu.memory_space<vmem>>, vector<8x32xf32>
    %109 = arith.addf %106, %108 : vector<8x32xf32>
    %110 = arith.index_cast %91 : i32 to index
    %c0_48 = arith.constant 0 : index
    %111 = vector.load %arg16[%110, %c0_48] : memref<128x32xf32, #tpu.memory_space<vmem>>, vector<8x32xf32>
    %112 = math.tanh %103 : vector<8x32xf32>
    %113 = arith.mulf %111, %112 : vector<8x32xf32>
    %114 = arith.index_cast %91 : i32 to index
    %c0_49 = arith.constant 0 : index
    %115 = vector.load %arg17[%114, %c0_49] : memref<128x32xf32, #tpu.memory_space<vmem>>, vector<8x32xf32>
    %116 = arith.addf %113, %115 : vector<8x32xf32>
    %117 = arith.index_cast %94 : i32 to index
    %c0_50 = arith.constant 0 : index
    %118 = vector.load %arg16[%117, %c0_50] : memref<128x32xf32, #tpu.memory_space<vmem>>, vector<8x32xf32>
    %119 = math.tanh %109 : vector<8x32xf32>
    %120 = arith.mulf %118, %119 : vector<8x32xf32>
    %121 = arith.index_cast %94 : i32 to index
    %c0_51 = arith.constant 0 : index
    %122 = vector.load %arg17[%121, %c0_51] : memref<128x32xf32, #tpu.memory_space<vmem>>, vector<8x32xf32>
    %123 = arith.addf %120, %122 : vector<8x32xf32>
    %124 = arith.index_cast %91 : i32 to index
    %c0_52 = arith.constant 0 : index
    %125 = vector.load %arg11[%124, %c0_52] : memref<64x32xf32, #tpu.memory_space<vmem>>, vector<8x32xf32>
    tpu.vector_store %arg11[%124, %c0_52], %116 {strides = array<i32>} : memref<64x32xf32, #tpu.memory_space<vmem>>, vector<8x32xf32>,
    %126 = arith.index_cast %97 : i32 to index
    %c0_53 = arith.constant 0 : index
    %127 = vector.load %arg12[%126, %c0_53] : memref<64x32xf32, #tpu.memory_space<vmem>>, vector<8x32xf32>
    tpu.vector_store %arg12[%126, %c0_53], %123 {strides = array<i32>} : memref<64x32xf32, #tpu.memory_space<vmem>>, vector<8x32xf32>,
    %c1_i32 = arith.constant 1 : i32
    %c8_i32_54 = arith.constant 8 : i32
    %128 = arith.muli %c1_i32, %c8_i32_54 : i32
    %129 = tpu.assume_multiple %128, 8 : i32
    %c15_i32_55 = arith.constant 15 : i32
    %130 = arith.subi %c15_i32_55, %c1_i32 : i32
    %c8_i32_56 = arith.constant 8 : i32
    %131 = arith.muli %130, %c8_i32_56 : i32
    %132 = tpu.assume_multiple %131, 8 : i32
    %c7_i32_57 = arith.constant 7 : i32
    %133 = arith.subi %c7_i32_57, %c1_i32 : i32
    %c8_i32_58 = arith.constant 8 : i32
    %134 = arith.muli %133, %c8_i32_58 : i32
    %135 = tpu.assume_multiple %134, 8 : i32
    %136 = arith.index_cast %129 : i32 to index
    %c0_59 = arith.constant 0 : index
    %137 = vector.load %arg14[%136, %c0_59] : memref<128x32xf32, #tpu.memory_space<vmem>>, vector<8x32xf32>
    %138 = arith.mulf %137, %103 : vector<8x32xf32>
    %139 = arith.index_cast %129 : i32 to index
    %c0_60 = arith.constant 0 : index
    %140 = vector.load %arg15[%139, %c0_60] : memref<128x32xf32, #tpu.memory_space<vmem>>, vector<8x32xf32>
    %141 = arith.addf %138, %140 : vector<8x32xf32>
    %142 = arith.index_cast %132 : i32 to index
    %c0_61 = arith.constant 0 : index
    %143 = vector.load %arg14[%142, %c0_61] : memref<128x32xf32, #tpu.memory_space<vmem>>, vector<8x32xf32>
    %144 = arith.mulf %143, %109 : vector<8x32xf32>
    %145 = arith.index_cast %132 : i32 to index
    %c0_62 = arith.constant 0 : index
    %146 = vector.load %arg15[%145, %c0_62] : memref<128x32xf32, #tpu.memory_space<vmem>>, vector<8x32xf32>
    %147 = arith.addf %144, %146 : vector<8x32xf32>
    %148 = arith.index_cast %129 : i32 to index
    %c0_63 = arith.constant 0 : index
    %149 = vector.load %arg16[%148, %c0_63] : memref<128x32xf32, #tpu.memory_space<vmem>>, vector<8x32xf32>
    %150 = math.tanh %141 : vector<8x32xf32>
    %151 = arith.mulf %149, %150 : vector<8x32xf32>
    %152 = arith.index_cast %129 : i32 to index
    %c0_64 = arith.constant 0 : index
    %153 = vector.load %arg17[%152, %c0_64] : memref<128x32xf32, #tpu.memory_space<vmem>>, vector<8x32xf32>
    %154 = arith.addf %151, %153 : vector<8x32xf32>
    %155 = arith.index_cast %132 : i32 to index
    %c0_65 = arith.constant 0 : index
    %156 = vector.load %arg16[%155, %c0_65] : memref<128x32xf32, #tpu.memory_space<vmem>>, vector<8x32xf32>
    %157 = math.tanh %147 : vector<8x32xf32>
    %158 = arith.mulf %156, %157 : vector<8x32xf32>
    %159 = arith.index_cast %132 : i32 to index
    %c0_66 = arith.constant 0 : index
    %160 = vector.load %arg17[%159, %c0_66] : memref<128x32xf32, #tpu.memory_space<vmem>>, vector<8x32xf32>
    %161 = arith.addf %158, %160 : vector<8x32xf32>
    %162 = arith.index_cast %129 : i32 to index
    %c0_67 = arith.constant 0 : index
    %163 = vector.load %arg11[%162, %c0_67] : memref<64x32xf32, #tpu.memory_space<vmem>>, vector<8x32xf32>
    tpu.vector_store %arg11[%162, %c0_67], %154 {strides = array<i32>} : memref<64x32xf32, #tpu.memory_space<vmem>>, vector<8x32xf32>,
    %164 = arith.index_cast %135 : i32 to index
    %c0_68 = arith.constant 0 : index
    %165 = vector.load %arg12[%164, %c0_68] : memref<64x32xf32, #tpu.memory_space<vmem>>, vector<8x32xf32>
    tpu.vector_store %arg12[%164, %c0_68], %161 {strides = array<i32>} : memref<64x32xf32, #tpu.memory_space<vmem>>, vector<8x32xf32>,
    %c2_i32 = arith.constant 2 : i32
    %c8_i32_69 = arith.constant 8 : i32
    %166 = arith.muli %c2_i32, %c8_i32_69 : i32
    %167 = tpu.assume_multiple %166, 8 : i32
    %c15_i32_70 = arith.constant 15 : i32
    %168 = arith.subi %c15_i32_70, %c2_i32 : i32
    %c8_i32_71 = arith.constant 8 : i32
    %169 = arith.muli %168, %c8_i32_71 : i32
    %170 = tpu.assume_multiple %169, 8 : i32
    %c7_i32_72 = arith.constant 7 : i32
    %171 = arith.subi %c7_i32_72, %c2_i32 : i32
    %c8_i32_73 = arith.constant 8 : i32
    %172 = arith.muli %171, %c8_i32_73 : i32
    %173 = tpu.assume_multiple %172, 8 : i32
    %174 = arith.index_cast %167 : i32 to index
    %c0_74 = arith.constant 0 : index
    %175 = vector.load %arg14[%174, %c0_74] : memref<128x32xf32, #tpu.memory_space<vmem>>, vector<8x32xf32>
    %176 = arith.mulf %175, %141 : vector<8x32xf32>
    %177 = arith.index_cast %167 : i32 to index
    %c0_75 = arith.constant 0 : index
    %178 = vector.load %arg15[%177, %c0_75] : memref<128x32xf32, #tpu.memory_space<vmem>>, vector<8x32xf32>
    %179 = arith.addf %176, %178 : vector<8x32xf32>
    %180 = arith.index_cast %170 : i32 to index
    %c0_76 = arith.constant 0 : index
    %181 = vector.load %arg14[%180, %c0_76] : memref<128x32xf32, #tpu.memory_space<vmem>>, vector<8x32xf32>
    %182 = arith.mulf %181, %147 : vector<8x32xf32>
    %183 = arith.index_cast %170 : i32 to index
    %c0_77 = arith.constant 0 : index
    %184 = vector.load %arg15[%183, %c0_77] : memref<128x32xf32, #tpu.memory_space<vmem>>, vector<8x32xf32>
    %185 = arith.addf %182, %184 : vector<8x32xf32>
    %186 = arith.index_cast %167 : i32 to index
    %c0_78 = arith.constant 0 : index
    %187 = vector.load %arg16[%186, %c0_78] : memref<128x32xf32, #tpu.memory_space<vmem>>, vector<8x32xf32>
    %188 = math.tanh %179 : vector<8x32xf32>
    %189 = arith.mulf %187, %188 : vector<8x32xf32>
    %190 = arith.index_cast %167 : i32 to index
    %c0_79 = arith.constant 0 : index
    %191 = vector.load %arg17[%190, %c0_79] : memref<128x32xf32, #tpu.memory_space<vmem>>, vector<8x32xf32>
    %192 = arith.addf %189, %191 : vector<8x32xf32>
    %193 = arith.index_cast %170 : i32 to index
    %c0_80 = arith.constant 0 : index
    %194 = vector.load %arg16[%193, %c0_80] : memref<128x32xf32, #tpu.memory_space<vmem>>, vector<8x32xf32>
    %195 = math.tanh %185 : vector<8x32xf32>
    %196 = arith.mulf %194, %195 : vector<8x32xf32>
    %197 = arith.index_cast %170 : i32 to index
    %c0_81 = arith.constant 0 : index
    %198 = vector.load %arg17[%197, %c0_81] : memref<128x32xf32, #tpu.memory_space<vmem>>, vector<8x32xf32>
    %199 = arith.addf %196, %198 : vector<8x32xf32>
    %200 = arith.index_cast %167 : i32 to index
    %c0_82 = arith.constant 0 : index
    %201 = vector.load %arg11[%200, %c0_82] : memref<64x32xf32, #tpu.memory_space<vmem>>, vector<8x32xf32>
    tpu.vector_store %arg11[%200, %c0_82], %192 {strides = array<i32>} : memref<64x32xf32, #tpu.memory_space<vmem>>, vector<8x32xf32>,
    %202 = arith.index_cast %173 : i32 to index
    %c0_83 = arith.constant 0 : index
    %203 = vector.load %arg12[%202, %c0_83] : memref<64x32xf32, #tpu.memory_space<vmem>>, vector<8x32xf32>
    tpu.vector_store %arg12[%202, %c0_83], %199 {strides = array<i32>} : memref<64x32xf32, #tpu.memory_space<vmem>>, vector<8x32xf32>,
    %c3_i32 = arith.constant 3 : i32
    %c8_i32_84 = arith.constant 8 : i32
    %204 = arith.muli %c3_i32, %c8_i32_84 : i32
    %205 = tpu.assume_multiple %204, 8 : i32
    %c15_i32_85 = arith.constant 15 : i32
    %206 = arith.subi %c15_i32_85, %c3_i32 : i32
    %c8_i32_86 = arith.constant 8 : i32
    %207 = arith.muli %206, %c8_i32_86 : i32
    %208 = tpu.assume_multiple %207, 8 : i32
    %c7_i32_87 = arith.constant 7 : i32
    %209 = arith.subi %c7_i32_87, %c3_i32 : i32
    %c8_i32_88 = arith.constant 8 : i32
    %210 = arith.muli %209, %c8_i32_88 : i32
    %211 = tpu.assume_multiple %210, 8 : i32
    %212 = arith.index_cast %205 : i32 to index
    %c0_89 = arith.constant 0 : index
    %213 = vector.load %arg14[%212, %c0_89] : memref<128x32xf32, #tpu.memory_space<vmem>>, vector<8x32xf32>
    %214 = arith.mulf %213, %179 : vector<8x32xf32>
    %215 = arith.index_cast %205 : i32 to index
    %c0_90 = arith.constant 0 : index
    %216 = vector.load %arg15[%215, %c0_90] : memref<128x32xf32, #tpu.memory_space<vmem>>, vector<8x32xf32>
    %217 = arith.addf %214, %216 : vector<8x32xf32>
    %218 = arith.index_cast %208 : i32 to index
    %c0_91 = arith.constant 0 : index
    %219 = vector.load %arg14[%218, %c0_91] : memref<128x32xf32, #tpu.memory_space<vmem>>, vector<8x32xf32>
    %220 = arith.mulf %219, %185 : vector<8x32xf32>
    %221 = arith.index_cast %208 : i32 to index
    %c0_92 = arith.constant 0 : index
    %222 = vector.load %arg15[%221, %c0_92] : memref<128x32xf32, #tpu.memory_space<vmem>>, vector<8x32xf32>
    %223 = arith.addf %220, %222 : vector<8x32xf32>
    %224 = arith.index_cast %205 : i32 to index
    %c0_93 = arith.constant 0 : index
    %225 = vector.load %arg16[%224, %c0_93] : memref<128x32xf32, #tpu.memory_space<vmem>>, vector<8x32xf32>
    %226 = math.tanh %217 : vector<8x32xf32>
    %227 = arith.mulf %225, %226 : vector<8x32xf32>
    %228 = arith.index_cast %205 : i32 to index
    %c0_94 = arith.constant 0 : index
    %229 = vector.load %arg17[%228, %c0_94] : memref<128x32xf32, #tpu.memory_space<vmem>>, vector<8x32xf32>
    %230 = arith.addf %227, %229 : vector<8x32xf32>
    %231 = arith.index_cast %208 : i32 to index
    %c0_95 = arith.constant 0 : index
    %232 = vector.load %arg16[%231, %c0_95] : memref<128x32xf32, #tpu.memory_space<vmem>>, vector<8x32xf32>
    %233 = math.tanh %223 : vector<8x32xf32>
    %234 = arith.mulf %232, %233 : vector<8x32xf32>
    %235 = arith.index_cast %208 : i32 to index
    %c0_96 = arith.constant 0 : index
    %236 = vector.load %arg17[%235, %c0_96] : memref<128x32xf32, #tpu.memory_space<vmem>>, vector<8x32xf32>
    %237 = arith.addf %234, %236 : vector<8x32xf32>
    %238 = arith.index_cast %205 : i32 to index
    %c0_97 = arith.constant 0 : index
    %239 = vector.load %arg11[%238, %c0_97] : memref<64x32xf32, #tpu.memory_space<vmem>>, vector<8x32xf32>
    tpu.vector_store %arg11[%238, %c0_97], %230 {strides = array<i32>} : memref<64x32xf32, #tpu.memory_space<vmem>>, vector<8x32xf32>,
    %240 = arith.index_cast %211 : i32 to index
    %c0_98 = arith.constant 0 : index
    %241 = vector.load %arg12[%240, %c0_98] : memref<64x32xf32, #tpu.memory_space<vmem>>, vector<8x32xf32>
    tpu.vector_store %arg12[%240, %c0_98], %237 {strides = array<i32>} : memref<64x32xf32, #tpu.memory_space<vmem>>, vector<8x32xf32>,
    %c4_i32 = arith.constant 4 : i32
    %c8_i32_99 = arith.constant 8 : i32
    %242 = arith.muli %c4_i32, %c8_i32_99 : i32
    %243 = tpu.assume_multiple %242, 8 : i32
    %c15_i32_100 = arith.constant 15 : i32
    %244 = arith.subi %c15_i32_100, %c4_i32 : i32
    %c8_i32_101 = arith.constant 8 : i32
    %245 = arith.muli %244, %c8_i32_101 : i32
    %246 = tpu.assume_multiple %245, 8 : i32
    %c7_i32_102 = arith.constant 7 : i32
    %247 = arith.subi %c7_i32_102, %c4_i32 : i32
    %c8_i32_103 = arith.constant 8 : i32
    %248 = arith.muli %247, %c8_i32_103 : i32
    %249 = tpu.assume_multiple %248, 8 : i32
    %250 = arith.index_cast %243 : i32 to index
    %c0_104 = arith.constant 0 : index
    %251 = vector.load %arg14[%250, %c0_104] : memref<128x32xf32, #tpu.memory_space<vmem>>, vector<8x32xf32>
    %252 = arith.mulf %251, %217 : vector<8x32xf32>
    %253 = arith.index_cast %243 : i32 to index
    %c0_105 = arith.constant 0 : index
    %254 = vector.load %arg15[%253, %c0_105] : memref<128x32xf32, #tpu.memory_space<vmem>>, vector<8x32xf32>
    %255 = arith.addf %252, %254 : vector<8x32xf32>
    %256 = arith.index_cast %246 : i32 to index
    %c0_106 = arith.constant 0 : index
    %257 = vector.load %arg14[%256, %c0_106] : memref<128x32xf32, #tpu.memory_space<vmem>>, vector<8x32xf32>
    %258 = arith.mulf %257, %223 : vector<8x32xf32>
    %259 = arith.index_cast %246 : i32 to index
    %c0_107 = arith.constant 0 : index
    %260 = vector.load %arg15[%259, %c0_107] : memref<128x32xf32, #tpu.memory_space<vmem>>, vector<8x32xf32>
    %261 = arith.addf %258, %260 : vector<8x32xf32>
    %262 = arith.index_cast %243 : i32 to index
    %c0_108 = arith.constant 0 : index
    %263 = vector.load %arg16[%262, %c0_108] : memref<128x32xf32, #tpu.memory_space<vmem>>, vector<8x32xf32>
    %264 = math.tanh %255 : vector<8x32xf32>
    %265 = arith.mulf %263, %264 : vector<8x32xf32>
    %266 = arith.index_cast %243 : i32 to index
    %c0_109 = arith.constant 0 : index
    %267 = vector.load %arg17[%266, %c0_109] : memref<128x32xf32, #tpu.memory_space<vmem>>, vector<8x32xf32>
    %268 = arith.addf %265, %267 : vector<8x32xf32>
    %269 = arith.index_cast %246 : i32 to index
    %c0_110 = arith.constant 0 : index
    %270 = vector.load %arg16[%269, %c0_110] : memref<128x32xf32, #tpu.memory_space<vmem>>, vector<8x32xf32>
    %271 = math.tanh %261 : vector<8x32xf32>
    %272 = arith.mulf %270, %271 : vector<8x32xf32>
    %273 = arith.index_cast %246 : i32 to index
    %c0_111 = arith.constant 0 : index
    %274 = vector.load %arg17[%273, %c0_111] : memref<128x32xf32, #tpu.memory_space<vmem>>, vector<8x32xf32>
    %275 = arith.addf %272, %274 : vector<8x32xf32>
    %276 = arith.index_cast %243 : i32 to index
    %c0_112 = arith.constant 0 : index
    %277 = vector.load %arg11[%276, %c0_112] : memref<64x32xf32, #tpu.memory_space<vmem>>, vector<8x32xf32>
    tpu.vector_store %arg11[%276, %c0_112], %268 {strides = array<i32>} : memref<64x32xf32, #tpu.memory_space<vmem>>, vector<8x32xf32>,
    %278 = arith.index_cast %249 : i32 to index
    %c0_113 = arith.constant 0 : index
    %279 = vector.load %arg12[%278, %c0_113] : memref<64x32xf32, #tpu.memory_space<vmem>>, vector<8x32xf32>
    tpu.vector_store %arg12[%278, %c0_113], %275 {strides = array<i32>} : memref<64x32xf32, #tpu.memory_space<vmem>>, vector<8x32xf32>,
    %c5_i32 = arith.constant 5 : i32
    %c8_i32_114 = arith.constant 8 : i32
    %280 = arith.muli %c5_i32, %c8_i32_114 : i32
    %281 = tpu.assume_multiple %280, 8 : i32
    %c15_i32_115 = arith.constant 15 : i32
    %282 = arith.subi %c15_i32_115, %c5_i32 : i32
    %c8_i32_116 = arith.constant 8 : i32
    %283 = arith.muli %282, %c8_i32_116 : i32
    %284 = tpu.assume_multiple %283, 8 : i32
    %c7_i32_117 = arith.constant 7 : i32
    %285 = arith.subi %c7_i32_117, %c5_i32 : i32
    %c8_i32_118 = arith.constant 8 : i32
    %286 = arith.muli %285, %c8_i32_118 : i32
    %287 = tpu.assume_multiple %286, 8 : i32
    %288 = arith.index_cast %281 : i32 to index
    %c0_119 = arith.constant 0 : index
    %289 = vector.load %arg14[%288, %c0_119] : memref<128x32xf32, #tpu.memory_space<vmem>>, vector<8x32xf32>
    %290 = arith.mulf %289, %255 : vector<8x32xf32>
    %291 = arith.index_cast %281 : i32 to index
    %c0_120 = arith.constant 0 : index
    %292 = vector.load %arg15[%291, %c0_120] : memref<128x32xf32, #tpu.memory_space<vmem>>, vector<8x32xf32>
    %293 = arith.addf %290, %292 : vector<8x32xf32>
    %294 = arith.index_cast %284 : i32 to index
    %c0_121 = arith.constant 0 : index
    %295 = vector.load %arg14[%294, %c0_121] : memref<128x32xf32, #tpu.memory_space<vmem>>, vector<8x32xf32>
    %296 = arith.mulf %295, %261 : vector<8x32xf32>
    %297 = arith.index_cast %284 : i32 to index
    %c0_122 = arith.constant 0 : index
    %298 = vector.load %arg15[%297, %c0_122] : memref<128x32xf32, #tpu.memory_space<vmem>>, vector<8x32xf32>
    %299 = arith.addf %296, %298 : vector<8x32xf32>
    %300 = arith.index_cast %281 : i32 to index
    %c0_123 = arith.constant 0 : index
    %301 = vector.load %arg16[%300, %c0_123] : memref<128x32xf32, #tpu.memory_space<vmem>>, vector<8x32xf32>
    %302 = math.tanh %293 : vector<8x32xf32>
    %303 = arith.mulf %301, %302 : vector<8x32xf32>
    %304 = arith.index_cast %281 : i32 to index
    %c0_124 = arith.constant 0 : index
    %305 = vector.load %arg17[%304, %c0_124] : memref<128x32xf32, #tpu.memory_space<vmem>>, vector<8x32xf32>
    %306 = arith.addf %303, %305 : vector<8x32xf32>
    %307 = arith.index_cast %284 : i32 to index
    %c0_125 = arith.constant 0 : index
    %308 = vector.load %arg16[%307, %c0_125] : memref<128x32xf32, #tpu.memory_space<vmem>>, vector<8x32xf32>
    %309 = math.tanh %299 : vector<8x32xf32>
    %310 = arith.mulf %308, %309 : vector<8x32xf32>
    %311 = arith.index_cast %284 : i32 to index
    %c0_126 = arith.constant 0 : index
    %312 = vector.load %arg17[%311, %c0_126] : memref<128x32xf32, #tpu.memory_space<vmem>>, vector<8x32xf32>
    %313 = arith.addf %310, %312 : vector<8x32xf32>
    %314 = arith.index_cast %281 : i32 to index
    %c0_127 = arith.constant 0 : index
    %315 = vector.load %arg11[%314, %c0_127] : memref<64x32xf32, #tpu.memory_space<vmem>>, vector<8x32xf32>
    tpu.vector_store %arg11[%314, %c0_127], %306 {strides = array<i32>} : memref<64x32xf32, #tpu.memory_space<vmem>>, vector<8x32xf32>,
    %316 = arith.index_cast %287 : i32 to index
    %c0_128 = arith.constant 0 : index
    %317 = vector.load %arg12[%316, %c0_128] : memref<64x32xf32, #tpu.memory_space<vmem>>, vector<8x32xf32>
    tpu.vector_store %arg12[%316, %c0_128], %313 {strides = array<i32>} : memref<64x32xf32, #tpu.memory_space<vmem>>, vector<8x32xf32>,
    %c6_i32 = arith.constant 6 : i32
    %c8_i32_129 = arith.constant 8 : i32
    %318 = arith.muli %c6_i32, %c8_i32_129 : i32
    %319 = tpu.assume_multiple %318, 8 : i32
    %c15_i32_130 = arith.constant 15 : i32
    %320 = arith.subi %c15_i32_130, %c6_i32 : i32
    %c8_i32_131 = arith.constant 8 : i32
    %321 = arith.muli %320, %c8_i32_131 : i32
    %322 = tpu.assume_multiple %321, 8 : i32
    %c7_i32_132 = arith.constant 7 : i32
    %323 = arith.subi %c7_i32_132, %c6_i32 : i32
    %c8_i32_133 = arith.constant 8 : i32
    %324 = arith.muli %323, %c8_i32_133 : i32
    %325 = tpu.assume_multiple %324, 8 : i32
    %326 = arith.index_cast %319 : i32 to index
    %c0_134 = arith.constant 0 : index
    %327 = vector.load %arg14[%326, %c0_134] : memref<128x32xf32, #tpu.memory_space<vmem>>, vector<8x32xf32>
    %328 = arith.mulf %327, %293 : vector<8x32xf32>
    %329 = arith.index_cast %319 : i32 to index
    %c0_135 = arith.constant 0 : index
    %330 = vector.load %arg15[%329, %c0_135] : memref<128x32xf32, #tpu.memory_space<vmem>>, vector<8x32xf32>
    %331 = arith.addf %328, %330 : vector<8x32xf32>
    %332 = arith.index_cast %322 : i32 to index
    %c0_136 = arith.constant 0 : index
    %333 = vector.load %arg14[%332, %c0_136] : memref<128x32xf32, #tpu.memory_space<vmem>>, vector<8x32xf32>
    %334 = arith.mulf %333, %299 : vector<8x32xf32>
    %335 = arith.index_cast %322 : i32 to index
    %c0_137 = arith.constant 0 : index
    %336 = vector.load %arg15[%335, %c0_137] : memref<128x32xf32, #tpu.memory_space<vmem>>, vector<8x32xf32>
    %337 = arith.addf %334, %336 : vector<8x32xf32>
    %338 = arith.index_cast %319 : i32 to index
    %c0_138 = arith.constant 0 : index
    %339 = vector.load %arg16[%338, %c0_138] : memref<128x32xf32, #tpu.memory_space<vmem>>, vector<8x32xf32>
    %340 = math.tanh %331 : vector<8x32xf32>
    %341 = arith.mulf %339, %340 : vector<8x32xf32>
    %342 = arith.index_cast %319 : i32 to index
    %c0_139 = arith.constant 0 : index
    %343 = vector.load %arg17[%342, %c0_139] : memref<128x32xf32, #tpu.memory_space<vmem>>, vector<8x32xf32>
    %344 = arith.addf %341, %343 : vector<8x32xf32>
    %345 = arith.index_cast %322 : i32 to index
    %c0_140 = arith.constant 0 : index
    %346 = vector.load %arg16[%345, %c0_140] : memref<128x32xf32, #tpu.memory_space<vmem>>, vector<8x32xf32>
    %347 = math.tanh %337 : vector<8x32xf32>
    %348 = arith.mulf %346, %347 : vector<8x32xf32>
    %349 = arith.index_cast %322 : i32 to index
    %c0_141 = arith.constant 0 : index
    %350 = vector.load %arg17[%349, %c0_141] : memref<128x32xf32, #tpu.memory_space<vmem>>, vector<8x32xf32>
    %351 = arith.addf %348, %350 : vector<8x32xf32>
    %352 = arith.index_cast %319 : i32 to index
    %c0_142 = arith.constant 0 : index
    %353 = vector.load %arg11[%352, %c0_142] : memref<64x32xf32, #tpu.memory_space<vmem>>, vector<8x32xf32>
    tpu.vector_store %arg11[%352, %c0_142], %344 {strides = array<i32>} : memref<64x32xf32, #tpu.memory_space<vmem>>, vector<8x32xf32>,
    %354 = arith.index_cast %325 : i32 to index
    %c0_143 = arith.constant 0 : index
    %355 = vector.load %arg12[%354, %c0_143] : memref<64x32xf32, #tpu.memory_space<vmem>>, vector<8x32xf32>
    tpu.vector_store %arg12[%354, %c0_143], %351 {strides = array<i32>} : memref<64x32xf32, #tpu.memory_space<vmem>>, vector<8x32xf32>,
    %c7_i32_144 = arith.constant 7 : i32
    %c8_i32_145 = arith.constant 8 : i32
    %356 = arith.muli %c7_i32_144, %c8_i32_145 : i32
    %357 = tpu.assume_multiple %356, 8 : i32
    %c15_i32_146 = arith.constant 15 : i32
    %358 = arith.subi %c15_i32_146, %c7_i32_144 : i32
    %c8_i32_147 = arith.constant 8 : i32
    %359 = arith.muli %358, %c8_i32_147 : i32
    %360 = tpu.assume_multiple %359, 8 : i32
    %c7_i32_148 = arith.constant 7 : i32
    %361 = arith.subi %c7_i32_148, %c7_i32_144 : i32
    %c8_i32_149 = arith.constant 8 : i32
    %362 = arith.muli %361, %c8_i32_149 : i32
    %363 = tpu.assume_multiple %362, 8 : i32
    %364 = arith.index_cast %357 : i32 to index
    %c0_150 = arith.constant 0 : index
    %365 = vector.load %arg14[%364, %c0_150] : memref<128x32xf32, #tpu.memory_space<vmem>>, vector<8x32xf32>
    %366 = arith.mulf %365, %331 : vector<8x32xf32>
    %367 = arith.index_cast %357 : i32 to index
    %c0_151 = arith.constant 0 : index
    %368 = vector.load %arg15[%367, %c0_151] : memref<128x32xf32, #tpu.memory_space<vmem>>, vector<8x32xf32>
    %369 = arith.addf %366, %368 : vector<8x32xf32>
    %370 = arith.index_cast %360 : i32 to index
    %c0_152 = arith.constant 0 : index
    %371 = vector.load %arg14[%370, %c0_152] : memref<128x32xf32, #tpu.memory_space<vmem>>, vector<8x32xf32>
    %372 = arith.mulf %371, %337 : vector<8x32xf32>
    %373 = arith.index_cast %360 : i32 to index
    %c0_153 = arith.constant 0 : index
    %374 = vector.load %arg15[%373, %c0_153] : memref<128x32xf32, #tpu.memory_space<vmem>>, vector<8x32xf32>
    %375 = arith.addf %372, %374 : vector<8x32xf32>
    %376 = arith.index_cast %357 : i32 to index
    %c0_154 = arith.constant 0 : index
    %377 = vector.load %arg16[%376, %c0_154] : memref<128x32xf32, #tpu.memory_space<vmem>>, vector<8x32xf32>
    %378 = math.tanh %369 : vector<8x32xf32>
    %379 = arith.mulf %377, %378 : vector<8x32xf32>
    %380 = arith.index_cast %357 : i32 to index
    %c0_155 = arith.constant 0 : index
    %381 = vector.load %arg17[%380, %c0_155] : memref<128x32xf32, #tpu.memory_space<vmem>>, vector<8x32xf32>
    %382 = arith.addf %379, %381 : vector<8x32xf32>
    %383 = arith.index_cast %360 : i32 to index
    %c0_156 = arith.constant 0 : index
    %384 = vector.load %arg16[%383, %c0_156] : memref<128x32xf32, #tpu.memory_space<vmem>>, vector<8x32xf32>
    %385 = math.tanh %375 : vector<8x32xf32>
    %386 = arith.mulf %384, %385 : vector<8x32xf32>
    %387 = arith.index_cast %360 : i32 to index
    %c0_157 = arith.constant 0 : index
    %388 = vector.load %arg17[%387, %c0_157] : memref<128x32xf32, #tpu.memory_space<vmem>>, vector<8x32xf32>
    %389 = arith.addf %386, %388 : vector<8x32xf32>
    %390 = arith.index_cast %357 : i32 to index
    %c0_158 = arith.constant 0 : index
    %391 = vector.load %arg11[%390, %c0_158] : memref<64x32xf32, #tpu.memory_space<vmem>>, vector<8x32xf32>
    tpu.vector_store %arg11[%390, %c0_158], %382 {strides = array<i32>} : memref<64x32xf32, #tpu.memory_space<vmem>>, vector<8x32xf32>,
    %392 = arith.index_cast %363 : i32 to index
    %c0_159 = arith.constant 0 : index
    %393 = vector.load %arg12[%392, %c0_159] : memref<64x32xf32, #tpu.memory_space<vmem>>, vector<8x32xf32>
    tpu.vector_store %arg12[%392, %c0_159], %389 {strides = array<i32>} : memref<64x32xf32, #tpu.memory_space<vmem>>, vector<8x32xf32>,
    %c8_i32_160 = arith.constant 8 : i32
    %c0_161 = arith.constant 0 : index
    %c0_162 = arith.constant 0 : index
    %394 = vector.load %arg13[%c0_161, %c0_162] : memref<16x64xf32, #tpu.memory_space<vmem>>, vector<8x32xf32>
    tpu.vector_store %arg13[%c0_161, %c0_162], %369 {strides = array<i32>} : memref<16x64xf32, #tpu.memory_space<vmem>>, vector<8x32xf32>,
    %c0_163 = arith.constant 0 : index
    %c32_164 = arith.constant 32 : index
    %395 = vector.load %arg13[%c0_163, %c32_164] : memref<16x64xf32, #tpu.memory_space<vmem>>, vector<8x32xf32>
    tpu.vector_store %arg13[%c0_163, %c32_164], %375 {strides = array<i32>} : memref<16x64xf32, #tpu.memory_space<vmem>>, vector<8x32xf32>,
    %c0_165 = arith.constant 0 : index
    %c0_166 = arith.constant 0 : index
    %396 = vector.load %arg11[%c0_165, %c0_166] : memref<64x32xf32, #tpu.memory_space<vmem>>, vector<64x32xf32>
    %c0_167 = arith.constant 0 : index
    %c0_168 = arith.constant 0 : index
    %397 = vector.load %arg12[%c0_167, %c0_168] : memref<64x32xf32, #tpu.memory_space<vmem>>, vector<64x32xf32>
    %c0_169 = arith.constant 0 : index
    %c0_170 = arith.constant 0 : index
    %398 = vector.load %arg7[%c0_169, %c0_170] : memref<64x96xf32, #tpu.memory_space<vmem>>, vector<32x96xf32>
    %cst_171 = arith.constant dense<0.000000e+00> : vector<64x96xf32>
    %399 = tpu.matmul %396, %398, %cst_171 {dimension_numbers = #tpu.dot_dimension_numbers<[1], [0], [0], [1], [0, 0, 1, 1], [], []>} : vector<64x32xf32>, vector<32x96xf32>, vector<64x96xf32> -> vector<64x96xf32>
    %c32_172 = arith.constant 32 : index
    %c0_173 = arith.constant 0 : index
    %400 = vector.load %arg7[%c32_172, %c0_173] : memref<64x96xf32, #tpu.memory_space<vmem>>, vector<32x96xf32>
    %cst_174 = arith.constant dense<0.000000e+00> : vector<64x96xf32>
    %401 = tpu.matmul %397, %400, %cst_174 {dimension_numbers = #tpu.dot_dimension_numbers<[1], [0], [0], [1], [0, 0, 1, 1], [], []>} : vector<64x32xf32>, vector<32x96xf32>, vector<64x96xf32> -> vector<64x96xf32>
    %402 = arith.addf %399, %401 : vector<64x96xf32>
    %403 = vector.extract_strided_slice %402 {offsets = [0, 0], sizes = [64, 32], strides = [1, 1]} : vector<64x96xf32> to vector<64x32xf32>
    %404 = vector.extract_strided_slice %402 {offsets = [0, 32], sizes = [64, 32], strides = [1, 1]} : vector<64x96xf32> to vector<64x32xf32>
    %c0_175 = arith.constant 0 : index
    %c0_176 = arith.constant 0 : index
    %405 = vector.load %arg8[%c0_175, %c0_176] : memref<2x32xf32, #tpu.memory_space<vmem>>, vector<1x32xf32>
    %406 = vector.broadcast %405 : vector<1x32xf32> to vector<64x32xf32>
    %407 = arith.addf %404, %406 : vector<64x32xf32>
    %408 = arith.negf %407 : vector<64x32xf32>
    %409 = math.exp %408 : vector<64x32xf32>
    %cst_177 = arith.constant 1.000000e+00 : f32
    %410 = vector.broadcast %cst_177 : f32 to vector<64x32xf32>
    %411 = arith.addf %410, %409 : vector<64x32xf32>
    %412 = arith.divf %410, %411 : vector<64x32xf32>
    %413 = vector.extract_strided_slice %402 {offsets = [0, 64], sizes = [64, 32], strides = [1, 1]} : vector<64x96xf32> to vector<64x32xf32>
    %c1_178 = arith.constant 1 : index
    %c0_179 = arith.constant 0 : index
    %414 = vector.load %arg8[%c1_178, %c0_179] : memref<2x32xf32, #tpu.memory_space<vmem>>, vector<1x32xf32>
    %415 = vector.broadcast %414 : vector<1x32xf32> to vector<64x32xf32>
    %416 = arith.addf %413, %415 : vector<64x32xf32>
    %417 = arith.negf %416 : vector<64x32xf32>
    %418 = math.exp %417 : vector<64x32xf32>
    %cst_180 = arith.constant 1.000000e+00 : f32
    %419 = vector.broadcast %cst_180 : f32 to vector<64x32xf32>
    %420 = arith.addf %419, %418 : vector<64x32xf32>
    %421 = arith.divf %419, %420 : vector<64x32xf32>
    %422 = vector.broadcast %2 : vector<64x1xf32> to vector<64x32xf32>
    %423 = arith.mulf %412, %422 : vector<64x32xf32>
    %424 = vector.broadcast %0 : vector<64x1xf32> to vector<64x32xf32>
    %425 = arith.addf %423, %424 : vector<64x32xf32>
    %c0_181 = arith.constant 0 : index
    %c0_182 = arith.constant 0 : index
    %426 = vector.load %arg14[%c0_181, %c0_182] : memref<128x32xf32, #tpu.memory_space<vmem>>, vector<64x32xf32>
    tpu.vector_store %arg14[%c0_181, %c0_182], %425 {strides = array<i32>} : memref<128x32xf32, #tpu.memory_space<vmem>>, vector<64x32xf32>,
    %cst_183 = arith.constant 1.000000e+00 : f32
    %427 = vector.broadcast %cst_183 : f32 to vector<64x32xf32>
    %428 = arith.subf %427, %412 : vector<64x32xf32>
    %429 = vector.broadcast %2 : vector<64x1xf32> to vector<64x32xf32>
    %430 = arith.mulf %429, %428 : vector<64x32xf32>
    %431 = arith.mulf %430, %403 : vector<64x32xf32>
    %c0_184 = arith.constant 0 : index
    %c0_185 = arith.constant 0 : index
    %432 = vector.load %arg15[%c0_184, %c0_185] : memref<128x32xf32, #tpu.memory_space<vmem>>, vector<64x32xf32>
    tpu.vector_store %arg15[%c0_184, %c0_185], %431 {strides = array<i32>} : memref<128x32xf32, #tpu.memory_space<vmem>>, vector<64x32xf32>,
    %433 = vector.broadcast %2 : vector<64x1xf32> to vector<64x32xf32>
    %434 = arith.mulf %433, %421 : vector<64x32xf32>
    %c0_186 = arith.constant 0 : index
    %c0_187 = arith.constant 0 : index
    %435 = vector.load %arg16[%c0_186, %c0_187] : memref<128x32xf32, #tpu.memory_space<vmem>>, vector<64x32xf32>
    tpu.vector_store %arg16[%c0_186, %c0_187], %434 {strides = array<i32>} : memref<128x32xf32, #tpu.memory_space<vmem>>, vector<64x32xf32>,
    %cst_188 = arith.constant 1.000000e+00 : f32
    %436 = vector.broadcast %cst_188 : f32 to vector<64x32xf32>
    %437 = arith.subf %436, %421 : vector<64x32xf32>
    %438 = vector.broadcast %2 : vector<64x1xf32> to vector<64x32xf32>
    %439 = arith.mulf %438, %437 : vector<64x32xf32>
    %440 = arith.mulf %439, %396 : vector<64x32xf32>
    %c0_189 = arith.constant 0 : index
    %c0_190 = arith.constant 0 : index
    %441 = vector.load %arg17[%c0_189, %c0_190] : memref<128x32xf32, #tpu.memory_space<vmem>>, vector<64x32xf32>
    tpu.vector_store %arg17[%c0_189, %c0_190], %440 {strides = array<i32>} : memref<128x32xf32, #tpu.memory_space<vmem>>, vector<64x32xf32>,
    %c0_191 = arith.constant 0 : index
    %c0_192 = arith.constant 0 : index
    %442 = vector.load %arg9[%c0_191, %c0_192] : memref<64x96xf32, #tpu.memory_space<vmem>>, vector<32x96xf32>
    %cst_193 = arith.constant dense<0.000000e+00> : vector<64x96xf32>
    %443 = tpu.matmul %396, %442, %cst_193 {dimension_numbers = #tpu.dot_dimension_numbers<[1], [0], [0], [1], [0, 0, 1, 1], [], []>} : vector<64x32xf32>, vector<32x96xf32>, vector<64x96xf32> -> vector<64x96xf32>
    %c32_194 = arith.constant 32 : index
    %c0_195 = arith.constant 0 : index
    %444 = vector.load %arg9[%c32_194, %c0_195] : memref<64x96xf32, #tpu.memory_space<vmem>>, vector<32x96xf32>
    %cst_196 = arith.constant dense<0.000000e+00> : vector<64x96xf32>
    %445 = tpu.matmul %397, %444, %cst_196 {dimension_numbers = #tpu.dot_dimension_numbers<[1], [0], [0], [1], [0, 0, 1, 1], [], []>} : vector<64x32xf32>, vector<32x96xf32>, vector<64x96xf32> -> vector<64x96xf32>
    %446 = arith.addf %443, %445 : vector<64x96xf32>
    %447 = vector.extract_strided_slice %446 {offsets = [0, 0], sizes = [64, 32], strides = [1, 1]} : vector<64x96xf32> to vector<64x32xf32>
    %448 = vector.extract_strided_slice %446 {offsets = [0, 32], sizes = [64, 32], strides = [1, 1]} : vector<64x96xf32> to vector<64x32xf32>
    %c0_197 = arith.constant 0 : index
    %c0_198 = arith.constant 0 : index
    %449 = vector.load %arg10[%c0_197, %c0_198] : memref<2x32xf32, #tpu.memory_space<vmem>>, vector<1x32xf32>
    %450 = vector.broadcast %449 : vector<1x32xf32> to vector<64x32xf32>
    %451 = arith.addf %448, %450 : vector<64x32xf32>
    %452 = arith.negf %451 : vector<64x32xf32>
    %453 = math.exp %452 : vector<64x32xf32>
    %cst_199 = arith.constant 1.000000e+00 : f32
    %454 = vector.broadcast %cst_199 : f32 to vector<64x32xf32>
    %455 = arith.addf %454, %453 : vector<64x32xf32>
    %456 = arith.divf %454, %455 : vector<64x32xf32>
    %457 = vector.extract_strided_slice %446 {offsets = [0, 64], sizes = [64, 32], strides = [1, 1]} : vector<64x96xf32> to vector<64x32xf32>
    %c1_200 = arith.constant 1 : index
    %c0_201 = arith.constant 0 : index
    %458 = vector.load %arg10[%c1_200, %c0_201] : memref<2x32xf32, #tpu.memory_space<vmem>>, vector<1x32xf32>
    %459 = vector.broadcast %458 : vector<1x32xf32> to vector<64x32xf32>
    %460 = arith.addf %457, %459 : vector<64x32xf32>
    %461 = arith.negf %460 : vector<64x32xf32>
    %462 = math.exp %461 : vector<64x32xf32>
    %cst_202 = arith.constant 1.000000e+00 : f32
    %463 = vector.broadcast %cst_202 : f32 to vector<64x32xf32>
    %464 = arith.addf %463, %462 : vector<64x32xf32>
    %465 = arith.divf %463, %464 : vector<64x32xf32>
    %466 = vector.broadcast %2 : vector<64x1xf32> to vector<64x32xf32>
    %467 = arith.mulf %456, %466 : vector<64x32xf32>
    %468 = vector.broadcast %0 : vector<64x1xf32> to vector<64x32xf32>
    %469 = arith.addf %467, %468 : vector<64x32xf32>
    %c64_203 = arith.constant 64 : index
    %c0_204 = arith.constant 0 : index
    %470 = vector.load %arg14[%c64_203, %c0_204] : memref<128x32xf32, #tpu.memory_space<vmem>>, vector<64x32xf32>
    tpu.vector_store %arg14[%c64_203, %c0_204], %469 {strides = array<i32>} : memref<128x32xf32, #tpu.memory_space<vmem>>, vector<64x32xf32>,
    %cst_205 = arith.constant 1.000000e+00 : f32
    %471 = vector.broadcast %cst_205 : f32 to vector<64x32xf32>
    %472 = arith.subf %471, %456 : vector<64x32xf32>
    %473 = vector.broadcast %2 : vector<64x1xf32> to vector<64x32xf32>
    %474 = arith.mulf %473, %472 : vector<64x32xf32>
    %475 = arith.mulf %474, %447 : vector<64x32xf32>
    %c64_206 = arith.constant 64 : index
    %c0_207 = arith.constant 0 : index
    %476 = vector.load %arg15[%c64_206, %c0_207] : memref<128x32xf32, #tpu.memory_space<vmem>>, vector<64x32xf32>
    tpu.vector_store %arg15[%c64_206, %c0_207], %475 {strides = array<i32>} : memref<128x32xf32, #tpu.memory_space<vmem>>, vector<64x32xf32>,
    %477 = vector.broadcast %2 : vector<64x1xf32> to vector<64x32xf32>
    %478 = arith.mulf %477, %465 : vector<64x32xf32>
    %c64_208 = arith.constant 64 : index
    %c0_209 = arith.constant 0 : index
    %479 = vector.load %arg16[%c64_208, %c0_209] : memref<128x32xf32, #tpu.memory_space<vmem>>, vector<64x32xf32>
    tpu.vector_store %arg16[%c64_208, %c0_209], %478 {strides = array<i32>} : memref<128x32xf32, #tpu.memory_space<vmem>>, vector<64x32xf32>,
    %cst_210 = arith.constant 1.000000e+00 : f32
    %480 = vector.broadcast %cst_210 : f32 to vector<64x32xf32>
    %481 = arith.subf %480, %465 : vector<64x32xf32>
    %482 = vector.broadcast %2 : vector<64x1xf32> to vector<64x32xf32>
    %483 = arith.mulf %482, %481 : vector<64x32xf32>
    %484 = arith.mulf %483, %397 : vector<64x32xf32>
    %c64_211 = arith.constant 64 : index
    %c0_212 = arith.constant 0 : index
    %485 = vector.load %arg17[%c64_211, %c0_212] : memref<128x32xf32, #tpu.memory_space<vmem>>, vector<64x32xf32>
    tpu.vector_store %arg17[%c64_211, %c0_212], %484 {strides = array<i32>} : memref<128x32xf32, #tpu.memory_space<vmem>>, vector<64x32xf32>,
    %c8 = arith.constant 8 : index
    %c0_213 = arith.constant 0 : index
    %486 = vector.load %arg1[%c8, %c0_213] : memref<16x64xf32, #tpu.memory_space<vmem>>, vector<8x32xf32>
    %c8_214 = arith.constant 8 : index
    %c32_215 = arith.constant 32 : index
    %487 = vector.load %arg1[%c8_214, %c32_215] : memref<16x64xf32, #tpu.memory_space<vmem>>, vector<8x32xf32>
    %c0_i32_216 = arith.constant 0 : i32
    %c8_i32_217 = arith.constant 8 : i32
    %488 = arith.muli %c0_i32_216, %c8_i32_217 : i32
    %489 = tpu.assume_multiple %488, 8 : i32
    %c15_i32_218 = arith.constant 15 : i32
    %490 = arith.subi %c15_i32_218, %c0_i32_216 : i32
    %c8_i32_219 = arith.constant 8 : i32
    %491 = arith.muli %490, %c8_i32_219 : i32
    %492 = tpu.assume_multiple %491, 8 : i32
    %c7_i32_220 = arith.constant 7 : i32
    %493 = arith.subi %c7_i32_220, %c0_i32_216 : i32
    %c8_i32_221 = arith.constant 8 : i32
    %494 = arith.muli %493, %c8_i32_221 : i32
    %495 = tpu.assume_multiple %494, 8 : i32
    %496 = arith.index_cast %489 : i32 to index
    %c0_222 = arith.constant 0 : index
    %497 = vector.load %arg14[%496, %c0_222] : memref<128x32xf32, #tpu.memory_space<vmem>>, vector<8x32xf32>
    %498 = arith.mulf %497, %486 : vector<8x32xf32>
    %499 = arith.index_cast %489 : i32 to index
    %c0_223 = arith.constant 0 : index
    %500 = vector.load %arg15[%499, %c0_223] : memref<128x32xf32, #tpu.memory_space<vmem>>, vector<8x32xf32>
    %501 = arith.addf %498, %500 : vector<8x32xf32>
    %502 = arith.index_cast %492 : i32 to index
    %c0_224 = arith.constant 0 : index
    %503 = vector.load %arg14[%502, %c0_224] : memref<128x32xf32, #tpu.memory_space<vmem>>, vector<8x32xf32>
    %504 = arith.mulf %503, %487 : vector<8x32xf32>
    %505 = arith.index_cast %492 : i32 to index
    %c0_225 = arith.constant 0 : index
    %506 = vector.load %arg15[%505, %c0_225] : memref<128x32xf32, #tpu.memory_space<vmem>>, vector<8x32xf32>
    %507 = arith.addf %504, %506 : vector<8x32xf32>
    %508 = arith.index_cast %489 : i32 to index
    %c0_226 = arith.constant 0 : index
    %509 = vector.load %arg16[%508, %c0_226] : memref<128x32xf32, #tpu.memory_space<vmem>>, vector<8x32xf32>
    %510 = math.tanh %501 : vector<8x32xf32>
    %511 = arith.mulf %509, %510 : vector<8x32xf32>
    %512 = arith.index_cast %489 : i32 to index
    %c0_227 = arith.constant 0 : index
    %513 = vector.load %arg17[%512, %c0_227] : memref<128x32xf32, #tpu.memory_space<vmem>>, vector<8x32xf32>
    %514 = arith.addf %511, %513 : vector<8x32xf32>
    %515 = arith.index_cast %492 : i32 to index
    %c0_228 = arith.constant 0 : index
    %516 = vector.load %arg16[%515, %c0_228] : memref<128x32xf32, #tpu.memory_space<vmem>>, vector<8x32xf32>
    %517 = math.tanh %507 : vector<8x32xf32>
    %518 = arith.mulf %516, %517 : vector<8x32xf32>
    %519 = arith.index_cast %492 : i32 to index
    %c0_229 = arith.constant 0 : index
    %520 = vector.load %arg17[%519, %c0_229] : memref<128x32xf32, #tpu.memory_space<vmem>>, vector<8x32xf32>
    %521 = arith.addf %518, %520 : vector<8x32xf32>
    %522 = arith.index_cast %489 : i32 to index
    %c0_230 = arith.constant 0 : index
    %523 = vector.load %arg11[%522, %c0_230] : memref<64x32xf32, #tpu.memory_space<vmem>>, vector<8x32xf32>
    tpu.vector_store %arg11[%522, %c0_230], %514 {strides = array<i32>} : memref<64x32xf32, #tpu.memory_space<vmem>>, vector<8x32xf32>,
    %524 = arith.index_cast %495 : i32 to index
    %c0_231 = arith.constant 0 : index
    %525 = vector.load %arg12[%524, %c0_231] : memref<64x32xf32, #tpu.memory_space<vmem>>, vector<8x32xf32>
    tpu.vector_store %arg12[%524, %c0_231], %521 {strides = array<i32>} : memref<64x32xf32, #tpu.memory_space<vmem>>, vector<8x32xf32>,
    %c1_i32_232 = arith.constant 1 : i32
    %c8_i32_233 = arith.constant 8 : i32
    %526 = arith.muli %c1_i32_232, %c8_i32_233 : i32
    %527 = tpu.assume_multiple %526, 8 : i32
    %c15_i32_234 = arith.constant 15 : i32
    %528 = arith.subi %c15_i32_234, %c1_i32_232 : i32
    %c8_i32_235 = arith.constant 8 : i32
    %529 = arith.muli %528, %c8_i32_235 : i32
    %530 = tpu.assume_multiple %529, 8 : i32
    %c7_i32_236 = arith.constant 7 : i32
    %531 = arith.subi %c7_i32_236, %c1_i32_232 : i32
    %c8_i32_237 = arith.constant 8 : i32
    %532 = arith.muli %531, %c8_i32_237 : i32
    %533 = tpu.assume_multiple %532, 8 : i32
    %534 = arith.index_cast %527 : i32 to index
    %c0_238 = arith.constant 0 : index
    %535 = vector.load %arg14[%534, %c0_238] : memref<128x32xf32, #tpu.memory_space<vmem>>, vector<8x32xf32>
    %536 = arith.mulf %535, %501 : vector<8x32xf32>
    %537 = arith.index_cast %527 : i32 to index
    %c0_239 = arith.constant 0 : index
    %538 = vector.load %arg15[%537, %c0_239] : memref<128x32xf32, #tpu.memory_space<vmem>>, vector<8x32xf32>
    %539 = arith.addf %536, %538 : vector<8x32xf32>
    %540 = arith.index_cast %530 : i32 to index
    %c0_240 = arith.constant 0 : index
    %541 = vector.load %arg14[%540, %c0_240] : memref<128x32xf32, #tpu.memory_space<vmem>>, vector<8x32xf32>
    %542 = arith.mulf %541, %507 : vector<8x32xf32>
    %543 = arith.index_cast %530 : i32 to index
    %c0_241 = arith.constant 0 : index
    %544 = vector.load %arg15[%543, %c0_241] : memref<128x32xf32, #tpu.memory_space<vmem>>, vector<8x32xf32>
    %545 = arith.addf %542, %544 : vector<8x32xf32>
    %546 = arith.index_cast %527 : i32 to index
    %c0_242 = arith.constant 0 : index
    %547 = vector.load %arg16[%546, %c0_242] : memref<128x32xf32, #tpu.memory_space<vmem>>, vector<8x32xf32>
    %548 = math.tanh %539 : vector<8x32xf32>
    %549 = arith.mulf %547, %548 : vector<8x32xf32>
    %550 = arith.index_cast %527 : i32 to index
    %c0_243 = arith.constant 0 : index
    %551 = vector.load %arg17[%550, %c0_243] : memref<128x32xf32, #tpu.memory_space<vmem>>, vector<8x32xf32>
    %552 = arith.addf %549, %551 : vector<8x32xf32>
    %553 = arith.index_cast %530 : i32 to index
    %c0_244 = arith.constant 0 : index
    %554 = vector.load %arg16[%553, %c0_244] : memref<128x32xf32, #tpu.memory_space<vmem>>, vector<8x32xf32>
    %555 = math.tanh %545 : vector<8x32xf32>
    %556 = arith.mulf %554, %555 : vector<8x32xf32>
    %557 = arith.index_cast %530 : i32 to index
    %c0_245 = arith.constant 0 : index
    %558 = vector.load %arg17[%557, %c0_245] : memref<128x32xf32, #tpu.memory_space<vmem>>, vector<8x32xf32>
    %559 = arith.addf %556, %558 : vector<8x32xf32>
    %560 = arith.index_cast %527 : i32 to index
    %c0_246 = arith.constant 0 : index
    %561 = vector.load %arg11[%560, %c0_246] : memref<64x32xf32, #tpu.memory_space<vmem>>, vector<8x32xf32>
    tpu.vector_store %arg11[%560, %c0_246], %552 {strides = array<i32>} : memref<64x32xf32, #tpu.memory_space<vmem>>, vector<8x32xf32>,
    %562 = arith.index_cast %533 : i32 to index
    %c0_247 = arith.constant 0 : index
    %563 = vector.load %arg12[%562, %c0_247] : memref<64x32xf32, #tpu.memory_space<vmem>>, vector<8x32xf32>
    tpu.vector_store %arg12[%562, %c0_247], %559 {strides = array<i32>} : memref<64x32xf32, #tpu.memory_space<vmem>>, vector<8x32xf32>,
    %c2_i32_248 = arith.constant 2 : i32
    %c8_i32_249 = arith.constant 8 : i32
    %564 = arith.muli %c2_i32_248, %c8_i32_249 : i32
    %565 = tpu.assume_multiple %564, 8 : i32
    %c15_i32_250 = arith.constant 15 : i32
    %566 = arith.subi %c15_i32_250, %c2_i32_248 : i32
    %c8_i32_251 = arith.constant 8 : i32
    %567 = arith.muli %566, %c8_i32_251 : i32
    %568 = tpu.assume_multiple %567, 8 : i32
    %c7_i32_252 = arith.constant 7 : i32
    %569 = arith.subi %c7_i32_252, %c2_i32_248 : i32
    %c8_i32_253 = arith.constant 8 : i32
    %570 = arith.muli %569, %c8_i32_253 : i32
    %571 = tpu.assume_multiple %570, 8 : i32
    %572 = arith.index_cast %565 : i32 to index
    %c0_254 = arith.constant 0 : index
    %573 = vector.load %arg14[%572, %c0_254] : memref<128x32xf32, #tpu.memory_space<vmem>>, vector<8x32xf32>
    %574 = arith.mulf %573, %539 : vector<8x32xf32>
    %575 = arith.index_cast %565 : i32 to index
    %c0_255 = arith.constant 0 : index
    %576 = vector.load %arg15[%575, %c0_255] : memref<128x32xf32, #tpu.memory_space<vmem>>, vector<8x32xf32>
    %577 = arith.addf %574, %576 : vector<8x32xf32>
    %578 = arith.index_cast %568 : i32 to index
    %c0_256 = arith.constant 0 : index
    %579 = vector.load %arg14[%578, %c0_256] : memref<128x32xf32, #tpu.memory_space<vmem>>, vector<8x32xf32>
    %580 = arith.mulf %579, %545 : vector<8x32xf32>
    %581 = arith.index_cast %568 : i32 to index
    %c0_257 = arith.constant 0 : index
    %582 = vector.load %arg15[%581, %c0_257] : memref<128x32xf32, #tpu.memory_space<vmem>>, vector<8x32xf32>
    %583 = arith.addf %580, %582 : vector<8x32xf32>
    %584 = arith.index_cast %565 : i32 to index
    %c0_258 = arith.constant 0 : index
    %585 = vector.load %arg16[%584, %c0_258] : memref<128x32xf32, #tpu.memory_space<vmem>>, vector<8x32xf32>
    %586 = math.tanh %577 : vector<8x32xf32>
    %587 = arith.mulf %585, %586 : vector<8x32xf32>
    %588 = arith.index_cast %565 : i32 to index
    %c0_259 = arith.constant 0 : index
    %589 = vector.load %arg17[%588, %c0_259] : memref<128x32xf32, #tpu.memory_space<vmem>>, vector<8x32xf32>
    %590 = arith.addf %587, %589 : vector<8x32xf32>
    %591 = arith.index_cast %568 : i32 to index
    %c0_260 = arith.constant 0 : index
    %592 = vector.load %arg16[%591, %c0_260] : memref<128x32xf32, #tpu.memory_space<vmem>>, vector<8x32xf32>
    %593 = math.tanh %583 : vector<8x32xf32>
    %594 = arith.mulf %592, %593 : vector<8x32xf32>
    %595 = arith.index_cast %568 : i32 to index
    %c0_261 = arith.constant 0 : index
    %596 = vector.load %arg17[%595, %c0_261] : memref<128x32xf32, #tpu.memory_space<vmem>>, vector<8x32xf32>
    %597 = arith.addf %594, %596 : vector<8x32xf32>
    %598 = arith.index_cast %565 : i32 to index
    %c0_262 = arith.constant 0 : index
    %599 = vector.load %arg11[%598, %c0_262] : memref<64x32xf32, #tpu.memory_space<vmem>>, vector<8x32xf32>
    tpu.vector_store %arg11[%598, %c0_262], %590 {strides = array<i32>} : memref<64x32xf32, #tpu.memory_space<vmem>>, vector<8x32xf32>,
    %600 = arith.index_cast %571 : i32 to index
    %c0_263 = arith.constant 0 : index
    %601 = vector.load %arg12[%600, %c0_263] : memref<64x32xf32, #tpu.memory_space<vmem>>, vector<8x32xf32>
    tpu.vector_store %arg12[%600, %c0_263], %597 {strides = array<i32>} : memref<64x32xf32, #tpu.memory_space<vmem>>, vector<8x32xf32>,
    %c3_i32_264 = arith.constant 3 : i32
    %c8_i32_265 = arith.constant 8 : i32
    %602 = arith.muli %c3_i32_264, %c8_i32_265 : i32
    %603 = tpu.assume_multiple %602, 8 : i32
    %c15_i32_266 = arith.constant 15 : i32
    %604 = arith.subi %c15_i32_266, %c3_i32_264 : i32
    %c8_i32_267 = arith.constant 8 : i32
    %605 = arith.muli %604, %c8_i32_267 : i32
    %606 = tpu.assume_multiple %605, 8 : i32
    %c7_i32_268 = arith.constant 7 : i32
    %607 = arith.subi %c7_i32_268, %c3_i32_264 : i32
    %c8_i32_269 = arith.constant 8 : i32
    %608 = arith.muli %607, %c8_i32_269 : i32
    %609 = tpu.assume_multiple %608, 8 : i32
    %610 = arith.index_cast %603 : i32 to index
    %c0_270 = arith.constant 0 : index
    %611 = vector.load %arg14[%610, %c0_270] : memref<128x32xf32, #tpu.memory_space<vmem>>, vector<8x32xf32>
    %612 = arith.mulf %611, %577 : vector<8x32xf32>
    %613 = arith.index_cast %603 : i32 to index
    %c0_271 = arith.constant 0 : index
    %614 = vector.load %arg15[%613, %c0_271] : memref<128x32xf32, #tpu.memory_space<vmem>>, vector<8x32xf32>
    %615 = arith.addf %612, %614 : vector<8x32xf32>
    %616 = arith.index_cast %606 : i32 to index
    %c0_272 = arith.constant 0 : index
    %617 = vector.load %arg14[%616, %c0_272] : memref<128x32xf32, #tpu.memory_space<vmem>>, vector<8x32xf32>
    %618 = arith.mulf %617, %583 : vector<8x32xf32>
    %619 = arith.index_cast %606 : i32 to index
    %c0_273 = arith.constant 0 : index
    %620 = vector.load %arg15[%619, %c0_273] : memref<128x32xf32, #tpu.memory_space<vmem>>, vector<8x32xf32>
    %621 = arith.addf %618, %620 : vector<8x32xf32>
    %622 = arith.index_cast %603 : i32 to index
    %c0_274 = arith.constant 0 : index
    %623 = vector.load %arg16[%622, %c0_274] : memref<128x32xf32, #tpu.memory_space<vmem>>, vector<8x32xf32>
    %624 = math.tanh %615 : vector<8x32xf32>
    %625 = arith.mulf %623, %624 : vector<8x32xf32>
    %626 = arith.index_cast %603 : i32 to index
    %c0_275 = arith.constant 0 : index
    %627 = vector.load %arg17[%626, %c0_275] : memref<128x32xf32, #tpu.memory_space<vmem>>, vector<8x32xf32>
    %628 = arith.addf %625, %627 : vector<8x32xf32>
    %629 = arith.index_cast %606 : i32 to index
    %c0_276 = arith.constant 0 : index
    %630 = vector.load %arg16[%629, %c0_276] : memref<128x32xf32, #tpu.memory_space<vmem>>, vector<8x32xf32>
    %631 = math.tanh %621 : vector<8x32xf32>
    %632 = arith.mulf %630, %631 : vector<8x32xf32>
    %633 = arith.index_cast %606 : i32 to index
    %c0_277 = arith.constant 0 : index
    %634 = vector.load %arg17[%633, %c0_277] : memref<128x32xf32, #tpu.memory_space<vmem>>, vector<8x32xf32>
    %635 = arith.addf %632, %634 : vector<8x32xf32>
    %636 = arith.index_cast %603 : i32 to index
    %c0_278 = arith.constant 0 : index
    %637 = vector.load %arg11[%636, %c0_278] : memref<64x32xf32, #tpu.memory_space<vmem>>, vector<8x32xf32>
    tpu.vector_store %arg11[%636, %c0_278], %628 {strides = array<i32>} : memref<64x32xf32, #tpu.memory_space<vmem>>, vector<8x32xf32>,
    %638 = arith.index_cast %609 : i32 to index
    %c0_279 = arith.constant 0 : index
    %639 = vector.load %arg12[%638, %c0_279] : memref<64x32xf32, #tpu.memory_space<vmem>>, vector<8x32xf32>
    tpu.vector_store %arg12[%638, %c0_279], %635 {strides = array<i32>} : memref<64x32xf32, #tpu.memory_space<vmem>>, vector<8x32xf32>,
    %c4_i32_280 = arith.constant 4 : i32
    %c8_i32_281 = arith.constant 8 : i32
    %640 = arith.muli %c4_i32_280, %c8_i32_281 : i32
    %641 = tpu.assume_multiple %640, 8 : i32
    %c15_i32_282 = arith.constant 15 : i32
    %642 = arith.subi %c15_i32_282, %c4_i32_280 : i32
    %c8_i32_283 = arith.constant 8 : i32
    %643 = arith.muli %642, %c8_i32_283 : i32
    %644 = tpu.assume_multiple %643, 8 : i32
    %c7_i32_284 = arith.constant 7 : i32
    %645 = arith.subi %c7_i32_284, %c4_i32_280 : i32
    %c8_i32_285 = arith.constant 8 : i32
    %646 = arith.muli %645, %c8_i32_285 : i32
    %647 = tpu.assume_multiple %646, 8 : i32
    %648 = arith.index_cast %641 : i32 to index
    %c0_286 = arith.constant 0 : index
    %649 = vector.load %arg14[%648, %c0_286] : memref<128x32xf32, #tpu.memory_space<vmem>>, vector<8x32xf32>
    %650 = arith.mulf %649, %615 : vector<8x32xf32>
    %651 = arith.index_cast %641 : i32 to index
    %c0_287 = arith.constant 0 : index
    %652 = vector.load %arg15[%651, %c0_287] : memref<128x32xf32, #tpu.memory_space<vmem>>, vector<8x32xf32>
    %653 = arith.addf %650, %652 : vector<8x32xf32>
    %654 = arith.index_cast %644 : i32 to index
    %c0_288 = arith.constant 0 : index
    %655 = vector.load %arg14[%654, %c0_288] : memref<128x32xf32, #tpu.memory_space<vmem>>, vector<8x32xf32>
    %656 = arith.mulf %655, %621 : vector<8x32xf32>
    %657 = arith.index_cast %644 : i32 to index
    %c0_289 = arith.constant 0 : index
    %658 = vector.load %arg15[%657, %c0_289] : memref<128x32xf32, #tpu.memory_space<vmem>>, vector<8x32xf32>
    %659 = arith.addf %656, %658 : vector<8x32xf32>
    %660 = arith.index_cast %641 : i32 to index
    %c0_290 = arith.constant 0 : index
    %661 = vector.load %arg16[%660, %c0_290] : memref<128x32xf32, #tpu.memory_space<vmem>>, vector<8x32xf32>
    %662 = math.tanh %653 : vector<8x32xf32>
    %663 = arith.mulf %661, %662 : vector<8x32xf32>
    %664 = arith.index_cast %641 : i32 to index
    %c0_291 = arith.constant 0 : index
    %665 = vector.load %arg17[%664, %c0_291] : memref<128x32xf32, #tpu.memory_space<vmem>>, vector<8x32xf32>
    %666 = arith.addf %663, %665 : vector<8x32xf32>
    %667 = arith.index_cast %644 : i32 to index
    %c0_292 = arith.constant 0 : index
    %668 = vector.load %arg16[%667, %c0_292] : memref<128x32xf32, #tpu.memory_space<vmem>>, vector<8x32xf32>
    %669 = math.tanh %659 : vector<8x32xf32>
    %670 = arith.mulf %668, %669 : vector<8x32xf32>
    %671 = arith.index_cast %644 : i32 to index
    %c0_293 = arith.constant 0 : index
    %672 = vector.load %arg17[%671, %c0_293] : memref<128x32xf32, #tpu.memory_space<vmem>>, vector<8x32xf32>
    %673 = arith.addf %670, %672 : vector<8x32xf32>
    %674 = arith.index_cast %641 : i32 to index
    %c0_294 = arith.constant 0 : index
    %675 = vector.load %arg11[%674, %c0_294] : memref<64x32xf32, #tpu.memory_space<vmem>>, vector<8x32xf32>
    tpu.vector_store %arg11[%674, %c0_294], %666 {strides = array<i32>} : memref<64x32xf32, #tpu.memory_space<vmem>>, vector<8x32xf32>,
    %676 = arith.index_cast %647 : i32 to index
    %c0_295 = arith.constant 0 : index
    %677 = vector.load %arg12[%676, %c0_295] : memref<64x32xf32, #tpu.memory_space<vmem>>, vector<8x32xf32>
    tpu.vector_store %arg12[%676, %c0_295], %673 {strides = array<i32>} : memref<64x32xf32, #tpu.memory_space<vmem>>, vector<8x32xf32>,
    %c5_i32_296 = arith.constant 5 : i32
    %c8_i32_297 = arith.constant 8 : i32
    %678 = arith.muli %c5_i32_296, %c8_i32_297 : i32
    %679 = tpu.assume_multiple %678, 8 : i32
    %c15_i32_298 = arith.constant 15 : i32
    %680 = arith.subi %c15_i32_298, %c5_i32_296 : i32
    %c8_i32_299 = arith.constant 8 : i32
    %681 = arith.muli %680, %c8_i32_299 : i32
    %682 = tpu.assume_multiple %681, 8 : i32
    %c7_i32_300 = arith.constant 7 : i32
    %683 = arith.subi %c7_i32_300, %c5_i32_296 : i32
    %c8_i32_301 = arith.constant 8 : i32
    %684 = arith.muli %683, %c8_i32_301 : i32
    %685 = tpu.assume_multiple %684, 8 : i32
    %686 = arith.index_cast %679 : i32 to index
    %c0_302 = arith.constant 0 : index
    %687 = vector.load %arg14[%686, %c0_302] : memref<128x32xf32, #tpu.memory_space<vmem>>, vector<8x32xf32>
    %688 = arith.mulf %687, %653 : vector<8x32xf32>
    %689 = arith.index_cast %679 : i32 to index
    %c0_303 = arith.constant 0 : index
    %690 = vector.load %arg15[%689, %c0_303] : memref<128x32xf32, #tpu.memory_space<vmem>>, vector<8x32xf32>
    %691 = arith.addf %688, %690 : vector<8x32xf32>
    %692 = arith.index_cast %682 : i32 to index
    %c0_304 = arith.constant 0 : index
    %693 = vector.load %arg14[%692, %c0_304] : memref<128x32xf32, #tpu.memory_space<vmem>>, vector<8x32xf32>
    %694 = arith.mulf %693, %659 : vector<8x32xf32>
    %695 = arith.index_cast %682 : i32 to index
    %c0_305 = arith.constant 0 : index
    %696 = vector.load %arg15[%695, %c0_305] : memref<128x32xf32, #tpu.memory_space<vmem>>, vector<8x32xf32>
    %697 = arith.addf %694, %696 : vector<8x32xf32>
    %698 = arith.index_cast %679 : i32 to index
    %c0_306 = arith.constant 0 : index
    %699 = vector.load %arg16[%698, %c0_306] : memref<128x32xf32, #tpu.memory_space<vmem>>, vector<8x32xf32>
    %700 = math.tanh %691 : vector<8x32xf32>
    %701 = arith.mulf %699, %700 : vector<8x32xf32>
    %702 = arith.index_cast %679 : i32 to index
    %c0_307 = arith.constant 0 : index
    %703 = vector.load %arg17[%702, %c0_307] : memref<128x32xf32, #tpu.memory_space<vmem>>, vector<8x32xf32>
    %704 = arith.addf %701, %703 : vector<8x32xf32>
    %705 = arith.index_cast %682 : i32 to index
    %c0_308 = arith.constant 0 : index
    %706 = vector.load %arg16[%705, %c0_308] : memref<128x32xf32, #tpu.memory_space<vmem>>, vector<8x32xf32>
    %707 = math.tanh %697 : vector<8x32xf32>
    %708 = arith.mulf %706, %707 : vector<8x32xf32>
    %709 = arith.index_cast %682 : i32 to index
    %c0_309 = arith.constant 0 : index
    %710 = vector.load %arg17[%709, %c0_309] : memref<128x32xf32, #tpu.memory_space<vmem>>, vector<8x32xf32>
    %711 = arith.addf %708, %710 : vector<8x32xf32>
    %712 = arith.index_cast %679 : i32 to index
    %c0_310 = arith.constant 0 : index
    %713 = vector.load %arg11[%712, %c0_310] : memref<64x32xf32, #tpu.memory_space<vmem>>, vector<8x32xf32>
    tpu.vector_store %arg11[%712, %c0_310], %704 {strides = array<i32>} : memref<64x32xf32, #tpu.memory_space<vmem>>, vector<8x32xf32>,
    %714 = arith.index_cast %685 : i32 to index
    %c0_311 = arith.constant 0 : index
    %715 = vector.load %arg12[%714, %c0_311] : memref<64x32xf32, #tpu.memory_space<vmem>>, vector<8x32xf32>
    tpu.vector_store %arg12[%714, %c0_311], %711 {strides = array<i32>} : memref<64x32xf32, #tpu.memory_space<vmem>>, vector<8x32xf32>,
    %c6_i32_312 = arith.constant 6 : i32
    %c8_i32_313 = arith.constant 8 : i32
    %716 = arith.muli %c6_i32_312, %c8_i32_313 : i32
    %717 = tpu.assume_multiple %716, 8 : i32
    %c15_i32_314 = arith.constant 15 : i32
    %718 = arith.subi %c15_i32_314, %c6_i32_312 : i32
    %c8_i32_315 = arith.constant 8 : i32
    %719 = arith.muli %718, %c8_i32_315 : i32
    %720 = tpu.assume_multiple %719, 8 : i32
    %c7_i32_316 = arith.constant 7 : i32
    %721 = arith.subi %c7_i32_316, %c6_i32_312 : i32
    %c8_i32_317 = arith.constant 8 : i32
    %722 = arith.muli %721, %c8_i32_317 : i32
    %723 = tpu.assume_multiple %722, 8 : i32
    %724 = arith.index_cast %717 : i32 to index
    %c0_318 = arith.constant 0 : index
    %725 = vector.load %arg14[%724, %c0_318] : memref<128x32xf32, #tpu.memory_space<vmem>>, vector<8x32xf32>
    %726 = arith.mulf %725, %691 : vector<8x32xf32>
    %727 = arith.index_cast %717 : i32 to index
    %c0_319 = arith.constant 0 : index
    %728 = vector.load %arg15[%727, %c0_319] : memref<128x32xf32, #tpu.memory_space<vmem>>, vector<8x32xf32>
    %729 = arith.addf %726, %728 : vector<8x32xf32>
    %730 = arith.index_cast %720 : i32 to index
    %c0_320 = arith.constant 0 : index
    %731 = vector.load %arg14[%730, %c0_320] : memref<128x32xf32, #tpu.memory_space<vmem>>, vector<8x32xf32>
    %732 = arith.mulf %731, %697 : vector<8x32xf32>
    %733 = arith.index_cast %720 : i32 to index
    %c0_321 = arith.constant 0 : index
    %734 = vector.load %arg15[%733, %c0_321] : memref<128x32xf32, #tpu.memory_space<vmem>>, vector<8x32xf32>
    %735 = arith.addf %732, %734 : vector<8x32xf32>
    %736 = arith.index_cast %717 : i32 to index
    %c0_322 = arith.constant 0 : index
    %737 = vector.load %arg16[%736, %c0_322] : memref<128x32xf32, #tpu.memory_space<vmem>>, vector<8x32xf32>
    %738 = math.tanh %729 : vector<8x32xf32>
    %739 = arith.mulf %737, %738 : vector<8x32xf32>
    %740 = arith.index_cast %717 : i32 to index
    %c0_323 = arith.constant 0 : index
    %741 = vector.load %arg17[%740, %c0_323] : memref<128x32xf32, #tpu.memory_space<vmem>>, vector<8x32xf32>
    %742 = arith.addf %739, %741 : vector<8x32xf32>
    %743 = arith.index_cast %720 : i32 to index
    %c0_324 = arith.constant 0 : index
    %744 = vector.load %arg16[%743, %c0_324] : memref<128x32xf32, #tpu.memory_space<vmem>>, vector<8x32xf32>
    %745 = math.tanh %735 : vector<8x32xf32>
    %746 = arith.mulf %744, %745 : vector<8x32xf32>
    %747 = arith.index_cast %720 : i32 to index
    %c0_325 = arith.constant 0 : index
    %748 = vector.load %arg17[%747, %c0_325] : memref<128x32xf32, #tpu.memory_space<vmem>>, vector<8x32xf32>
    %749 = arith.addf %746, %748 : vector<8x32xf32>
    %750 = arith.index_cast %717 : i32 to index
    %c0_326 = arith.constant 0 : index
    %751 = vector.load %arg11[%750, %c0_326] : memref<64x32xf32, #tpu.memory_space<vmem>>, vector<8x32xf32>
    tpu.vector_store %arg11[%750, %c0_326], %742 {strides = array<i32>} : memref<64x32xf32, #tpu.memory_space<vmem>>, vector<8x32xf32>,
    %752 = arith.index_cast %723 : i32 to index
    %c0_327 = arith.constant 0 : index
    %753 = vector.load %arg12[%752, %c0_327] : memref<64x32xf32, #tpu.memory_space<vmem>>, vector<8x32xf32>
    tpu.vector_store %arg12[%752, %c0_327], %749 {strides = array<i32>} : memref<64x32xf32, #tpu.memory_space<vmem>>, vector<8x32xf32>,
    %c7_i32_328 = arith.constant 7 : i32
    %c8_i32_329 = arith.constant 8 : i32
    %754 = arith.muli %c7_i32_328, %c8_i32_329 : i32
    %755 = tpu.assume_multiple %754, 8 : i32
    %c15_i32_330 = arith.constant 15 : i32
    %756 = arith.subi %c15_i32_330, %c7_i32_328 : i32
    %c8_i32_331 = arith.constant 8 : i32
    %757 = arith.muli %756, %c8_i32_331 : i32
    %758 = tpu.assume_multiple %757, 8 : i32
    %c7_i32_332 = arith.constant 7 : i32
    %759 = arith.subi %c7_i32_332, %c7_i32_328 : i32
    %c8_i32_333 = arith.constant 8 : i32
    %760 = arith.muli %759, %c8_i32_333 : i32
    %761 = tpu.assume_multiple %760, 8 : i32
    %762 = arith.index_cast %755 : i32 to index
    %c0_334 = arith.constant 0 : index
    %763 = vector.load %arg14[%762, %c0_334] : memref<128x32xf32, #tpu.memory_space<vmem>>, vector<8x32xf32>
    %764 = arith.mulf %763, %729 : vector<8x32xf32>
    %765 = arith.index_cast %755 : i32 to index
    %c0_335 = arith.constant 0 : index
    %766 = vector.load %arg15[%765, %c0_335] : memref<128x32xf32, #tpu.memory_space<vmem>>, vector<8x32xf32>
    %767 = arith.addf %764, %766 : vector<8x32xf32>
    %768 = arith.index_cast %758 : i32 to index
    %c0_336 = arith.constant 0 : index
    %769 = vector.load %arg14[%768, %c0_336] : memref<128x32xf32, #tpu.memory_space<vmem>>, vector<8x32xf32>
    %770 = arith.mulf %769, %735 : vector<8x32xf32>
    %771 = arith.index_cast %758 : i32 to index
    %c0_337 = arith.constant 0 : index
    %772 = vector.load %arg15[%771, %c0_337] : memref<128x32xf32, #tpu.memory_space<vmem>>, vector<8x32xf32>
    %773 = arith.addf %770, %772 : vector<8x32xf32>
    %774 = arith.index_cast %755 : i32 to index
    %c0_338 = arith.constant 0 : index
    %775 = vector.load %arg16[%774, %c0_338] : memref<128x32xf32, #tpu.memory_space<vmem>>, vector<8x32xf32>
    %776 = math.tanh %767 : vector<8x32xf32>
    %777 = arith.mulf %775, %776 : vector<8x32xf32>
    %778 = arith.index_cast %755 : i32 to index
    %c0_339 = arith.constant 0 : index
    %779 = vector.load %arg17[%778, %c0_339] : memref<128x32xf32, #tpu.memory_space<vmem>>, vector<8x32xf32>
    %780 = arith.addf %777, %779 : vector<8x32xf32>
    %781 = arith.index_cast %758 : i32 to index
    %c0_340 = arith.constant 0 : index
    %782 = vector.load %arg16[%781, %c0_340] : memref<128x32xf32, #tpu.memory_space<vmem>>, vector<8x32xf32>
    %783 = math.tanh %773 : vector<8x32xf32>
    %784 = arith.mulf %782, %783 : vector<8x32xf32>
    %785 = arith.index_cast %758 : i32 to index
    %c0_341 = arith.constant 0 : index
    %786 = vector.load %arg17[%785, %c0_341] : memref<128x32xf32, #tpu.memory_space<vmem>>, vector<8x32xf32>
    %787 = arith.addf %784, %786 : vector<8x32xf32>
    %788 = arith.index_cast %755 : i32 to index
    %c0_342 = arith.constant 0 : index
    %789 = vector.load %arg11[%788, %c0_342] : memref<64x32xf32, #tpu.memory_space<vmem>>, vector<8x32xf32>
    tpu.vector_store %arg11[%788, %c0_342], %780 {strides = array<i32>} : memref<64x32xf32, #tpu.memory_space<vmem>>, vector<8x32xf32>,
    %790 = arith.index_cast %761 : i32 to index
    %c0_343 = arith.constant 0 : index
    %791 = vector.load %arg12[%790, %c0_343] : memref<64x32xf32, #tpu.memory_space<vmem>>, vector<8x32xf32>
    tpu.vector_store %arg12[%790, %c0_343], %787 {strides = array<i32>} : memref<64x32xf32, #tpu.memory_space<vmem>>, vector<8x32xf32>,
    %c8_i32_344 = arith.constant 8 : i32
    %c8_345 = arith.constant 8 : index
    %c0_346 = arith.constant 0 : index
    %792 = vector.load %arg13[%c8_345, %c0_346] : memref<16x64xf32, #tpu.memory_space<vmem>>, vector<8x32xf32>
    tpu.vector_store %arg13[%c8_345, %c0_346], %767 {strides = array<i32>} : memref<16x64xf32, #tpu.memory_space<vmem>>, vector<8x32xf32>,
    %c8_347 = arith.constant 8 : index
    %c32_348 = arith.constant 32 : index
    %793 = vector.load %arg13[%c8_347, %c32_348] : memref<16x64xf32, #tpu.memory_space<vmem>>, vector<8x32xf32>
    tpu.vector_store %arg13[%c8_347, %c32_348], %773 {strides = array<i32>} : memref<16x64xf32, #tpu.memory_space<vmem>>, vector<8x32xf32>,
    return
  }
}

</mosaic_0001>

<llo_original>
// kernel: model_forward.1
$region0: #{model_forward.1}
  #allocation0 [shape = 'u32[]', space=smem, size = 0x4, offset = 0x4, fixed_abs, tag = 'smem constant byte address 0x4 - core index']
  #allocation1 [shape = 'u32[144,128]{1,0:T(1,128)}', space=vmem, size = 0x12000, scoped, tag = 'internal scratch']
  #allocation2 [shape = 'f32[128,32]{1,0:T(8,128)}', space=vmem, size = 0x10000, scoped, tag = 'scratch operand']
  #allocation3 [shape = 'f32[128,32]{1,0:T(8,128)}', space=vmem, size = 0x10000, scoped, tag = 'scratch operand']
  #allocation4 [shape = 'f32[128,32]{1,0:T(8,128)}', space=vmem, size = 0x10000, scoped, tag = 'scratch operand']
  #allocation5 [shape = 'f32[128,32]{1,0:T(8,128)}', space=vmem, size = 0x10000, scoped, tag = 'scratch operand']
  %s0 = inlined_call_operand.vmem [shape: f32[64,1], index: 0, kind: input, shape index: {}]
  %s1 = inlined_call_operand.vmem [shape: f32[16,64], index: 1, kind: input, shape index: {}]
  %s2 = inlined_call_operand.vmem [shape: f32[64,32], index: 2, kind: input, shape index: {}]
  %s3 = inlined_call_operand.vmem [shape: f32[32,128], index: 3, kind: input, shape index: {}]
  %s4 = inlined_call_operand.vmem [shape: f32[2,32], index: 4, kind: input, shape index: {}]
  %s5 = inlined_call_operand.vmem [shape: f32[32,128], index: 5, kind: input, shape index: {}]
  %s6 = inlined_call_operand.vmem [shape: f32[2,32], index: 6, kind: input, shape index: {}]
  %s7 = inlined_call_operand.vmem [shape: f32[64,96], index: 7, kind: input, shape index: {}]
  %s8 = inlined_call_operand.vmem [shape: f32[2,32], index: 8, kind: input, shape index: {}]
  %s9 = inlined_call_operand.vmem [shape: f32[64,96], index: 9, kind: input, shape index: {}]
  %s10 = inlined_call_operand.vmem [shape: f32[2,32], index: 10, kind: input, shape index: {}]
  %s11 = inlined_call_operand.vmem [shape: f32[64,32], index: 11, kind: output, shape index: {0}]
  %s12 = inlined_call_operand.vmem [shape: f32[64,32], index: 12, kind: output, shape index: {1}]
  %s13 = inlined_call_operand.vmem [shape: f32[16,64], index: 13, kind: output, shape index: {2}]
  %14 = xla_tuple %s11, %s12, %s13
  %s15 = sld [smem:[#allocation0]]
  $region70: #{model_forward.1} parent=0
    _
  %s17 = ssub.s32 1, %s15
  %s18 = scalar_select 0, %s17, %s15
  // Predicated region
  $region2: #{model_forward.1} parent=0 // pred_check
    _
  $region3: #{model_forward.1} parent=0 // pred_check_branch
    %20 = sbr.rel (0) target = $region5
  $region4: #{model_forward.1} parent=0 // pred_region
    _
  $region5: #{model_forward.1} parent=0 // pred_fallthru
    _
  // Predicated region
  $region6: #{model_forward.1} parent=0 // pred_check
    _
  $region7: #{model_forward.1} parent=0 // pred_check_branch
    %22 = sbr.rel (0) target = $region9
  $region8: #{model_forward.1} parent=0 // pred_region
    _
  $region9: #{model_forward.1} parent=0 // pred_fallthru
    _
  // Predicated region
  $region10: #{model_forward.1} parent=0 // pred_check
    _
  $region11: #{model_forward.1} parent=0 // pred_check_branch
    %24 = sbr.rel (0) target = $region13
  $region12: #{model_forward.1} parent=0 // pred_region
    _
  $region13: #{model_forward.1} parent=0 // pred_fallthru
    _
  // Predicated region
  $region14: #{model_forward.1} parent=0 // pred_check
    _
  $region15: #{model_forward.1} parent=0 // pred_check_branch
    %26 = sbr.rel (0) target = $region17
  $region16: #{model_forward.1} parent=0 // pred_region
    _
  $region17: #{model_forward.1} parent=0 // pred_fallthru
    _
  // Predicated region
  $region18: #{model_forward.1} parent=0 // pred_check
    _
  $region19: #{model_forward.1} parent=0 // pred_check_branch
    %28 = sbr.rel (0) target = $region21
  $region20: #{model_forward.1} parent=0 // pred_region
    _
  $region21: #{model_forward.1} parent=0 // pred_fallthru
    _
  // Predicated region
  $region22: #{model_forward.1} parent=0 // pred_check
    _
  $region23: #{model_forward.1} parent=0 // pred_check_branch
    %30 = sbr.rel (0) target = $region25
  $region24: #{model_forward.1} parent=0 // pred_region
    _
  $region25: #{model_forward.1} parent=0 // pred_fallthru
    _
  // Predicated region
  $region26: #{model_forward.1} parent=0 // pred_check
    _
  $region27: #{model_forward.1} parent=0 // pred_check_branch
    %32 = sbr.rel (0) target = $region29
  $region28: #{model_forward.1} parent=0 // pred_region
    _
  $region29: #{model_forward.1} parent=0 // pred_fallthru
    _
  // Predicated region
  $region30: #{model_forward.1} parent=0 // pred_check
    _
  $region31: #{model_forward.1} parent=0 // pred_check_branch
    %34 = sbr.rel (0) target = $region33
  $region32: #{model_forward.1} parent=0 // pred_region
    _
  $region33: #{model_forward.1} parent=0 // pred_fallthru
    _
  // Predicated region
  $region34: #{model_forward.1} parent=0 // pred_check
    _
  $region35: #{model_forward.1} parent=0 // pred_check_branch
    %36 = sbr.rel (0) target = $region37
  $region36: #{model_forward.1} parent=0 // pred_region
    _
  $region37: #{model_forward.1} parent=0 // pred_fallthru
    _
  // Predicated region
  $region38: #{model_forward.1} parent=0 // pred_check
    _
  $region39: #{model_forward.1} parent=0 // pred_check_branch
    %38 = sbr.rel (0) target = $region41
  $region40: #{model_forward.1} parent=0 // pred_region
    _
  $region41: #{model_forward.1} parent=0 // pred_fallthru
    _
  // Predicated region
  $region42: #{model_forward.1} parent=0 // pred_check
    _
  $region43: #{model_forward.1} parent=0 // pred_check_branch
    %40 = sbr.rel (0) target = $region45
  $region44: #{model_forward.1} parent=0 // pred_region
    _
  $region45: #{model_forward.1} parent=0 // pred_fallthru
    _
  %v41 = vld [vmem:[%s0] sm:$0xff]
  %v42 = vld [vmem:[%s0 + $0x8] sm:$0xff]
  %v43 = vld [vmem:[%s0 + $0x10] sm:$0xff]
  %v44 = vld [vmem:[%s0 + $0x18] sm:$0xff]
  %v45 = vld [vmem:[%s0 + $0x20] sm:$0xff]
  %v46 = vld [vmem:[%s0 + $0x28] sm:$0xff]
  %v47 = vld [vmem:[%s0 + $0x30] sm:$0xff]
  %v48 = vld [vmem:[%s0 + $0x38] sm:$0xff]
  %v49 = vsub.f32 1.0, %v41
  %v50 = vsub.f32 1.0, %v42
  %v51 = vsub.f32 1.0, %v43
  %v52 = vsub.f32 1.0, %v44
  %v53 = vsub.f32 1.0, %v45
  %v54 = vsub.f32 1.0, %v46
  %v55 = vsub.f32 1.0, %v47
  %v56 = vsub.f32 1.0, %v48
  %v57 = vld [vmem:[%s2] sm:$0xff]
  %v58 = vld [vmem:[%s2 + $0x8] sm:$0xff]
  %v59 = vld [vmem:[%s2 + $0x10] sm:$0xff]
  %v60 = vld [vmem:[%s2 + $0x18] sm:$0xff]
  %v61 = vld [vmem:[%s2 + $0x20] sm:$0xff]
  %v62 = vld [vmem:[%s2 + $0x28] sm:$0xff]
  %v63 = vld [vmem:[%s2 + $0x30] sm:$0xff]
  %v64 = vld [vmem:[%s2 + $0x38] sm:$0xff]
  %v65 = vld [vmem:[%s3] sm:$0xff]
  %v66 = vld [vmem:[%s3 + $0x8] sm:$0xff]
  %v67 = vld [vmem:[%s3 + $0x10] sm:$0xff]
  %v68 = vld [vmem:[%s3 + $0x18] sm:$0xff]
  %vm69 = vcmask 261120
  %v71 = vsel %vm69, %v57, 0
  %v74 = vsel %vm69, %v58, 0
  %v77 = vsel %vm69, %v59, 0
  %v80 = vsel %vm69, %v60, 0
  %v83 = vsel %vm69, %v61, 0
  %v86 = vsel %vm69, %v62, 0
  %v89 = vsel %vm69, %v63, 0
  %v92 = vsel %vm69, %v64, 0
  %94 = vmatprep.subr.mxu0 0.0
  %95 = vmatpush1.msra.mxu0 0.0
  %96 = vmatprep.subr.mxu0 0.0
  %97 = vmatpush1.msra.mxu0 0.0
  %98 = vmatprep.subr.mxu0 0.0
  %99 = vmatpush1.msra.mxu0 0.0
  %100 = vmatprep.subr.mxu0 0.0
  %101 = vmatpush1.msra.mxu0 0.0
  %102 = vmatprep.subr.mxu0 0.0
  %103 = vmatpush1.msra.mxu0 0.0
  %104 = vmatprep.subr.mxu0 0.0
  %105 = vmatpush1.msra.mxu0 0.0
  %106 = vmatprep.subr.mxu0 0.0
  %107 = vmatpush1.msra.mxu0 0.0
  %108 = vmatprep.subr.mxu0 0.0
  %109 = vmatpush1.msra.mxu0 0.0
  %110 = vmatprep.subr.mxu0 0.0
  %111 = vmatpush1.msra.mxu0 0.0
  %112 = vmatprep.subr.mxu0 0.0
  %113 = vmatpush1.msra.mxu0 0.0
  %114 = vmatprep.subr.mxu0 0.0
  %115 = vmatpush1.msra.mxu0 0.0
  %116 = vmatprep.subr.mxu0 0.0
  %117 = vmatpush1.msra.mxu0 0.0
  %118 = vmatprep.subr.mxu0 0.0
  %119 = vmatpush1.msra.mxu0 %v68
  %120 = vmatprep.subr.mxu0 0.0
  %121 = vmatpush1.msra.mxu0 %v67
  %122 = vmatprep.subr.mxu0 0.0
  %123 = vmatpush1.msra.mxu0 %v66
  %124 = vmatprep.subr.mxu0 0.0
  %125 = vmatpush1.msra.mxu0 %v65
  %126 = vmatprep.subr.mxu0 0.0
  %127 = vmatpush2.msra.mxu0 0.0
  %128 = vmatprep.subr.mxu0 0.0
  %129 = vmatpush2.msra.mxu0 0.0
  %130 = vmatprep.subr.mxu0 0.0
  %131 = vmatpush2.msra.mxu0 0.0
  %132 = vmatprep.subr.mxu0 0.0
  %133 = vmatpush2.msra.mxu0 0.0
  %134 = vmatprep.subr.mxu0 0.0
  %135 = vmatpush2.msra.mxu0 0.0
  %136 = vmatprep.subr.mxu0 0.0
  %137 = vmatpush2.msra.mxu0 0.0
  %138 = vmatprep.subr.mxu0 0.0
  %139 = vmatpush2.msra.mxu0 0.0
  %140 = vmatprep.subr.mxu0 0.0
  %141 = vmatpush2.msra.mxu0 0.0
  %142 = vmatprep.subr.mxu0 0.0
  %143 = vmatpush2.msra.mxu0 0.0
  %144 = vmatprep.subr.mxu0 0.0
  %145 = vmatpush2.msra.mxu0 0.0
  %146 = vmatprep.subr.mxu0 0.0
  %147 = vmatpush2.msra.mxu0 0.0
  %148 = vmatprep.subr.mxu0 0.0
  %149 = vmatpush2.msra.mxu0 0.0
  %150 = vmatprep.subr.mxu0 0.0
  %151 = vmatpush2.msra.mxu0 0.0
  %152 = vmatprep.subr.mxu0 0.0
  %153 = vmatpush2.msra.mxu0 0.0
  %154 = vmatprep.subr.mxu0 0.0
  %155 = vmatpush2.msra.mxu0 0.0
  %156 = vmatprep.subr.mxu0 0.0
  %157 = vmatpush2.msra.mxu0 0.0
  %158 = vmatprep.mubr.f32.mxu0 0.0
  %159 = vmatmul.mubr.f32.gmra.mxu0 %v71
  %v160 = vpop.f32.mrf.mxu0
  %v161 = vadd.f32 0.0, %v160
  %v162 = vpop.f32.mrf.mxu0
  %163 = vmatprep.mubr.f32.mxu0 0.0
  %164 = vmatmul.mubr.f32.gmra.mxu0 %v74
  %v165 = vpop.f32.mrf.mxu0
  %v166 = vadd.f32 0.0, %v165
  %v167 = vpop.f32.mrf.mxu0
  %168 = vmatprep.mubr.f32.mxu0 0.0
  %169 = vmatmul.mubr.f32.gmra.mxu0 %v77
  %v170 = vpop.f32.mrf.mxu0
  %v171 = vadd.f32 0.0, %v170
  %v172 = vpop.f32.mrf.mxu0
  %173 = vmatprep.mubr.f32.mxu0 0.0
  %174 = vmatmul.mubr.f32.gmra.mxu0 %v80
  %v175 = vpop.f32.mrf.mxu0
  %v176 = vadd.f32 0.0, %v175
  %v177 = vpop.f32.mrf.mxu0
  %178 = vmatprep.mubr.f32.mxu0 0.0
  %179 = vmatmul.mubr.f32.gmra.mxu0 %v83
  %v180 = vpop.f32.mrf.mxu0
  %v181 = vadd.f32 0.0, %v180
  %v182 = vpop.f32.mrf.mxu0
  %183 = vmatprep.mubr.f32.mxu0 0.0
  %184 = vmatmul.mubr.f32.gmra.mxu0 %v86
  %v185 = vpop.f32.mrf.mxu0
  %v186 = vadd.f32 0.0, %v185
  %v187 = vpop.f32.mrf.mxu0
  %188 = vmatprep.mubr.f32.mxu0 0.0
  %189 = vmatmul.mubr.f32.gmra.mxu0 %v89
  %v190 = vpop.f32.mrf.mxu0
  %v191 = vadd.f32 0.0, %v190
  %v192 = vpop.f32.mrf.mxu0
  %193 = vmatprep.mubr.f32.mxu0 0.0
  %194 = vmatmul.mubr.f32.gmra.mxu0 %v92
  %v195 = vpop.f32.mrf.mxu0
  %v196 = vadd.f32 0.0, %v195
  %v197 = vpop.f32.mrf.mxu0
  %198 = vdwg.mxu0
  %v199 = vld [vmem:[%s4] sm:$0x1]
  %v200 = vlaneseq
  %v201 = vshrl.u32 %v200, 7
  %v202 = vsub.s32 0, %v201
  %v203 = vrot.slane %v199, %v202
  %205 = vrot.lane.b32.xlu0 %v203, 32
  %v206 = vpop.permute.xlu0 %205
  %v208 = vadd.f32 %v161, %v206
  %v209 = vadd.f32 %v166, %v206
  %v210 = vadd.f32 %v171, %v206
  %v211 = vadd.f32 %v176, %v206
  %v212 = vadd.f32 %v181, %v206
  %v213 = vadd.f32 %v186, %v206
  %v214 = vadd.f32 %v191, %v206
  %v215 = vadd.f32 %v196, %v206
  %v216 = vxor.u32 %v208, 2147483648
  %v217 = vxor.u32 %v209, 2147483648
  %v218 = vxor.u32 %v210, 2147483648
  %v219 = vxor.u32 %v211, 2147483648
  %v220 = vxor.u32 %v212, 2147483648
  %v221 = vxor.u32 %v213, 2147483648
  %v222 = vxor.u32 %v214, 2147483648
  %v223 = vxor.u32 %v215, 2147483648
  %v224 = vmul.f32 %v216, 1.442695
  %v225 = vpow.pop %v224
  %v226 = vmul.f32 %v217, 1.442695
  %v227 = vpow.pop %v226
  %v228 = vmul.f32 %v218, 1.442695
  %v229 = vpow.pop %v228
  %v230 = vmul.f32 %v219, 1.442695
  %v231 = vpow.pop %v230
  %v232 = vmul.f32 %v220, 1.442695
  %v233 = vpow.pop %v232
  %v234 = vmul.f32 %v221, 1.442695
  %v235 = vpow.pop %v234
  %v236 = vmul.f32 %v222, 1.442695
  %v237 = vpow.pop %v236
  %v238 = vmul.f32 %v223, 1.442695
  %v239 = vpow.pop %v238
  %v240 = vadd.f32 %v225, 1.0
  %v241 = vadd.f32 %v227, 1.0
  %v242 = vadd.f32 %v229, 1.0
  %v243 = vadd.f32 %v231, 1.0
  %v244 = vadd.f32 %v233, 1.0
  %v245 = vadd.f32 %v235, 1.0
  %v246 = vadd.f32 %v237, 1.0
  %v247 = vadd.f32 %v239, 1.0
  %v248 = vrcp.pop %v240
  %v249 = vmul.f32 1.0, %v248
  %v250 = vrcp.pop %v241
  %v251 = vmul.f32 1.0, %v250
  %v252 = vrcp.pop %v242
  %v253 = vmul.f32 1.0, %v252
  %v254 = vrcp.pop %v243
  %v255 = vmul.f32 1.0, %v254
  %v256 = vrcp.pop %v244
  %v257 = vmul.f32 1.0, %v256
  %v258 = vrcp.pop %v245
  %v259 = vmul.f32 1.0, %v258
  %v260 = vrcp.pop %v246
  %v261 = vmul.f32 1.0, %v260
  %v262 = vrcp.pop %v247
  %v263 = vmul.f32 1.0, %v262
  %v264 = vld [vmem:[%s4 + $0x1] sm:$0x1]
  %v265 = vlaneseq
  %v266 = vshrl.u32 %v265, 7
  %v267 = vsub.s32 0, %v266
  %v268 = vrot.slane %v264, %v267
  %270 = vrot.lane.b32.xlu0 %v268, 64
  %v271 = vpop.permute.xlu0 %270
  %v273 = vadd.f32 %v161, %v271
  %v274 = vadd.f32 %v166, %v271
  %v275 = vadd.f32 %v171, %v271
  %v276 = vadd.f32 %v176, %v271
  %v277 = vadd.f32 %v181, %v271
  %v278 = vadd.f32 %v186, %v271
  %v279 = vadd.f32 %v191, %v271
  %v280 = vadd.f32 %v196, %v271
  %v281 = vxor.u32 %v273, 2147483648
  %v282 = vxor.u32 %v274, 2147483648
  %v283 = vxor.u32 %v275, 2147483648
  %v284 = vxor.u32 %v276, 2147483648
  %v285 = vxor.u32 %v277, 2147483648
  %v286 = vxor.u32 %v278, 2147483648
  %v287 = vxor.u32 %v279, 2147483648
  %v288 = vxor.u32 %v280, 2147483648
  %v289 = vmul.f32 %v281, 1.442695
  %v290 = vpow.pop %v289
  %v291 = vmul.f32 %v282, 1.442695
  %v292 = vpow.pop %v291
  %v293 = vmul.f32 %v283, 1.442695
  %v294 = vpow.pop %v293
  %v295 = vmul.f32 %v284, 1.442695
  %v296 = vpow.pop %v295
  %v297 = vmul.f32 %v285, 1.442695
  %v298 = vpow.pop %v297
  %v299 = vmul.f32 %v286, 1.442695
  %v300 = vpow.pop %v299
  %v301 = vmul.f32 %v287, 1.442695
  %v302 = vpow.pop %v301
  %v303 = vmul.f32 %v288, 1.442695
  %v304 = vpow.pop %v303
  %v305 = vadd.f32 %v290, 1.0
  %v306 = vadd.f32 %v292, 1.0
  %v307 = vadd.f32 %v294, 1.0
  %v308 = vadd.f32 %v296, 1.0
  %v309 = vadd.f32 %v298, 1.0
  %v310 = vadd.f32 %v300, 1.0
  %v311 = vadd.f32 %v302, 1.0
  %v312 = vadd.f32 %v304, 1.0
  %v313 = vrcp.pop %v305
  %v314 = vmul.f32 1.0, %v313
  %v315 = vrcp.pop %v306
  %v316 = vmul.f32 1.0, %v315
  %v317 = vrcp.pop %v307
  %v318 = vmul.f32 1.0, %v317
  %v319 = vrcp.pop %v308
  %v320 = vmul.f32 1.0, %v319
  %v321 = vrcp.pop %v309
  %v322 = vmul.f32 1.0, %v321
  %v323 = vrcp.pop %v310
  %v324 = vmul.f32 1.0, %v323
  %v325 = vrcp.pop %v311
  %v326 = vmul.f32 1.0, %v325
  %v327 = vrcp.pop %v312
  %v328 = vmul.f32 1.0, %v327
  %330 = vset.pattern.permute.xlu0 0
  %331 = vperm.xlu0 %330, %v49
  %v332 = vpop.permute.xlu0 %331
  %335 = vset.pattern.permute.xlu0 0
  %336 = vperm.xlu0 %335, %v50
  %v337 = vpop.permute.xlu0 %336
  %340 = vset.pattern.permute.xlu0 0
  %341 = vperm.xlu0 %340, %v51
  %v342 = vpop.permute.xlu0 %341
  %345 = vset.pattern.permute.xlu0 0
  %346 = vperm.xlu0 %345, %v52
  %v347 = vpop.permute.xlu0 %346
  %350 = vset.pattern.permute.xlu0 0
  %351 = vperm.xlu0 %350, %v53
  %v352 = vpop.permute.xlu0 %351
  %355 = vset.pattern.permute.xlu0 0
  %356 = vperm.xlu0 %355, %v54
  %v357 = vpop.permute.xlu0 %356
  %360 = vset.pattern.permute.xlu0 0
  %361 = vperm.xlu0 %360, %v55
  %v362 = vpop.permute.xlu0 %361
  %365 = vset.pattern.permute.xlu0 0
  %366 = vperm.xlu0 %365, %v56
  %v367 = vpop.permute.xlu0 %366
  %v369 = vmul.f32 %v249, %v332
  %v370 = vmul.f32 %v251, %v337
  %v371 = vmul.f32 %v253, %v342
  %v372 = vmul.f32 %v255, %v347
  %v373 = vmul.f32 %v257, %v352
  %v374 = vmul.f32 %v259, %v357
  %v375 = vmul.f32 %v261, %v362
  %v376 = vmul.f32 %v263, %v367
  %378 = vset.pattern.permute.xlu0 0
  %379 = vperm.xlu0 %378, %v41
  %v380 = vpop.permute.xlu0 %379
  %383 = vset.pattern.permute.xlu0 0
  %384 = vperm.xlu0 %383, %v42
  %v385 = vpop.permute.xlu0 %384
  %388 = vset.pattern.permute.xlu0 0
  %389 = vperm.xlu0 %388, %v43
  %v390 = vpop.permute.xlu0 %389
  %393 = vset.pattern.permute.xlu0 0
  %394 = vperm.xlu0 %393, %v44
  %v395 = vpop.permute.xlu0 %394
  %398 = vset.pattern.permute.xlu0 0
  %399 = vperm.xlu0 %398, %v45
  %v400 = vpop.permute.xlu0 %399
  %403 = vset.pattern.permute.xlu0 0
  %404 = vperm.xlu0 %403, %v46
  %v405 = vpop.permute.xlu0 %404
  %408 = vset.pattern.permute.xlu0 0
  %409 = vperm.xlu0 %408, %v47
  %v410 = vpop.permute.xlu0 %409
  %413 = vset.pattern.permute.xlu0 0
  %414 = vperm.xlu0 %413, %v48
  %v415 = vpop.permute.xlu0 %414
  %v417 = vadd.f32 %v369, %v380
  %v418 = vadd.f32 %v370, %v385
  %v419 = vadd.f32 %v371, %v390
  %v420 = vadd.f32 %v372, %v395
  %v421 = vadd.f32 %v373, %v400
  %v422 = vadd.f32 %v374, %v405
  %v423 = vadd.f32 %v375, %v410
  %v424 = vadd.f32 %v376, %v415
  %433 = vrot.lane.b32.xlu0 %v417, 96
  %v434 = vpop.permute.xlu0 %433
  %435 = vrot.lane.b32.xlu0 %v418, 96
  %v436 = vpop.permute.xlu0 %435
  %437 = vrot.lane.b32.xlu0 %v419, 96
  %v438 = vpop.permute.xlu0 %437
  %439 = vrot.lane.b32.xlu0 %v420, 96
  %v440 = vpop.permute.xlu0 %439
  %441 = vrot.lane.b32.xlu0 %v421, 96
  %v442 = vpop.permute.xlu0 %441
  %443 = vrot.lane.b32.xlu0 %v422, 96
  %v444 = vpop.permute.xlu0 %443
  %445 = vrot.lane.b32.xlu0 %v423, 96
  %v446 = vpop.permute.xlu0 %445
  %447 = vrot.lane.b32.xlu0 %v424, 96
  %v448 = vpop.permute.xlu0 %447
  %457 = vst.msk [vmem:[#allocation2] sm:$0xff] %vm69, %v434
  %458 = vst.msk [vmem:[#allocation2 + $0x8] sm:$0xff] %vm69, %v436
  %459 = vst.msk [vmem:[#allocation2 + $0x10] sm:$0xff] %vm69, %v438
  %460 = vst.msk [vmem:[#allocation2 + $0x18] sm:$0xff] %vm69, %v440
  %461 = vst.msk [vmem:[#allocation2 + $0x20] sm:$0xff] %vm69, %v442
  %462 = vst.msk [vmem:[#allocation2 + $0x28] sm:$0xff] %vm69, %v444
  %463 = vst.msk [vmem:[#allocation2 + $0x30] sm:$0xff] %vm69, %v446
  %464 = vst.msk [vmem:[#allocation2 + $0x38] sm:$0xff] %vm69, %v448
  %v465 = vsub.f32 1.0, %v249
  %v466 = vsub.f32 1.0, %v251
  %v467 = vsub.f32 1.0, %v253
  %v468 = vsub.f32 1.0, %v255
  %v469 = vsub.f32 1.0, %v257
  %v470 = vsub.f32 1.0, %v259
  %v471 = vsub.f32 1.0, %v261
  %v472 = vsub.f32 1.0, %v263
  %v473 = vmul.f32 %v332, %v465
  %v474 = vmul.f32 %v337, %v466
  %v475 = vmul.f32 %v342, %v467
  %v476 = vmul.f32 %v347, %v468
  %v477 = vmul.f32 %v352, %v469
  %v478 = vmul.f32 %v357, %v470
  %v479 = vmul.f32 %v362, %v471
  %v480 = vmul.f32 %v367, %v472
  %489 = vrot.lane.b32.xlu0 %v161, 32
  %v490 = vpop.permute.xlu0 %489
  %491 = vrot.lane.b32.xlu0 %v166, 32
  %v492 = vpop.permute.xlu0 %491
  %493 = vrot.lane.b32.xlu0 %v171, 32
  %v494 = vpop.permute.xlu0 %493
  %495 = vrot.lane.b32.xlu0 %v176, 32
  %v496 = vpop.permute.xlu0 %495
  %497 = vrot.lane.b32.xlu0 %v181, 32
  %v498 = vpop.permute.xlu0 %497
  %499 = vrot.lane.b32.xlu0 %v186, 32
  %v500 = vpop.permute.xlu0 %499
  %501 = vrot.lane.b32.xlu0 %v191, 32
  %v502 = vpop.permute.xlu0 %501
  %503 = vrot.lane.b32.xlu0 %v196, 32
  %v504 = vpop.permute.xlu0 %503
  %v513 = vmul.f32 %v473, %v490
  %v514 = vmul.f32 %v474, %v492
  %v515 = vmul.f32 %v475, %v494
  %v516 = vmul.f32 %v476, %v496
  %v517 = vmul.f32 %v477, %v498
  %v518 = vmul.f32 %v478, %v500
  %v519 = vmul.f32 %v479, %v502
  %v520 = vmul.f32 %v480, %v504
  %529 = vrot.lane.b32.xlu0 %v513, 96
  %v530 = vpop.permute.xlu0 %529
  %531 = vrot.lane.b32.xlu0 %v514, 96
  %v532 = vpop.permute.xlu0 %531
  %533 = vrot.lane.b32.xlu0 %v515, 96
  %v534 = vpop.permute.xlu0 %533
  %535 = vrot.lane.b32.xlu0 %v516, 96
  %v536 = vpop.permute.xlu0 %535
  %537 = vrot.lane.b32.xlu0 %v517, 96
  %v538 = vpop.permute.xlu0 %537
  %539 = vrot.lane.b32.xlu0 %v518, 96
  %v540 = vpop.permute.xlu0 %539
  %541 = vrot.lane.b32.xlu0 %v519, 96
  %v542 = vpop.permute.xlu0 %541
  %543 = vrot.lane.b32.xlu0 %v520, 96
  %v544 = vpop.permute.xlu0 %543
  %553 = vst.msk [vmem:[#allocation3] sm:$0xff] %vm69, %v530
  %554 = vst.msk [vmem:[#allocation3 + $0x8] sm:$0xff] %vm69, %v532
  %555 = vst.msk [vmem:[#allocation3 + $0x10] sm:$0xff] %vm69, %v534
  %556 = vst.msk [vmem:[#allocation3 + $0x18] sm:$0xff] %vm69, %v536
  %557 = vst.msk [vmem:[#allocation3 + $0x20] sm:$0xff] %vm69, %v538
  %558 = vst.msk [vmem:[#allocation3 + $0x28] sm:$0xff] %vm69, %v540
  %559 = vst.msk [vmem:[#allocation3 + $0x30] sm:$0xff] %vm69, %v542
  %560 = vst.msk [vmem:[#allocation3 + $0x38] sm:$0xff] %vm69, %v544
  %v561 = vmul.f32 %v332, %v314
  %v562 = vmul.f32 %v337, %v316
  %v563 = vmul.f32 %v342, %v318
  %v564 = vmul.f32 %v347, %v320
  %v565 = vmul.f32 %v352, %v322
  %v566 = vmul.f32 %v357, %v324
  %v567 = vmul.f32 %v362, %v326
  %v568 = vmul.f32 %v367, %v328
  %577 = vrot.lane.b32.xlu0 %v561, 64
  %v578 = vpop.permute.xlu0 %577
  %579 = vrot.lane.b32.xlu0 %v562, 64
  %v580 = vpop.permute.xlu0 %579
  %581 = vrot.lane.b32.xlu0 %v563, 64
  %v582 = vpop.permute.xlu0 %581
  %583 = vrot.lane.b32.xlu0 %v564, 64
  %v584 = vpop.permute.xlu0 %583
  %585 = vrot.lane.b32.xlu0 %v565, 64
  %v586 = vpop.permute.xlu0 %585
  %587 = vrot.lane.b32.xlu0 %v566, 64
  %v588 = vpop.permute.xlu0 %587
  %589 = vrot.lane.b32.xlu0 %v567, 64
  %v590 = vpop.permute.xlu0 %589
  %591 = vrot.lane.b32.xlu0 %v568, 64
  %v592 = vpop.permute.xlu0 %591
  %601 = vst.msk [vmem:[#allocation4] sm:$0xff] %vm69, %v578
  %602 = vst.msk [vmem:[#allocation4 + $0x8] sm:$0xff] %vm69, %v580
  %603 = vst.msk [vmem:[#allocation4 + $0x10] sm:$0xff] %vm69, %v582
  %604 = vst.msk [vmem:[#allocation4 + $0x18] sm:$0xff] %vm69, %v584
  %605 = vst.msk [vmem:[#allocation4 + $0x20] sm:$0xff] %vm69, %v586
  %606 = vst.msk [vmem:[#allocation4 + $0x28] sm:$0xff] %vm69, %v588
  %607 = vst.msk [vmem:[#allocation4 + $0x30] sm:$0xff] %vm69, %v590
  %608 = vst.msk [vmem:[#allocation4 + $0x38] sm:$0xff] %vm69, %v592
  %v609 = vsub.f32 1.0, %v314
  %v610 = vsub.f32 1.0, %v316
  %v611 = vsub.f32 1.0, %v318
  %v612 = vsub.f32 1.0, %v320
  %v613 = vsub.f32 1.0, %v322
  %v614 = vsub.f32 1.0, %v324
  %v615 = vsub.f32 1.0, %v326
  %v616 = vsub.f32 1.0, %v328
  %v617 = vmul.f32 %v332, %v609
  %v618 = vmul.f32 %v337, %v610
  %v619 = vmul.f32 %v342, %v611
  %v620 = vmul.f32 %v347, %v612
  %v621 = vmul.f32 %v352, %v613
  %v622 = vmul.f32 %v357, %v614
  %v623 = vmul.f32 %v362, %v615
  %v624 = vmul.f32 %v367, %v616
  %625 = vrot.lane.b32.xlu0 %v161, 96
  %v626 = vpop.permute.xlu0 %625
  %627 = vrot.lane.b32.xlu0 %v166, 96
  %v628 = vpop.permute.xlu0 %627
  %629 = vrot.lane.b32.xlu0 %v171, 96
  %v630 = vpop.permute.xlu0 %629
  %631 = vrot.lane.b32.xlu0 %v176, 96
  %v632 = vpop.permute.xlu0 %631
  %633 = vrot.lane.b32.xlu0 %v181, 96
  %v634 = vpop.permute.xlu0 %633
  %635 = vrot.lane.b32.xlu0 %v186, 96
  %v636 = vpop.permute.xlu0 %635
  %637 = vrot.lane.b32.xlu0 %v191, 96
  %v638 = vpop.permute.xlu0 %637
  %639 = vrot.lane.b32.xlu0 %v196, 96
  %v640 = vpop.permute.xlu0 %639
  %v649 = vmul.f32 %v617, %v626
  %v650 = vmul.f32 %v618, %v628
  %v651 = vmul.f32 %v619, %v630
  %v652 = vmul.f32 %v620, %v632
  %v653 = vmul.f32 %v621, %v634
  %v654 = vmul.f32 %v622, %v636
  %v655 = vmul.f32 %v623, %v638
  %v656 = vmul.f32 %v624, %v640
  %665 = vrot.lane.b32.xlu0 %v649, 64
  %v666 = vpop.permute.xlu0 %665
  %667 = vrot.lane.b32.xlu0 %v650, 64
  %v668 = vpop.permute.xlu0 %667
  %669 = vrot.lane.b32.xlu0 %v651, 64
  %v670 = vpop.permute.xlu0 %669
  %671 = vrot.lane.b32.xlu0 %v652, 64
  %v672 = vpop.permute.xlu0 %671
  %673 = vrot.lane.b32.xlu0 %v653, 64
  %v674 = vpop.permute.xlu0 %673
  %675 = vrot.lane.b32.xlu0 %v654, 64
  %v676 = vpop.permute.xlu0 %675
  %677 = vrot.lane.b32.xlu0 %v655, 64
  %v678 = vpop.permute.xlu0 %677
  %679 = vrot.lane.b32.xlu0 %v656, 64
  %v680 = vpop.permute.xlu0 %679
  %689 = vst.msk [vmem:[#allocation5] sm:$0xff] %vm69, %v666
  %690 = vst.msk [vmem:[#allocation5 + $0x8] sm:$0xff] %vm69, %v668
  %691 = vst.msk [vmem:[#allocation5 + $0x10] sm:$0xff] %vm69, %v670
  %692 = vst.msk [vmem:[#allocation5 + $0x18] sm:$0xff] %vm69, %v672
  %693 = vst.msk [vmem:[#allocation5 + $0x20] sm:$0xff] %vm69, %v674
  %694 = vst.msk [vmem:[#allocation5 + $0x28] sm:$0xff] %vm69, %v676
  %695 = vst.msk [vmem:[#allocation5 + $0x30] sm:$0xff] %vm69, %v678
  %696 = vst.msk [vmem:[#allocation5 + $0x38] sm:$0xff] %vm69, %v680
  %v697 = vld [vmem:[%s5] sm:$0xff]
  %v698 = vld [vmem:[%s5 + $0x8] sm:$0xff]
  %v699 = vld [vmem:[%s5 + $0x10] sm:$0xff]
  %v700 = vld [vmem:[%s5 + $0x18] sm:$0xff]
  %701 = vmatprep.subr.mxu0 0.0
  %702 = vmatpush1.msra.mxu0 0.0
  %703 = vmatprep.subr.mxu0 0.0
  %704 = vmatpush1.msra.mxu0 0.0
  %705 = vmatprep.subr.mxu0 0.0
  %706 = vmatpush1.msra.mxu0 0.0
  %707 = vmatprep.subr.mxu0 0.0
  %708 = vmatpush1.msra.mxu0 0.0
  %709 = vmatprep.subr.mxu0 0.0
  %710 = vmatpush1.msra.mxu0 0.0
  %711 = vmatprep.subr.mxu0 0.0
  %712 = vmatpush1.msra.mxu0 0.0
  %713 = vmatprep.subr.mxu0 0.0
  %714 = vmatpush1.msra.mxu0 0.0
  %715 = vmatprep.subr.mxu0 0.0
  %716 = vmatpush1.msra.mxu0 0.0
  %717 = vmatprep.subr.mxu0 0.0
  %718 = vmatpush1.msra.mxu0 0.0
  %719 = vmatprep.subr.mxu0 0.0
  %720 = vmatpush1.msra.mxu0 0.0
  %721 = vmatprep.subr.mxu0 0.0
  %722 = vmatpush1.msra.mxu0 0.0
  %723 = vmatprep.subr.mxu0 0.0
  %724 = vmatpush1.msra.mxu0 0.0
  %725 = vmatprep.subr.mxu0 0.0
  %726 = vmatpush1.msra.mxu0 %v700
  %727 = vmatprep.subr.mxu0 0.0
  %728 = vmatpush1.msra.mxu0 %v699
  %729 = vmatprep.subr.mxu0 0.0
  %730 = vmatpush1.msra.mxu0 %v698
  %731 = vmatprep.subr.mxu0 0.0
  %732 = vmatpush1.msra.mxu0 %v697
  %733 = vmatprep.subr.mxu0 0.0
  %734 = vmatpush2.msra.mxu0 0.0
  %735 = vmatprep.subr.mxu0 0.0
  %736 = vmatpush2.msra.mxu0 0.0
  %737 = vmatprep.subr.mxu0 0.0
  %738 = vmatpush2.msra.mxu0 0.0
  %739 = vmatprep.subr.mxu0 0.0
  %740 = vmatpush2.msra.mxu0 0.0
  %741 = vmatprep.subr.mxu0 0.0
  %742 = vmatpush2.msra.mxu0 0.0
  %743 = vmatprep.subr.mxu0 0.0
  %744 = vmatpush2.msra.mxu0 0.0
  %745 = vmatprep.subr.mxu0 0.0
  %746 = vmatpush2.msra.mxu0 0.0
  %747 = vmatprep.subr.mxu0 0.0
  %748 = vmatpush2.msra.mxu0 0.0
  %749 = vmatprep.subr.mxu0 0.0
  %750 = vmatpush2.msra.mxu0 0.0
  %751 = vmatprep.subr.mxu0 0.0
  %752 = vmatpush2.msra.mxu0 0.0
  %753 = vmatprep.subr.mxu0 0.0
  %754 = vmatpush2.msra.mxu0 0.0
  %755 = vmatprep.subr.mxu0 0.0
  %756 = vmatpush2.msra.mxu0 0.0
  %757 = vmatprep.subr.mxu0 0.0
  %758 = vmatpush2.msra.mxu0 0.0
  %759 = vmatprep.subr.mxu0 0.0
  %760 = vmatpush2.msra.mxu0 0.0
  %761 = vmatprep.subr.mxu0 0.0
  %762 = vmatpush2.msra.mxu0 0.0
  %763 = vmatprep.subr.mxu0 0.0
  %764 = vmatpush2.msra.mxu0 0.0
  %765 = vmatprep.mubr.f32.mxu0 0.0
  %766 = vmatmul.mubr.f32.gmra.mxu0 %v71
  %v767 = vpop.f32.mrf.mxu0
  %v768 = vadd.f32 0.0, %v767
  %v769 = vpop.f32.mrf.mxu0
  %770 = vmatprep.mubr.f32.mxu0 0.0
  %771 = vmatmul.mubr.f32.gmra.mxu0 %v74
  %v772 = vpop.f32.mrf.mxu0
  %v773 = vadd.f32 0.0, %v772
  %v774 = vpop.f32.mrf.mxu0
  %775 = vmatprep.mubr.f32.mxu0 0.0
  %776 = vmatmul.mubr.f32.gmra.mxu0 %v77
  %v777 = vpop.f32.mrf.mxu0
  %v778 = vadd.f32 0.0, %v777
  %v779 = vpop.f32.mrf.mxu0
  %780 = vmatprep.mubr.f32.mxu0 0.0
  %781 = vmatmul.mubr.f32.gmra.mxu0 %v80
  %v782 = vpop.f32.mrf.mxu0
  %v783 = vadd.f32 0.0, %v782
  %v784 = vpop.f32.mrf.mxu0
  %785 = vmatprep.mubr.f32.mxu0 0.0
  %786 = vmatmul.mubr.f32.gmra.mxu0 %v83
  %v787 = vpop.f32.mrf.mxu0
  %v788 = vadd.f32 0.0, %v787
  %v789 = vpop.f32.mrf.mxu0
  %790 = vmatprep.mubr.f32.mxu0 0.0
  %791 = vmatmul.mubr.f32.gmra.mxu0 %v86
  %v792 = vpop.f32.mrf.mxu0
  %v793 = vadd.f32 0.0, %v792
  %v794 = vpop.f32.mrf.mxu0
  %795 = vmatprep.mubr.f32.mxu0 0.0
  %796 = vmatmul.mubr.f32.gmra.mxu0 %v89
  %v797 = vpop.f32.mrf.mxu0
  %v798 = vadd.f32 0.0, %v797
  %v799 = vpop.f32.mrf.mxu0
  %800 = vmatprep.mubr.f32.mxu0 0.0
  %801 = vmatmul.mubr.f32.gmra.mxu0 %v92
  %v802 = vpop.f32.mrf.mxu0
  %v803 = vadd.f32 0.0, %v802
  %v804 = vpop.f32.mrf.mxu0
  %805 = vdwg.mxu0
  %v806 = vld [vmem:[%s6] sm:$0x1]
  %v807 = vlaneseq
  %v808 = vshrl.u32 %v807, 7
  %v809 = vsub.s32 0, %v808
  %v810 = vrot.slane %v806, %v809
  %812 = vrot.lane.b32.xlu0 %v810, 32
  %v813 = vpop.permute.xlu0 %812
  %v815 = vadd.f32 %v768, %v813
  %v816 = vadd.f32 %v773, %v813
  %v817 = vadd.f32 %v778, %v813
  %v818 = vadd.f32 %v783, %v813
  %v819 = vadd.f32 %v788, %v813
  %v820 = vadd.f32 %v793, %v813
  %v821 = vadd.f32 %v798, %v813
  %v822 = vadd.f32 %v803, %v813
  %v823 = vxor.u32 %v815, 2147483648
  %v824 = vxor.u32 %v816, 2147483648
  %v825 = vxor.u32 %v817, 2147483648
  %v826 = vxor.u32 %v818, 2147483648
  %v827 = vxor.u32 %v819, 2147483648
  %v828 = vxor.u32 %v820, 2147483648
  %v829 = vxor.u32 %v821, 2147483648
  %v830 = vxor.u32 %v822, 2147483648
  %v831 = vmul.f32 %v823, 1.442695
  %v832 = vpow.pop %v831
  %v833 = vmul.f32 %v824, 1.442695
  %v834 = vpow.pop %v833
  %v835 = vmul.f32 %v825, 1.442695
  %v836 = vpow.pop %v835
  %v837 = vmul.f32 %v826, 1.442695
  %v838 = vpow.pop %v837
  %v839 = vmul.f32 %v827, 1.442695
  %v840 = vpow.pop %v839
  %v841 = vmul.f32 %v828, 1.442695
  %v842 = vpow.pop %v841
  %v843 = vmul.f32 %v829, 1.442695
  %v844 = vpow.pop %v843
  %v845 = vmul.f32 %v830, 1.442695
  %v846 = vpow.pop %v845
  %v847 = vadd.f32 %v832, 1.0
  %v848 = vadd.f32 %v834, 1.0
  %v849 = vadd.f32 %v836, 1.0
  %v850 = vadd.f32 %v838, 1.0
  %v851 = vadd.f32 %v840, 1.0
  %v852 = vadd.f32 %v842, 1.0
  %v853 = vadd.f32 %v844, 1.0
  %v854 = vadd.f32 %v846, 1.0
  %v855 = vrcp.pop %v847
  %v856 = vmul.f32 1.0, %v855
  %v857 = vrcp.pop %v848
  %v858 = vmul.f32 1.0, %v857
  %v859 = vrcp.pop %v849
  %v860 = vmul.f32 1.0, %v859
  %v861 = vrcp.pop %v850
  %v862 = vmul.f32 1.0, %v861
  %v863 = vrcp.pop %v851
  %v864 = vmul.f32 1.0, %v863
  %v865 = vrcp.pop %v852
  %v866 = vmul.f32 1.0, %v865
  %v867 = vrcp.pop %v853
  %v868 = vmul.f32 1.0, %v867
  %v869 = vrcp.pop %v854
  %v870 = vmul.f32 1.0, %v869
  %v871 = vld [vmem:[%s6 + $0x1] sm:$0x1]
  %v872 = vlaneseq
  %v873 = vshrl.u32 %v872, 7
  %v874 = vsub.s32 0, %v873
  %v875 = vrot.slane %v871, %v874
  %877 = vrot.lane.b32.xlu0 %v875, 64
  %v878 = vpop.permute.xlu0 %877
  %v880 = vadd.f32 %v768, %v878
  %v881 = vadd.f32 %v773, %v878
  %v882 = vadd.f32 %v778, %v878
  %v883 = vadd.f32 %v783, %v878
  %v884 = vadd.f32 %v788, %v878
  %v885 = vadd.f32 %v793, %v878
  %v886 = vadd.f32 %v798, %v878
  %v887 = vadd.f32 %v803, %v878
  %v888 = vxor.u32 %v880, 2147483648
  %v889 = vxor.u32 %v881, 2147483648
  %v890 = vxor.u32 %v882, 2147483648
  %v891 = vxor.u32 %v883, 2147483648
  %v892 = vxor.u32 %v884, 2147483648
  %v893 = vxor.u32 %v885, 2147483648
  %v894 = vxor.u32 %v886, 2147483648
  %v895 = vxor.u32 %v887, 2147483648
  %v896 = vmul.f32 %v888, 1.442695
  %v897 = vpow.pop %v896
  %v898 = vmul.f32 %v889, 1.442695
  %v899 = vpow.pop %v898
  %v900 = vmul.f32 %v890, 1.442695
  %v901 = vpow.pop %v900
  %v902 = vmul.f32 %v891, 1.442695
  %v903 = vpow.pop %v902
  %v904 = vmul.f32 %v892, 1.442695
  %v905 = vpow.pop %v904
  %v906 = vmul.f32 %v893, 1.442695
  %v907 = vpow.pop %v906
  %v908 = vmul.f32 %v894, 1.442695
  %v909 = vpow.pop %v908
  %v910 = vmul.f32 %v895, 1.442695
  %v911 = vpow.pop %v910
  %v912 = vadd.f32 %v897, 1.0
  %v913 = vadd.f32 %v899, 1.0
  %v914 = vadd.f32 %v901, 1.0
  %v915 = vadd.f32 %v903, 1.0
  %v916 = vadd.f32 %v905, 1.0
  %v917 = vadd.f32 %v907, 1.0
  %v918 = vadd.f32 %v909, 1.0
  %v919 = vadd.f32 %v911, 1.0
  %v920 = vrcp.pop %v912
  %v921 = vmul.f32 1.0, %v920
  %v922 = vrcp.pop %v913
  %v923 = vmul.f32 1.0, %v922
  %v924 = vrcp.pop %v914
  %v925 = vmul.f32 1.0, %v924
  %v926 = vrcp.pop %v915
  %v927 = vmul.f32 1.0, %v926
  %v928 = vrcp.pop %v916
  %v929 = vmul.f32 1.0, %v928
  %v930 = vrcp.pop %v917
  %v931 = vmul.f32 1.0, %v930
  %v932 = vrcp.pop %v918
  %v933 = vmul.f32 1.0, %v932
  %v934 = vrcp.pop %v919
  %v935 = vmul.f32 1.0, %v934
  %v936 = vmul.f32 %v856, %v332
  %v937 = vmul.f32 %v858, %v337
  %v938 = vmul.f32 %v860, %v342
  %v939 = vmul.f32 %v862, %v347
  %v940 = vmul.f32 %v864, %v352
  %v941 = vmul.f32 %v866, %v357
  %v942 = vmul.f32 %v868, %v362
  %v943 = vmul.f32 %v870, %v367
  %v944 = vadd.f32 %v936, %v380
  %v945 = vadd.f32 %v937, %v385
  %v946 = vadd.f32 %v938, %v390
  %v947 = vadd.f32 %v939, %v395
  %v948 = vadd.f32 %v940, %v400
  %v949 = vadd.f32 %v941, %v405
  %v950 = vadd.f32 %v942, %v410
  %v951 = vadd.f32 %v943, %v415
  %960 = vrot.lane.b32.xlu0 %v944, 96
  %v961 = vpop.permute.xlu0 %960
  %962 = vrot.lane.b32.xlu0 %v945, 96
  %v963 = vpop.permute.xlu0 %962
  %964 = vrot.lane.b32.xlu0 %v946, 96
  %v965 = vpop.permute.xlu0 %964
  %966 = vrot.lane.b32.xlu0 %v947, 96
  %v967 = vpop.permute.xlu0 %966
  %968 = vrot.lane.b32.xlu0 %v948, 96
  %v969 = vpop.permute.xlu0 %968
  %970 = vrot.lane.b32.xlu0 %v949, 96
  %v971 = vpop.permute.xlu0 %970
  %972 = vrot.lane.b32.xlu0 %v950, 96
  %v973 = vpop.permute.xlu0 %972
  %974 = vrot.lane.b32.xlu0 %v951, 96
  %v975 = vpop.permute.xlu0 %974
  %984 = vst.msk [vmem:[#allocation2 + $0x40] sm:$0xff] %vm69, %v961
  %985 = vst.msk [vmem:[#allocation2 + $0x48] sm:$0xff] %vm69, %v963
  %986 = vst.msk [vmem:[#allocation2 + $0x50] sm:$0xff] %vm69, %v965
  %987 = vst.msk [vmem:[#allocation2 + $0x58] sm:$0xff] %vm69, %v967
  %988 = vst.msk [vmem:[#allocation2 + $0x60] sm:$0xff] %vm69, %v969
  %989 = vst.msk [vmem:[#allocation2 + $0x68] sm:$0xff] %vm69, %v971
  %990 = vst.msk [vmem:[#allocation2 + $0x70] sm:$0xff] %vm69, %v973
  %991 = vst.msk [vmem:[#allocation2 + $0x78] sm:$0xff] %vm69, %v975
  %v992 = vsub.f32 1.0, %v856
  %v993 = vsub.f32 1.0, %v858
  %v994 = vsub.f32 1.0, %v860
  %v995 = vsub.f32 1.0, %v862
  %v996 = vsub.f32 1.0, %v864
  %v997 = vsub.f32 1.0, %v866
  %v998 = vsub.f32 1.0, %v868
  %v999 = vsub.f32 1.0, %v870
  %v1000 = vmul.f32 %v332, %v992
  %v1001 = vmul.f32 %v337, %v993
  %v1002 = vmul.f32 %v342, %v994
  %v1003 = vmul.f32 %v347, %v995
  %v1004 = vmul.f32 %v352, %v996
  %v1005 = vmul.f32 %v357, %v997
  %v1006 = vmul.f32 %v362, %v998
  %v1007 = vmul.f32 %v367, %v999
  %1016 = vrot.lane.b32.xlu0 %v768, 32
  %v1017 = vpop.permute.xlu0 %1016
  %1018 = vrot.lane.b32.xlu0 %v773, 32
  %v1019 = vpop.permute.xlu0 %1018
  %1020 = vrot.lane.b32.xlu0 %v778, 32
  %v1021 = vpop.permute.xlu0 %1020
  %1022 = vrot.lane.b32.xlu0 %v783, 32
  %v1023 = vpop.permute.xlu0 %1022
  %1024 = vrot.lane.b32.xlu0 %v788, 32
  %v1025 = vpop.permute.xlu0 %1024
  %1026 = vrot.lane.b32.xlu0 %v793, 32
  %v1027 = vpop.permute.xlu0 %1026
  %1028 = vrot.lane.b32.xlu0 %v798, 32
  %v1029 = vpop.permute.xlu0 %1028
  %1030 = vrot.lane.b32.xlu0 %v803, 32
  %v1031 = vpop.permute.xlu0 %1030
  %v1040 = vmul.f32 %v1000, %v1017
  %v1041 = vmul.f32 %v1001, %v1019
  %v1042 = vmul.f32 %v1002, %v1021
  %v1043 = vmul.f32 %v1003, %v1023
  %v1044 = vmul.f32 %v1004, %v1025
  %v1045 = vmul.f32 %v1005, %v1027
  %v1046 = vmul.f32 %v1006, %v1029
  %v1047 = vmul.f32 %v1007, %v1031
  %1056 = vrot.lane.b32.xlu0 %v1040, 96
  %v1057 = vpop.permute.xlu0 %1056
  %1058 = vrot.lane.b32.xlu0 %v1041, 96
  %v1059 = vpop.permute.xlu0 %1058
  %1060 = vrot.lane.b32.xlu0 %v1042, 96
  %v1061 = vpop.permute.xlu0 %1060
  %1062 = vrot.lane.b32.xlu0 %v1043, 96
  %v1063 = vpop.permute.xlu0 %1062
  %1064 = vrot.lane.b32.xlu0 %v1044, 96
  %v1065 = vpop.permute.xlu0 %1064
  %1066 = vrot.lane.b32.xlu0 %v1045, 96
  %v1067 = vpop.permute.xlu0 %1066
  %1068 = vrot.lane.b32.xlu0 %v1046, 96
  %v1069 = vpop.permute.xlu0 %1068
  %1070 = vrot.lane.b32.xlu0 %v1047, 96
  %v1071 = vpop.permute.xlu0 %1070
  %1080 = vst.msk [vmem:[#allocation3 + $0x40] sm:$0xff] %vm69, %v1057
  %1081 = vst.msk [vmem:[#allocation3 + $0x48] sm:$0xff] %vm69, %v1059
  %1082 = vst.msk [vmem:[#allocation3 + $0x50] sm:$0xff] %vm69, %v1061
  %1083 = vst.msk [vmem:[#allocation3 + $0x58] sm:$0xff] %vm69, %v1063
  %1084 = vst.msk [vmem:[#allocation3 + $0x60] sm:$0xff] %vm69, %v1065
  %1085 = vst.msk [vmem:[#allocation3 + $0x68] sm:$0xff] %vm69, %v1067
  %1086 = vst.msk [vmem:[#allocation3 + $0x70] sm:$0xff] %vm69, %v1069
  %1087 = vst.msk [vmem:[#allocation3 + $0x78] sm:$0xff] %vm69, %v1071
  %v1088 = vmul.f32 %v332, %v921
  %v1089 = vmul.f32 %v337, %v923
  %v1090 = vmul.f32 %v342, %v925
  %v1091 = vmul.f32 %v347, %v927
  %v1092 = vmul.f32 %v352, %v929
  %v1093 = vmul.f32 %v357, %v931
  %v1094 = vmul.f32 %v362, %v933
  %v1095 = vmul.f32 %v367, %v935
  %1104 = vrot.lane.b32.xlu0 %v1088, 64
  %v1105 = vpop.permute.xlu0 %1104
  %1106 = vrot.lane.b32.xlu0 %v1089, 64
  %v1107 = vpop.permute.xlu0 %1106
  %1108 = vrot.lane.b32.xlu0 %v1090, 64
  %v1109 = vpop.permute.xlu0 %1108
  %1110 = vrot.lane.b32.xlu0 %v1091, 64
  %v1111 = vpop.permute.xlu0 %1110
  %1112 = vrot.lane.b32.xlu0 %v1092, 64
  %v1113 = vpop.permute.xlu0 %1112
  %1114 = vrot.lane.b32.xlu0 %v1093, 64
  %v1115 = vpop.permute.xlu0 %1114
  %1116 = vrot.lane.b32.xlu0 %v1094, 64
  %v1117 = vpop.permute.xlu0 %1116
  %1118 = vrot.lane.b32.xlu0 %v1095, 64
  %v1119 = vpop.permute.xlu0 %1118
  %1128 = vst.msk [vmem:[#allocation4 + $0x40] sm:$0xff] %vm69, %v1105
  %1129 = vst.msk [vmem:[#allocation4 + $0x48] sm:$0xff] %vm69, %v1107
  %1130 = vst.msk [vmem:[#allocation4 + $0x50] sm:$0xff] %vm69, %v1109
  %1131 = vst.msk [vmem:[#allocation4 + $0x58] sm:$0xff] %vm69, %v1111
  %1132 = vst.msk [vmem:[#allocation4 + $0x60] sm:$0xff] %vm69, %v1113
  %1133 = vst.msk [vmem:[#allocation4 + $0x68] sm:$0xff] %vm69, %v1115
  %1134 = vst.msk [vmem:[#allocation4 + $0x70] sm:$0xff] %vm69, %v1117
  %1135 = vst.msk [vmem:[#allocation4 + $0x78] sm:$0xff] %vm69, %v1119
  %v1136 = vsub.f32 1.0, %v921
  %v1137 = vsub.f32 1.0, %v923
  %v1138 = vsub.f32 1.0, %v925
  %v1139 = vsub.f32 1.0, %v927
  %v1140 = vsub.f32 1.0, %v929
  %v1141 = vsub.f32 1.0, %v931
  %v1142 = vsub.f32 1.0, %v933
  %v1143 = vsub.f32 1.0, %v935
  %v1144 = vmul.f32 %v332, %v1136
  %v1145 = vmul.f32 %v337, %v1137
  %v1146 = vmul.f32 %v342, %v1138
  %v1147 = vmul.f32 %v347, %v1139
  %v1148 = vmul.f32 %v352, %v1140
  %v1149 = vmul.f32 %v357, %v1141
  %v1150 = vmul.f32 %v362, %v1142
  %v1151 = vmul.f32 %v367, %v1143
  %1152 = vrot.lane.b32.xlu0 %v768, 96
  %v1153 = vpop.permute.xlu0 %1152
  %1154 = vrot.lane.b32.xlu0 %v773, 96
  %v1155 = vpop.permute.xlu0 %1154
  %1156 = vrot.lane.b32.xlu0 %v778, 96
  %v1157 = vpop.permute.xlu0 %1156
  %1158 = vrot.lane.b32.xlu0 %v783, 96
  %v1159 = vpop.permute.xlu0 %1158
  %1160 = vrot.lane.b32.xlu0 %v788, 96
  %v1161 = vpop.permute.xlu0 %1160
  %1162 = vrot.lane.b32.xlu0 %v793, 96
  %v1163 = vpop.permute.xlu0 %1162
  %1164 = vrot.lane.b32.xlu0 %v798, 96
  %v1165 = vpop.permute.xlu0 %1164
  %1166 = vrot.lane.b32.xlu0 %v803, 96
  %v1167 = vpop.permute.xlu0 %1166
  %v1176 = vmul.f32 %v1144, %v1153
  %v1177 = vmul.f32 %v1145, %v1155
  %v1178 = vmul.f32 %v1146, %v1157
  %v1179 = vmul.f32 %v1147, %v1159
  %v1180 = vmul.f32 %v1148, %v1161
  %v1181 = vmul.f32 %v1149, %v1163
  %v1182 = vmul.f32 %v1150, %v1165
  %v1183 = vmul.f32 %v1151, %v1167
  %1192 = vrot.lane.b32.xlu0 %v1176, 64
  %v1193 = vpop.permute.xlu0 %1192
  %1194 = vrot.lane.b32.xlu0 %v1177, 64
  %v1195 = vpop.permute.xlu0 %1194
  %1196 = vrot.lane.b32.xlu0 %v1178, 64
  %v1197 = vpop.permute.xlu0 %1196
  %1198 = vrot.lane.b32.xlu0 %v1179, 64
  %v1199 = vpop.permute.xlu0 %1198
  %1200 = vrot.lane.b32.xlu0 %v1180, 64
  %v1201 = vpop.permute.xlu0 %1200
  %1202 = vrot.lane.b32.xlu0 %v1181, 64
  %v1203 = vpop.permute.xlu0 %1202
  %1204 = vrot.lane.b32.xlu0 %v1182, 64
  %v1205 = vpop.permute.xlu0 %1204
  %1206 = vrot.lane.b32.xlu0 %v1183, 64
  %v1207 = vpop.permute.xlu0 %1206
  %1216 = vst.msk [vmem:[#allocation5 + $0x40] sm:$0xff] %vm69, %v1193
  %1217 = vst.msk [vmem:[#allocation5 + $0x48] sm:$0xff] %vm69, %v1195
  %1218 = vst.msk [vmem:[#allocation5 + $0x50] sm:$0xff] %vm69, %v1197
  %1219 = vst.msk [vmem:[#allocation5 + $0x58] sm:$0xff] %vm69, %v1199
  %1220 = vst.msk [vmem:[#allocation5 + $0x60] sm:$0xff] %vm69, %v1201
  %1221 = vst.msk [vmem:[#allocation5 + $0x68] sm:$0xff] %vm69, %v1203
  %1222 = vst.msk [vmem:[#allocation5 + $0x70] sm:$0xff] %vm69, %v1205
  %1223 = vst.msk [vmem:[#allocation5 + $0x78] sm:$0xff] %vm69, %v1207
  %v1224 = vld [vmem:[%s1] sm:$0xff]
  %v1225 = vld [vmem:[#allocation2] sm:$0xff]
  %v1226 = vmul.f32 %v1225, %v1224
  %v1227 = vld [vmem:[#allocation3] sm:$0xff]
  %v1228 = vadd.f32 %v1226, %v1227
  %s1229 = scalar_lea.vmem [#allocation2], 120
  %v1230 = vld [vmem:[%s1229] sm:$0xff]
  %1232 = vrot.lane.b32.xlu0 %v1224, 96
  %v1233 = vpop.permute.xlu0 %1232
  %v1235 = vmul.f32 %v1230, %v1233
  %s1236 = scalar_lea.vmem [#allocation3], 120
  %v1237 = vld [vmem:[%s1236] sm:$0xff]
  %v1238 = vadd.f32 %v1235, %v1237
  %v1239 = vld [vmem:[#allocation4] sm:$0xff]
  %v1240 = vtanh.pop %v1228
  %v1241 = vmul.f32 %v1239, %v1240
  %v1242 = vld [vmem:[#allocation5] sm:$0xff]
  %v1243 = vadd.f32 %v1241, %v1242
  %s1244 = scalar_lea.vmem [#allocation4], 120
  %v1245 = vld [vmem:[%s1244] sm:$0xff]
  %v1246 = vtanh.pop %v1238
  %v1247 = vmul.f32 %v1245, %v1246
  %s1248 = scalar_lea.vmem [#allocation5], 120
  %v1249 = vld [vmem:[%s1248] sm:$0xff]
  %v1250 = vadd.f32 %v1247, %v1249
  %1251 = vst.msk [vmem:[%s11] sm:$0xff] %vm69, %v1243
  %s1252 = scalar_lea.vmem %s12, 56
  %1253 = vst.msk [vmem:[%s1252] sm:$0xff] %vm69, %v1250
  %s1254 = scalar_lea.vmem [#allocation2], 8
  %v1255 = vld [vmem:[%s1254] sm:$0xff]
  %v1256 = vmul.f32 %v1255, %v1228
  %s1257 = scalar_lea.vmem [#allocation3], 8
  %v1258 = vld [vmem:[%s1257] sm:$0xff]
  %v1259 = vadd.f32 %v1256, %v1258
  %s1260 = scalar_lea.vmem [#allocation2], 112
  %v1261 = vld [vmem:[%s1260] sm:$0xff]
  %v1262 = vmul.f32 %v1261, %v1238
  %s1263 = scalar_lea.vmem [#allocation3], 112
  %v1264 = vld [vmem:[%s1263] sm:$0xff]
  %v1265 = vadd.f32 %v1262, %v1264
  %s1266 = scalar_lea.vmem [#allocation4], 8
  %v1267 = vld [vmem:[%s1266] sm:$0xff]
  %v1268 = vtanh.pop %v1259
  %v1269 = vmul.f32 %v1267, %v1268
  %s1270 = scalar_lea.vmem [#allocation5], 8
  %v1271 = vld [vmem:[%s1270] sm:$0xff]
  %v1272 = vadd.f32 %v1269, %v1271
  %s1273 = scalar_lea.vmem [#allocation4], 112
  %v1274 = vld [vmem:[%s1273] sm:$0xff]
  %v1275 = vtanh.pop %v1265
  %v1276 = vmul.f32 %v1274, %v1275
  %s1277 = scalar_lea.vmem [#allocation5], 112
  %v1278 = vld [vmem:[%s1277] sm:$0xff]
  %v1279 = vadd.f32 %v1276, %v1278
  %s1280 = scalar_lea.vmem %s11, 8
  %1281 = vst.msk [vmem:[%s1280] sm:$0xff] %vm69, %v1272
  %s1282 = scalar_lea.vmem %s12, 48
  %1283 = vst.msk [vmem:[%s1282] sm:$0xff] %vm69, %v1279
  %s1284 = scalar_lea.vmem [#allocation2], 16
  %v1285 = vld [vmem:[%s1284] sm:$0xff]
  %v1286 = vmul.f32 %v1285, %v1259
  %s1287 = scalar_lea.vmem [#allocation3], 16
  %v1288 = vld [vmem:[%s1287] sm:$0xff]
  %v1289 = vadd.f32 %v1286, %v1288
  %s1290 = scalar_lea.vmem [#allocation2], 104
  %v1291 = vld [vmem:[%s1290] sm:$0xff]
  %v1292 = vmul.f32 %v1291, %v1265
  %s1293 = scalar_lea.vmem [#allocation3], 104
  %v1294 = vld [vmem:[%s1293] sm:$0xff]
  %v1295 = vadd.f32 %v1292, %v1294
  %s1296 = scalar_lea.vmem [#allocation4], 16
  %v1297 = vld [vmem:[%s1296] sm:$0xff]
  %v1298 = vtanh.pop %v1289
  %v1299 = vmul.f32 %v1297, %v1298
  %s1300 = scalar_lea.vmem [#allocation5], 16
  %v1301 = vld [vmem:[%s1300] sm:$0xff]
  %v1302 = vadd.f32 %v1299, %v1301
  %s1303 = scalar_lea.vmem [#allocation4], 104
  %v1304 = vld [vmem:[%s1303] sm:$0xff]
  %v1305 = vtanh.pop %v1295
  %v1306 = vmul.f32 %v1304, %v1305
  %s1307 = scalar_lea.vmem [#allocation5], 104
  %v1308 = vld [vmem:[%s1307] sm:$0xff]
  %v1309 = vadd.f32 %v1306, %v1308
  %s1310 = scalar_lea.vmem %s11, 16
  %1311 = vst.msk [vmem:[%s1310] sm:$0xff] %vm69, %v1302
  %s1312 = scalar_lea.vmem %s12, 40
  %1313 = vst.msk [vmem:[%s1312] sm:$0xff] %vm69, %v1309
  %s1314 = scalar_lea.vmem [#allocation2], 24
  %v1315 = vld [vmem:[%s1314] sm:$0xff]
  %v1316 = vmul.f32 %v1315, %v1289
  %s1317 = scalar_lea.vmem [#allocation3], 24
  %v1318 = vld [vmem:[%s1317] sm:$0xff]
  %v1319 = vadd.f32 %v1316, %v1318
  %s1320 = scalar_lea.vmem [#allocation2], 96
  %v1321 = vld [vmem:[%s1320] sm:$0xff]
  %v1322 = vmul.f32 %v1321, %v1295
  %s1323 = scalar_lea.vmem [#allocation3], 96
  %v1324 = vld [vmem:[%s1323] sm:$0xff]
  %v1325 = vadd.f32 %v1322, %v1324
  %s1326 = scalar_lea.vmem [#allocation4], 24
  %v1327 = vld [vmem:[%s1326] sm:$0xff]
  %v1328 = vtanh.pop %v1319
  %v1329 = vmul.f32 %v1327, %v1328
  %s1330 = scalar_lea.vmem [#allocation5], 24
  %v1331 = vld [vmem:[%s1330] sm:$0xff]
  %v1332 = vadd.f32 %v1329, %v1331
  %s1333 = scalar_lea.vmem [#allocation4], 96
  %v1334 = vld [vmem:[%s1333] sm:$0xff]
  %v1335 = vtanh.pop %v1325
  %v1336 = vmul.f32 %v1334, %v1335
  %s1337 = scalar_lea.vmem [#allocation5], 96
  %v1338 = vld [vmem:[%s1337] sm:$0xff]
  %v1339 = vadd.f32 %v1336, %v1338
  %s1340 = scalar_lea.vmem %s11, 24
  %1341 = vst.msk [vmem:[%s1340] sm:$0xff] %vm69, %v1332
  %s1342 = scalar_lea.vmem %s12, 32
  %1343 = vst.msk [vmem:[%s1342] sm:$0xff] %vm69, %v1339
  %s1344 = scalar_lea.vmem [#allocation2], 32
  %v1345 = vld [vmem:[%s1344] sm:$0xff]
  %v1346 = vmul.f32 %v1345, %v1319
  %s1347 = scalar_lea.vmem [#allocation3], 32
  %v1348 = vld [vmem:[%s1347] sm:$0xff]
  %v1349 = vadd.f32 %v1346, %v1348
  %s1350 = scalar_lea.vmem [#allocation2], 88
  %v1351 = vld [vmem:[%s1350] sm:$0xff]
  %v1352 = vmul.f32 %v1351, %v1325
  %s1353 = scalar_lea.vmem [#allocation3], 88
  %v1354 = vld [vmem:[%s1353] sm:$0xff]
  %v1355 = vadd.f32 %v1352, %v1354
  %s1356 = scalar_lea.vmem [#allocation4], 32
  %v1357 = vld [vmem:[%s1356] sm:$0xff]
  %v1358 = vtanh.pop %v1349
  %v1359 = vmul.f32 %v1357, %v1358
  %s1360 = scalar_lea.vmem [#allocation5], 32
  %v1361 = vld [vmem:[%s1360] sm:$0xff]
  %v1362 = vadd.f32 %v1359, %v1361
  %s1363 = scalar_lea.vmem [#allocation4], 88
  %v1364 = vld [vmem:[%s1363] sm:$0xff]
  %v1365 = vtanh.pop %v1355
  %v1366 = vmul.f32 %v1364, %v1365
  %s1367 = scalar_lea.vmem [#allocation5], 88
  %v1368 = vld [vmem:[%s1367] sm:$0xff]
  %v1369 = vadd.f32 %v1366, %v1368
  %s1370 = scalar_lea.vmem %s11, 32
  %1371 = vst.msk [vmem:[%s1370] sm:$0xff] %vm69, %v1362
  %s1372 = scalar_lea.vmem %s12, 24
  %1373 = vst.msk [vmem:[%s1372] sm:$0xff] %vm69, %v1369
  %s1374 = scalar_lea.vmem [#allocation2], 40
  %v1375 = vld [vmem:[%s1374] sm:$0xff]
  %v1376 = vmul.f32 %v1375, %v1349
  %s1377 = scalar_lea.vmem [#allocation3], 40
  %v1378 = vld [vmem:[%s1377] sm:$0xff]
  %v1379 = vadd.f32 %v1376, %v1378
  %s1380 = scalar_lea.vmem [#allocation2], 80
  %v1381 = vld [vmem:[%s1380] sm:$0xff]
  %v1382 = vmul.f32 %v1381, %v1355
  %s1383 = scalar_lea.vmem [#allocation3], 80
  %v1384 = vld [vmem:[%s1383] sm:$0xff]
  %v1385 = vadd.f32 %v1382, %v1384
  %s1386 = scalar_lea.vmem [#allocation4], 40
  %v1387 = vld [vmem:[%s1386] sm:$0xff]
  %v1388 = vtanh.pop %v1379
  %v1389 = vmul.f32 %v1387, %v1388
  %s1390 = scalar_lea.vmem [#allocation5], 40
  %v1391 = vld [vmem:[%s1390] sm:$0xff]
  %v1392 = vadd.f32 %v1389, %v1391
  %s1393 = scalar_lea.vmem [#allocation4], 80
  %v1394 = vld [vmem:[%s1393] sm:$0xff]
  %v1395 = vtanh.pop %v1385
  %v1396 = vmul.f32 %v1394, %v1395
  %s1397 = scalar_lea.vmem [#allocation5], 80
  %v1398 = vld [vmem:[%s1397] sm:$0xff]
  %v1399 = vadd.f32 %v1396, %v1398
  %s1400 = scalar_lea.vmem %s11, 40
  %1401 = vst.msk [vmem:[%s1400] sm:$0xff] %vm69, %v1392
  %s1402 = scalar_lea.vmem %s12, 16
  %1403 = vst.msk [vmem:[%s1402] sm:$0xff] %vm69, %v1399
  %s1404 = scalar_lea.vmem [#allocation2], 48
  %v1405 = vld [vmem:[%s1404] sm:$0xff]
  %v1406 = vmul.f32 %v1405, %v1379
  %s1407 = scalar_lea.vmem [#allocation3], 48
  %v1408 = vld [vmem:[%s1407] sm:$0xff]
  %v1409 = vadd.f32 %v1406, %v1408
  %s1410 = scalar_lea.vmem [#allocation2], 72
  %v1411 = vld [vmem:[%s1410] sm:$0xff]
  %v1412 = vmul.f32 %v1411, %v1385
  %s1413 = scalar_lea.vmem [#allocation3], 72
  %v1414 = vld [vmem:[%s1413] sm:$0xff]
  %v1415 = vadd.f32 %v1412, %v1414
  %s1416 = scalar_lea.vmem [#allocation4], 48
  %v1417 = vld [vmem:[%s1416] sm:$0xff]
  %v1418 = vtanh.pop %v1409
  %v1419 = vmul.f32 %v1417, %v1418
  %s1420 = scalar_lea.vmem [#allocation5], 48
  %v1421 = vld [vmem:[%s1420] sm:$0xff]
  %v1422 = vadd.f32 %v1419, %v1421
  %s1423 = scalar_lea.vmem [#allocation4], 72
  %v1424 = vld [vmem:[%s1423] sm:$0xff]
  %v1425 = vtanh.pop %v1415
  %v1426 = vmul.f32 %v1424, %v1425
  %s1427 = scalar_lea.vmem [#allocation5], 72
  %v1428 = vld [vmem:[%s1427] sm:$0xff]
  %v1429 = vadd.f32 %v1426, %v1428
  %s1430 = scalar_lea.vmem %s11, 48
  %1431 = vst.msk [vmem:[%s1430] sm:$0xff] %vm69, %v1422
  %s1432 = scalar_lea.vmem %s12, 8
  %1433 = vst.msk [vmem:[%s1432] sm:$0xff] %vm69, %v1429
  %s1434 = scalar_lea.vmem [#allocation2], 56
  %v1435 = vld [vmem:[%s1434] sm:$0xff]
  %v1436 = vmul.f32 %v1435, %v1409
  %s1437 = scalar_lea.vmem [#allocation3], 56
  %v1438 = vld [vmem:[%s1437] sm:$0xff]
  %v1439 = vadd.f32 %v1436, %v1438
  %s1440 = scalar_lea.vmem [#allocation2], 64
  %v1441 = vld [vmem:[%s1440] sm:$0xff]
  %v1442 = vmul.f32 %v1441, %v1415
  %s1443 = scalar_lea.vmem [#allocation3], 64
  %v1444 = vld [vmem:[%s1443] sm:$0xff]
  %v1445 = vadd.f32 %v1442, %v1444
  %s1446 = scalar_lea.vmem [#allocation4], 56
  %v1447 = vld [vmem:[%s1446] sm:$0xff]
  %v1448 = vtanh.pop %v1439
  %v1449 = vmul.f32 %v1447, %v1448
  %s1450 = scalar_lea.vmem [#allocation5], 56
  %v1451 = vld [vmem:[%s1450] sm:$0xff]
  %v1452 = vadd.f32 %v1449, %v1451
  %s1453 = scalar_lea.vmem [#allocation4], 64
  %v1454 = vld [vmem:[%s1453] sm:$0xff]
  %v1455 = vtanh.pop %v1445
  %v1456 = vmul.f32 %v1454, %v1455
  %s1457 = scalar_lea.vmem [#allocation5], 64
  %v1458 = vld [vmem:[%s1457] sm:$0xff]
  %v1459 = vadd.f32 %v1456, %v1458
  %s1460 = scalar_lea.vmem %s11, 56
  %1461 = vst.msk [vmem:[%s1460] sm:$0xff] %vm69, %v1452
  %1462 = vst.msk [vmem:[%s12] sm:$0xff] %vm69, %v1459
  %1463 = vst.msk [vmem:[%s13] sm:$0xff] %vm69, %v1439
  %1465 = vrot.lane.b32.xlu0 %v1445, 32
  %v1466 = vpop.permute.xlu0 %1465
  %vm1468 = vcmask 523520
  %1469 = vst.msk [vmem:[%s13] sm:$0xff] %vm1468, %v1466
  %v1470 = vld [vmem:[%s11] sm:$0xff]
  %v1471 = vld [vmem:[%s11 + $0x8] sm:$0xff]
  %v1472 = vld [vmem:[%s11 + $0x10] sm:$0xff]
  %v1473 = vld [vmem:[%s11 + $0x18] sm:$0xff]
  %v1474 = vld [vmem:[%s11 + $0x20] sm:$0xff]
  %v1475 = vld [vmem:[%s11 + $0x28] sm:$0xff]
  %v1476 = vld [vmem:[%s11 + $0x30] sm:$0xff]
  %v1477 = vld [vmem:[%s11 + $0x38] sm:$0xff]
  %v1478 = vld [vmem:[%s12] sm:$0xff]
  %v1479 = vld [vmem:[%s12 + $0x8] sm:$0xff]
  %v1480 = vld [vmem:[%s12 + $0x10] sm:$0xff]
  %v1481 = vld [vmem:[%s12 + $0x18] sm:$0xff]
  %v1482 = vld [vmem:[%s12 + $0x20] sm:$0xff]
  %v1483 = vld [vmem:[%s12 + $0x28] sm:$0xff]
  %v1484 = vld [vmem:[%s12 + $0x30] sm:$0xff]
  %v1485 = vld [vmem:[%s12 + $0x38] sm:$0xff]
  %v1486 = vld [vmem:[%s7] sm:$0xff]
  %v1487 = vld [vmem:[%s7 + $0x8] sm:$0xff]
  %v1488 = vld [vmem:[%s7 + $0x10] sm:$0xff]
  %v1489 = vld [vmem:[%s7 + $0x18] sm:$0xff]
  %v1490 = vld [vmem:[%s7 + $0x20] sm:$0xff]
  %v1491 = vld [vmem:[%s7 + $0x28] sm:$0xff]
  %v1492 = vld [vmem:[%s7 + $0x30] sm:$0xff]
  %v1493 = vld [vmem:[%s7 + $0x38] sm:$0xff]
  %v1495 = vsel %vm69, %v1478, 0
  %v1498 = vsel %vm69, %v1479, 0
  %v1501 = vsel %vm69, %v1480, 0
  %v1504 = vsel %vm69, %v1481, 0
  %v1507 = vsel %vm69, %v1482, 0
  %v1510 = vsel %vm69, %v1483, 0
  %v1513 = vsel %vm69, %v1484, 0
  %v1516 = vsel %vm69, %v1485, 0
  %1518 = vmatprep.subr.mxu0 0.0
  %1519 = vmatpush1.msra.mxu0 0.0
  %1520 = vmatprep.subr.mxu0 0.0
  %1521 = vmatpush1.msra.mxu0 0.0
  %1522 = vmatprep.subr.mxu0 0.0
  %1523 = vmatpush1.msra.mxu0 0.0
  %1524 = vmatprep.subr.mxu0 0.0
  %1525 = vmatpush1.msra.mxu0 0.0
  %1526 = vmatprep.subr.mxu0 0.0
  %1527 = vmatpush1.msra.mxu0 0.0
  %1528 = vmatprep.subr.mxu0 0.0
  %1529 = vmatpush1.msra.mxu0 0.0
  %1530 = vmatprep.subr.mxu0 0.0
  %1531 = vmatpush1.msra.mxu0 0.0
  %1532 = vmatprep.subr.mxu0 0.0
  %1533 = vmatpush1.msra.mxu0 0.0
  %1534 = vmatprep.subr.mxu0 0.0
  %1535 = vmatpush1.msra.mxu0 0.0
  %1536 = vmatprep.subr.mxu0 0.0
  %1537 = vmatpush1.msra.mxu0 0.0
  %1538 = vmatprep.subr.mxu0 0.0
  %1539 = vmatpush1.msra.mxu0 0.0
  %1540 = vmatprep.subr.mxu0 0.0
  %1541 = vmatpush1.msra.mxu0 0.0
  %1542 = vmatprep.subr.mxu0 0.0
  %1543 = vmatpush1.msra.mxu0 %v1493
  %1544 = vmatprep.subr.mxu0 0.0
  %1545 = vmatpush1.msra.mxu0 %v1492
  %1546 = vmatprep.subr.mxu0 0.0
  %1547 = vmatpush1.msra.mxu0 %v1491
  %1548 = vmatprep.subr.mxu0 0.0
  %1549 = vmatpush1.msra.mxu0 %v1490
  %1550 = vmatprep.subr.mxu0 0.0
  %1551 = vmatpush2.msra.mxu0 0.0
  %1552 = vmatprep.subr.mxu0 0.0
  %1553 = vmatpush2.msra.mxu0 0.0
  %1554 = vmatprep.subr.mxu0 0.0
  %1555 = vmatpush2.msra.mxu0 0.0
  %1556 = vmatprep.subr.mxu0 0.0
  %1557 = vmatpush2.msra.mxu0 0.0
  %1558 = vmatprep.subr.mxu0 0.0
  %1559 = vmatpush2.msra.mxu0 0.0
  %1560 = vmatprep.subr.mxu0 0.0
  %1561 = vmatpush2.msra.mxu0 0.0
  %1562 = vmatprep.subr.mxu0 0.0
  %1563 = vmatpush2.msra.mxu0 0.0
  %1564 = vmatprep.subr.mxu0 0.0
  %1565 = vmatpush2.msra.mxu0 0.0
  %1566 = vmatprep.subr.mxu0 0.0
  %1567 = vmatpush2.msra.mxu0 0.0
  %1568 = vmatprep.subr.mxu0 0.0
  %1569 = vmatpush2.msra.mxu0 0.0
  %1570 = vmatprep.subr.mxu0 0.0
  %1571 = vmatpush2.msra.mxu0 0.0
  %1572 = vmatprep.subr.mxu0 0.0
  %1573 = vmatpush2.msra.mxu0 0.0
  %1574 = vmatprep.subr.mxu0 0.0
  %1575 = vmatpush2.msra.mxu0 0.0
  %1576 = vmatprep.subr.mxu0 0.0
  %1577 = vmatpush2.msra.mxu0 0.0
  %1578 = vmatprep.subr.mxu0 0.0
  %1579 = vmatpush2.msra.mxu0 0.0
  %1580 = vmatprep.subr.mxu0 0.0
  %1581 = vmatpush2.msra.mxu0 0.0
  %1582 = vmatprep.mubr.f32.mxu0 0.0
  %1583 = vmatmul.mubr.f32.gmra.mxu0 %v1495
  %v1584 = vpop.f32.mrf.mxu0
  %v1585 = vadd.f32 0.0, %v1584
  %v1586 = vpop.f32.mrf.mxu0
  %1587 = vmatprep.mubr.f32.mxu0 0.0
  %1588 = vmatmul.mubr.f32.gmra.mxu0 %v1498
  %v1589 = vpop.f32.mrf.mxu0
  %v1590 = vadd.f32 0.0, %v1589
  %v1591 = vpop.f32.mrf.mxu0
  %1592 = vmatprep.mubr.f32.mxu0 0.0
  %1593 = vmatmul.mubr.f32.gmra.mxu0 %v1501
  %v1594 = vpop.f32.mrf.mxu0
  %v1595 = vadd.f32 0.0, %v1594
  %v1596 = vpop.f32.mrf.mxu0
  %1597 = vmatprep.mubr.f32.mxu0 0.0
  %1598 = vmatmul.mubr.f32.gmra.mxu0 %v1504
  %v1599 = vpop.f32.mrf.mxu0
  %v1600 = vadd.f32 0.0, %v1599
  %v1601 = vpop.f32.mrf.mxu0
  %1602 = vmatprep.mubr.f32.mxu0 0.0
  %1603 = vmatmul.mubr.f32.gmra.mxu0 %v1507
  %v1604 = vpop.f32.mrf.mxu0
  %v1605 = vadd.f32 0.0, %v1604
  %v1606 = vpop.f32.mrf.mxu0
  %1607 = vmatprep.mubr.f32.mxu0 0.0
  %1608 = vmatmul.mubr.f32.gmra.mxu0 %v1510
  %v1609 = vpop.f32.mrf.mxu0
  %v1610 = vadd.f32 0.0, %v1609
  %v1611 = vpop.f32.mrf.mxu0
  %1612 = vmatprep.mubr.f32.mxu0 0.0
  %1613 = vmatmul.mubr.f32.gmra.mxu0 %v1513
  %v1614 = vpop.f32.mrf.mxu0
  %v1615 = vadd.f32 0.0, %v1614
  %v1616 = vpop.f32.mrf.mxu0
  %1617 = vmatprep.mubr.f32.mxu0 0.0
  %1618 = vmatmul.mubr.f32.gmra.mxu0 %v1516
  %v1619 = vpop.f32.mrf.mxu0
  %v1620 = vadd.f32 0.0, %v1619
  %v1621 = vpop.f32.mrf.mxu0
  %1622 = vdwg.mxu0
  %v1624 = vsel %vm69, %v1470, 0
  %v1627 = vsel %vm69, %v1471, 0
  %v1630 = vsel %vm69, %v1472, 0
  %v1633 = vsel %vm69, %v1473, 0
  %v1636 = vsel %vm69, %v1474, 0
  %v1639 = vsel %vm69, %v1475, 0
  %v1642 = vsel %vm69, %v1476, 0
  %v1645 = vsel %vm69, %v1477, 0
  %1647 = vmatprep.subr.mxu0 0.0
  %1648 = vmatpush1.msra.mxu0 0.0
  %1649 = vmatprep.subr.mxu0 0.0
  %1650 = vmatpush1.msra.mxu0 0.0
  %1651 = vmatprep.subr.mxu0 0.0
  %1652 = vmatpush1.msra.mxu0 0.0
  %1653 = vmatprep.subr.mxu0 0.0
  %1654 = vmatpush1.msra.mxu0 0.0
  %1655 = vmatprep.subr.mxu0 0.0
  %1656 = vmatpush1.msra.mxu0 0.0
  %1657 = vmatprep.subr.mxu0 0.0
  %1658 = vmatpush1.msra.mxu0 0.0
  %1659 = vmatprep.subr.mxu0 0.0
  %1660 = vmatpush1.msra.mxu0 0.0
  %1661 = vmatprep.subr.mxu0 0.0
  %1662 = vmatpush1.msra.mxu0 0.0
  %1663 = vmatprep.subr.mxu0 0.0
  %1664 = vmatpush1.msra.mxu0 0.0
  %1665 = vmatprep.subr.mxu0 0.0
  %1666 = vmatpush1.msra.mxu0 0.0
  %1667 = vmatprep.subr.mxu0 0.0
  %1668 = vmatpush1.msra.mxu0 0.0
  %1669 = vmatprep.subr.mxu0 0.0
  %1670 = vmatpush1.msra.mxu0 0.0
  %1671 = vmatprep.subr.mxu0 0.0
  %1672 = vmatpush1.msra.mxu0 %v1489
  %1673 = vmatprep.subr.mxu0 0.0
  %1674 = vmatpush1.msra.mxu0 %v1488
  %1675 = vmatprep.subr.mxu0 0.0
  %1676 = vmatpush1.msra.mxu0 %v1487
  %1677 = vmatprep.subr.mxu0 0.0
  %1678 = vmatpush1.msra.mxu0 %v1486
  %1679 = vmatprep.subr.mxu0 0.0
  %1680 = vmatpush2.msra.mxu0 0.0
  %1681 = vmatprep.subr.mxu0 0.0
  %1682 = vmatpush2.msra.mxu0 0.0
  %1683 = vmatprep.subr.mxu0 0.0
  %1684 = vmatpush2.msra.mxu0 0.0
  %1685 = vmatprep.subr.mxu0 0.0
  %1686 = vmatpush2.msra.mxu0 0.0
  %1687 = vmatprep.subr.mxu0 0.0
  %1688 = vmatpush2.msra.mxu0 0.0
  %1689 = vmatprep.subr.mxu0 0.0
  %1690 = vmatpush2.msra.mxu0 0.0
  %1691 = vmatprep.subr.mxu0 0.0
  %1692 = vmatpush2.msra.mxu0 0.0
  %1693 = vmatprep.subr.mxu0 0.0
  %1694 = vmatpush2.msra.mxu0 0.0
  %1695 = vmatprep.subr.mxu0 0.0
  %1696 = vmatpush2.msra.mxu0 0.0
  %1697 = vmatprep.subr.mxu0 0.0
  %1698 = vmatpush2.msra.mxu0 0.0
  %1699 = vmatprep.subr.mxu0 0.0
  %1700 = vmatpush2.msra.mxu0 0.0
  %1701 = vmatprep.subr.mxu0 0.0
  %1702 = vmatpush2.msra.mxu0 0.0
  %1703 = vmatprep.subr.mxu0 0.0
  %1704 = vmatpush2.msra.mxu0 0.0
  %1705 = vmatprep.subr.mxu0 0.0
  %1706 = vmatpush2.msra.mxu0 0.0
  %1707 = vmatprep.subr.mxu0 0.0
  %1708 = vmatpush2.msra.mxu0 0.0
  %1709 = vmatprep.subr.mxu0 0.0
  %1710 = vmatpush2.msra.mxu0 0.0
  %1711 = vmatprep.mubr.f32.mxu0 0.0
  %1712 = vmatmul.mubr.f32.gmra.mxu0 %v1624
  %v1713 = vpop.f32.mrf.mxu0
  %v1714 = vadd.f32 %v1585, %v1713
  %v1715 = vpop.f32.mrf.mxu0
  %1716 = vmatprep.mubr.f32.mxu0 0.0
  %1717 = vmatmul.mubr.f32.gmra.mxu0 %v1627
  %v1718 = vpop.f32.mrf.mxu0
  %v1719 = vadd.f32 %v1590, %v1718
  %v1720 = vpop.f32.mrf.mxu0
  %1721 = vmatprep.mubr.f32.mxu0 0.0
  %1722 = vmatmul.mubr.f32.gmra.mxu0 %v1630
  %v1723 = vpop.f32.mrf.mxu0
  %v1724 = vadd.f32 %v1595, %v1723
  %v1725 = vpop.f32.mrf.mxu0
  %1726 = vmatprep.mubr.f32.mxu0 0.0
  %1727 = vmatmul.mubr.f32.gmra.mxu0 %v1633
  %v1728 = vpop.f32.mrf.mxu0
  %v1729 = vadd.f32 %v1600, %v1728
  %v1730 = vpop.f32.mrf.mxu0
  %1731 = vmatprep.mubr.f32.mxu0 0.0
  %1732 = vmatmul.mubr.f32.gmra.mxu0 %v1636
  %v1733 = vpop.f32.mrf.mxu0
  %v1734 = vadd.f32 %v1605, %v1733
  %v1735 = vpop.f32.mrf.mxu0
  %1736 = vmatprep.mubr.f32.mxu0 0.0
  %1737 = vmatmul.mubr.f32.gmra.mxu0 %v1639
  %v1738 = vpop.f32.mrf.mxu0
  %v1739 = vadd.f32 %v1610, %v1738
  %v1740 = vpop.f32.mrf.mxu0
  %1741 = vmatprep.mubr.f32.mxu0 0.0
  %1742 = vmatmul.mubr.f32.gmra.mxu0 %v1642
  %v1743 = vpop.f32.mrf.mxu0
  %v1744 = vadd.f32 %v1615, %v1743
  %v1745 = vpop.f32.mrf.mxu0
  %1746 = vmatprep.mubr.f32.mxu0 0.0
  %1747 = vmatmul.mubr.f32.gmra.mxu0 %v1645
  %v1748 = vpop.f32.mrf.mxu0
  %v1749 = vadd.f32 %v1620, %v1748
  %v1750 = vpop.f32.mrf.mxu0
  %1751 = vdwg.mxu0
  %v1752 = vld [vmem:[%s8] sm:$0x1]
  %v1753 = vlaneseq
  %v1754 = vshrl.u32 %v1753, 7
  %v1755 = vsub.s32 0, %v1754
  %v1756 = vrot.slane %v1752, %v1755
  %1758 = vrot.lane.b32.xlu0 %v1756, 32
  %v1759 = vpop.permute.xlu0 %1758
  %v1761 = vadd.f32 %v1714, %v1759
  %v1762 = vadd.f32 %v1719, %v1759
  %v1763 = vadd.f32 %v1724, %v1759
  %v1764 = vadd.f32 %v1729, %v1759
  %v1765 = vadd.f32 %v1734, %v1759
  %v1766 = vadd.f32 %v1739, %v1759
  %v1767 = vadd.f32 %v1744, %v1759
  %v1768 = vadd.f32 %v1749, %v1759
  %v1769 = vxor.u32 %v1761, 2147483648
  %v1770 = vxor.u32 %v1762, 2147483648
  %v1771 = vxor.u32 %v1763, 2147483648
  %v1772 = vxor.u32 %v1764, 2147483648
  %v1773 = vxor.u32 %v1765, 2147483648
  %v1774 = vxor.u32 %v1766, 2147483648
  %v1775 = vxor.u32 %v1767, 2147483648
  %v1776 = vxor.u32 %v1768, 2147483648
  %v1777 = vmul.f32 %v1769, 1.442695
  %v1778 = vpow.pop %v1777
  %v1779 = vmul.f32 %v1770, 1.442695
  %v1780 = vpow.pop %v1779
  %v1781 = vmul.f32 %v1771, 1.442695
  %v1782 = vpow.pop %v1781
  %v1783 = vmul.f32 %v1772, 1.442695
  %v1784 = vpow.pop %v1783
  %v1785 = vmul.f32 %v1773, 1.442695
  %v1786 = vpow.pop %v1785
  %v1787 = vmul.f32 %v1774, 1.442695
  %v1788 = vpow.pop %v1787
  %v1789 = vmul.f32 %v1775, 1.442695
  %v1790 = vpow.pop %v1789
  %v1791 = vmul.f32 %v1776, 1.442695
  %v1792 = vpow.pop %v1791
  %v1793 = vadd.f32 %v1778, 1.0
  %v1794 = vadd.f32 %v1780, 1.0
  %v1795 = vadd.f32 %v1782, 1.0
  %v1796 = vadd.f32 %v1784, 1.0
  %v1797 = vadd.f32 %v1786, 1.0
  %v1798 = vadd.f32 %v1788, 1.0
  %v1799 = vadd.f32 %v1790, 1.0
  %v1800 = vadd.f32 %v1792, 1.0
  %v1801 = vrcp.pop %v1793
  %v1802 = vmul.f32 1.0, %v1801
  %v1803 = vrcp.pop %v1794
  %v1804 = vmul.f32 1.0, %v1803
  %v1805 = vrcp.pop %v1795
  %v1806 = vmul.f32 1.0, %v1805
  %v1807 = vrcp.pop %v1796
  %v1808 = vmul.f32 1.0, %v1807
  %v1809 = vrcp.pop %v1797
  %v1810 = vmul.f32 1.0, %v1809
  %v1811 = vrcp.pop %v1798
  %v1812 = vmul.f32 1.0, %v1811
  %v1813 = vrcp.pop %v1799
  %v1814 = vmul.f32 1.0, %v1813
  %v1815 = vrcp.pop %v1800
  %v1816 = vmul.f32 1.0, %v1815
  %v1817 = vld [vmem:[%s8 + $0x1] sm:$0x1]
  %v1818 = vlaneseq
  %v1819 = vshrl.u32 %v1818, 7
  %v1820 = vsub.s32 0, %v1819
  %v1821 = vrot.slane %v1817, %v1820
  %1823 = vrot.lane.b32.xlu0 %v1821, 64
  %v1824 = vpop.permute.xlu0 %1823
  %v1826 = vadd.f32 %v1714, %v1824
  %v1827 = vadd.f32 %v1719, %v1824
  %v1828 = vadd.f32 %v1724, %v1824
  %v1829 = vadd.f32 %v1729, %v1824
  %v1830 = vadd.f32 %v1734, %v1824
  %v1831 = vadd.f32 %v1739, %v1824
  %v1832 = vadd.f32 %v1744, %v1824
  %v1833 = vadd.f32 %v1749, %v1824
  %v1834 = vxor.u32 %v1826, 2147483648
  %v1835 = vxor.u32 %v1827, 2147483648
  %v1836 = vxor.u32 %v1828, 2147483648
  %v1837 = vxor.u32 %v1829, 2147483648
  %v1838 = vxor.u32 %v1830, 2147483648
  %v1839 = vxor.u32 %v1831, 2147483648
  %v1840 = vxor.u32 %v1832, 2147483648
  %v1841 = vxor.u32 %v1833, 2147483648
  %v1842 = vmul.f32 %v1834, 1.442695
  %v1843 = vpow.pop %v1842
  %v1844 = vmul.f32 %v1835, 1.442695
  %v1845 = vpow.pop %v1844
  %v1846 = vmul.f32 %v1836, 1.442695
  %v1847 = vpow.pop %v1846
  %v1848 = vmul.f32 %v1837, 1.442695
  %v1849 = vpow.pop %v1848
  %v1850 = vmul.f32 %v1838, 1.442695
  %v1851 = vpow.pop %v1850
  %v1852 = vmul.f32 %v1839, 1.442695
  %v1853 = vpow.pop %v1852
  %v1854 = vmul.f32 %v1840, 1.442695
  %v1855 = vpow.pop %v1854
  %v1856 = vmul.f32 %v1841, 1.442695
  %v1857 = vpow.pop %v1856
  %v1858 = vadd.f32 %v1843, 1.0
  %v1859 = vadd.f32 %v1845, 1.0
  %v1860 = vadd.f32 %v1847, 1.0
  %v1861 = vadd.f32 %v1849, 1.0
  %v1862 = vadd.f32 %v1851, 1.0
  %v1863 = vadd.f32 %v1853, 1.0
  %v1864 = vadd.f32 %v1855, 1.0
  %v1865 = vadd.f32 %v1857, 1.0
  %v1866 = vrcp.pop %v1858
  %v1867 = vmul.f32 1.0, %v1866
  %v1868 = vrcp.pop %v1859
  %v1869 = vmul.f32 1.0, %v1868
  %v1870 = vrcp.pop %v1860
  %v1871 = vmul.f32 1.0, %v1870
  %v1872 = vrcp.pop %v1861
  %v1873 = vmul.f32 1.0, %v1872
  %v1874 = vrcp.pop %v1862
  %v1875 = vmul.f32 1.0, %v1874
  %v1876 = vrcp.pop %v1863
  %v1877 = vmul.f32 1.0, %v1876
  %v1878 = vrcp.pop %v1864
  %v1879 = vmul.f32 1.0, %v1878
  %v1880 = vrcp.pop %v1865
  %v1881 = vmul.f32 1.0, %v1880
  %v1882 = vmul.f32 %v1802, %v332
  %v1883 = vmul.f32 %v1804, %v337
  %v1884 = vmul.f32 %v1806, %v342
  %v1885 = vmul.f32 %v1808, %v347
  %v1886 = vmul.f32 %v1810, %v352
  %v1887 = vmul.f32 %v1812, %v357
  %v1888 = vmul.f32 %v1814, %v362
  %v1889 = vmul.f32 %v1816, %v367
  %v1890 = vadd.f32 %v1882, %v380
  %v1891 = vadd.f32 %v1883, %v385
  %v1892 = vadd.f32 %v1884, %v390
  %v1893 = vadd.f32 %v1885, %v395
  %v1894 = vadd.f32 %v1886, %v400
  %v1895 = vadd.f32 %v1887, %v405
  %v1896 = vadd.f32 %v1888, %v410
  %v1897 = vadd.f32 %v1889, %v415
  %1906 = vrot.lane.b32.xlu0 %v1890, 96
  %v1907 = vpop.permute.xlu0 %1906
  %1908 = vrot.lane.b32.xlu0 %v1891, 96
  %v1909 = vpop.permute.xlu0 %1908
  %1910 = vrot.lane.b32.xlu0 %v1892, 96
  %v1911 = vpop.permute.xlu0 %1910
  %1912 = vrot.lane.b32.xlu0 %v1893, 96
  %v1913 = vpop.permute.xlu0 %1912
  %1914 = vrot.lane.b32.xlu0 %v1894, 96
  %v1915 = vpop.permute.xlu0 %1914
  %1916 = vrot.lane.b32.xlu0 %v1895, 96
  %v1917 = vpop.permute.xlu0 %1916
  %1918 = vrot.lane.b32.xlu0 %v1896, 96
  %v1919 = vpop.permute.xlu0 %1918
  %1920 = vrot.lane.b32.xlu0 %v1897, 96
  %v1921 = vpop.permute.xlu0 %1920
  %1930 = vst.msk [vmem:[#allocation2] sm:$0xff] %vm69, %v1907
  %1931 = vst.msk [vmem:[#allocation2 + $0x8] sm:$0xff] %vm69, %v1909
  %1932 = vst.msk [vmem:[#allocation2 + $0x10] sm:$0xff] %vm69, %v1911
  %1933 = vst.msk [vmem:[#allocation2 + $0x18] sm:$0xff] %vm69, %v1913
  %1934 = vst.msk [vmem:[#allocation2 + $0x20] sm:$0xff] %vm69, %v1915
  %1935 = vst.msk [vmem:[#allocation2 + $0x28] sm:$0xff] %vm69, %v1917
  %1936 = vst.msk [vmem:[#allocation2 + $0x30] sm:$0xff] %vm69, %v1919
  %1937 = vst.msk [vmem:[#allocation2 + $0x38] sm:$0xff] %vm69, %v1921
  %v1938 = vsub.f32 1.0, %v1802
  %v1939 = vsub.f32 1.0, %v1804
  %v1940 = vsub.f32 1.0, %v1806
  %v1941 = vsub.f32 1.0, %v1808
  %v1942 = vsub.f32 1.0, %v1810
  %v1943 = vsub.f32 1.0, %v1812
  %v1944 = vsub.f32 1.0, %v1814
  %v1945 = vsub.f32 1.0, %v1816
  %v1946 = vmul.f32 %v332, %v1938
  %v1947 = vmul.f32 %v337, %v1939
  %v1948 = vmul.f32 %v342, %v1940
  %v1949 = vmul.f32 %v347, %v1941
  %v1950 = vmul.f32 %v352, %v1942
  %v1951 = vmul.f32 %v357, %v1943
  %v1952 = vmul.f32 %v362, %v1944
  %v1953 = vmul.f32 %v367, %v1945
  %1962 = vrot.lane.b32.xlu0 %v1714, 32
  %v1963 = vpop.permute.xlu0 %1962
  %1964 = vrot.lane.b32.xlu0 %v1719, 32
  %v1965 = vpop.permute.xlu0 %1964
  %1966 = vrot.lane.b32.xlu0 %v1724, 32
  %v1967 = vpop.permute.xlu0 %1966
  %1968 = vrot.lane.b32.xlu0 %v1729, 32
  %v1969 = vpop.permute.xlu0 %1968
  %1970 = vrot.lane.b32.xlu0 %v1734, 32
  %v1971 = vpop.permute.xlu0 %1970
  %1972 = vrot.lane.b32.xlu0 %v1739, 32
  %v1973 = vpop.permute.xlu0 %1972
  %1974 = vrot.lane.b32.xlu0 %v1744, 32
  %v1975 = vpop.permute.xlu0 %1974
  %1976 = vrot.lane.b32.xlu0 %v1749, 32
  %v1977 = vpop.permute.xlu0 %1976
  %v1986 = vmul.f32 %v1946, %v1963
  %v1987 = vmul.f32 %v1947, %v1965
  %v1988 = vmul.f32 %v1948, %v1967
  %v1989 = vmul.f32 %v1949, %v1969
  %v1990 = vmul.f32 %v1950, %v1971
  %v1991 = vmul.f32 %v1951, %v1973
  %v1992 = vmul.f32 %v1952, %v1975
  %v1993 = vmul.f32 %v1953, %v1977
  %2002 = vrot.lane.b32.xlu0 %v1986, 96
  %v2003 = vpop.permute.xlu0 %2002
  %2004 = vrot.lane.b32.xlu0 %v1987, 96
  %v2005 = vpop.permute.xlu0 %2004
  %2006 = vrot.lane.b32.xlu0 %v1988, 96
  %v2007 = vpop.permute.xlu0 %2006
  %2008 = vrot.lane.b32.xlu0 %v1989, 96
  %v2009 = vpop.permute.xlu0 %2008
  %2010 = vrot.lane.b32.xlu0 %v1990, 96
  %v2011 = vpop.permute.xlu0 %2010
  %2012 = vrot.lane.b32.xlu0 %v1991, 96
  %v2013 = vpop.permute.xlu0 %2012
  %2014 = vrot.lane.b32.xlu0 %v1992, 96
  %v2015 = vpop.permute.xlu0 %2014
  %2016 = vrot.lane.b32.xlu0 %v1993, 96
  %v2017 = vpop.permute.xlu0 %2016
  %2026 = vst.msk [vmem:[#allocation3] sm:$0xff] %vm69, %v2003
  %2027 = vst.msk [vmem:[#allocation3 + $0x8] sm:$0xff] %vm69, %v2005
  %2028 = vst.msk [vmem:[#allocation3 + $0x10] sm:$0xff] %vm69, %v2007
  %2029 = vst.msk [vmem:[#allocation3 + $0x18] sm:$0xff] %vm69, %v2009
  %2030 = vst.msk [vmem:[#allocation3 + $0x20] sm:$0xff] %vm69, %v2011
  %2031 = vst.msk [vmem:[#allocation3 + $0x28] sm:$0xff] %vm69, %v2013
  %2032 = vst.msk [vmem:[#allocation3 + $0x30] sm:$0xff] %vm69, %v2015
  %2033 = vst.msk [vmem:[#allocation3 + $0x38] sm:$0xff] %vm69, %v2017
  %v2034 = vmul.f32 %v332, %v1867
  %v2035 = vmul.f32 %v337, %v1869
  %v2036 = vmul.f32 %v342, %v1871
  %v2037 = vmul.f32 %v347, %v1873
  %v2038 = vmul.f32 %v352, %v1875
  %v2039 = vmul.f32 %v357, %v1877
  %v2040 = vmul.f32 %v362, %v1879
  %v2041 = vmul.f32 %v367, %v1881
  %2050 = vrot.lane.b32.xlu0 %v2034, 64
  %v2051 = vpop.permute.xlu0 %2050
  %2052 = vrot.lane.b32.xlu0 %v2035, 64
  %v2053 = vpop.permute.xlu0 %2052
  %2054 = vrot.lane.b32.xlu0 %v2036, 64
  %v2055 = vpop.permute.xlu0 %2054
  %2056 = vrot.lane.b32.xlu0 %v2037, 64
  %v2057 = vpop.permute.xlu0 %2056
  %2058 = vrot.lane.b32.xlu0 %v2038, 64
  %v2059 = vpop.permute.xlu0 %2058
  %2060 = vrot.lane.b32.xlu0 %v2039, 64
  %v2061 = vpop.permute.xlu0 %2060
  %2062 = vrot.lane.b32.xlu0 %v2040, 64
  %v2063 = vpop.permute.xlu0 %2062
  %2064 = vrot.lane.b32.xlu0 %v2041, 64
  %v2065 = vpop.permute.xlu0 %2064
  %2074 = vst.msk [vmem:[#allocation4] sm:$0xff] %vm69, %v2051
  %2075 = vst.msk [vmem:[#allocation4 + $0x8] sm:$0xff] %vm69, %v2053
  %2076 = vst.msk [vmem:[#allocation4 + $0x10] sm:$0xff] %vm69, %v2055
  %2077 = vst.msk [vmem:[#allocation4 + $0x18] sm:$0xff] %vm69, %v2057
  %2078 = vst.msk [vmem:[#allocation4 + $0x20] sm:$0xff] %vm69, %v2059
  %2079 = vst.msk [vmem:[#allocation4 + $0x28] sm:$0xff] %vm69, %v2061
  %2080 = vst.msk [vmem:[#allocation4 + $0x30] sm:$0xff] %vm69, %v2063
  %2081 = vst.msk [vmem:[#allocation4 + $0x38] sm:$0xff] %vm69, %v2065
  %v2082 = vsub.f32 1.0, %v1867
  %v2083 = vsub.f32 1.0, %v1869
  %v2084 = vsub.f32 1.0, %v1871
  %v2085 = vsub.f32 1.0, %v1873
  %v2086 = vsub.f32 1.0, %v1875
  %v2087 = vsub.f32 1.0, %v1877
  %v2088 = vsub.f32 1.0, %v1879
  %v2089 = vsub.f32 1.0, %v1881
  %v2090 = vmul.f32 %v332, %v2082
  %v2091 = vmul.f32 %v337, %v2083
  %v2092 = vmul.f32 %v342, %v2084
  %v2093 = vmul.f32 %v347, %v2085
  %v2094 = vmul.f32 %v352, %v2086
  %v2095 = vmul.f32 %v357, %v2087
  %v2096 = vmul.f32 %v362, %v2088
  %v2097 = vmul.f32 %v367, %v2089
  %2098 = vrot.lane.b32.xlu0 %v1470, 64
  %v2099 = vpop.permute.xlu0 %2098
  %2100 = vrot.lane.b32.xlu0 %v1471, 64
  %v2101 = vpop.permute.xlu0 %2100
  %2102 = vrot.lane.b32.xlu0 %v1472, 64
  %v2103 = vpop.permute.xlu0 %2102
  %2104 = vrot.lane.b32.xlu0 %v1473, 64
  %v2105 = vpop.permute.xlu0 %2104
  %2106 = vrot.lane.b32.xlu0 %v1474, 64
  %v2107 = vpop.permute.xlu0 %2106
  %2108 = vrot.lane.b32.xlu0 %v1475, 64
  %v2109 = vpop.permute.xlu0 %2108
  %2110 = vrot.lane.b32.xlu0 %v1476, 64
  %v2111 = vpop.permute.xlu0 %2110
  %2112 = vrot.lane.b32.xlu0 %v1477, 64
  %v2113 = vpop.permute.xlu0 %2112
  %v2122 = vmul.f32 %v2090, %v2099
  %v2123 = vmul.f32 %v2091, %v2101
  %v2124 = vmul.f32 %v2092, %v2103
  %v2125 = vmul.f32 %v2093, %v2105
  %v2126 = vmul.f32 %v2094, %v2107
  %v2127 = vmul.f32 %v2095, %v2109
  %v2128 = vmul.f32 %v2096, %v2111
  %v2129 = vmul.f32 %v2097, %v2113
  %2138 = vrot.lane.b32.xlu0 %v2122, 64
  %v2139 = vpop.permute.xlu0 %2138
  %2140 = vrot.lane.b32.xlu0 %v2123, 64
  %v2141 = vpop.permute.xlu0 %2140
  %2142 = vrot.lane.b32.xlu0 %v2124, 64
  %v2143 = vpop.permute.xlu0 %2142
  %2144 = vrot.lane.b32.xlu0 %v2125, 64
  %v2145 = vpop.permute.xlu0 %2144
  %2146 = vrot.lane.b32.xlu0 %v2126, 64
  %v2147 = vpop.permute.xlu0 %2146
  %2148 = vrot.lane.b32.xlu0 %v2127, 64
  %v2149 = vpop.permute.xlu0 %2148
  %2150 = vrot.lane.b32.xlu0 %v2128, 64
  %v2151 = vpop.permute.xlu0 %2150
  %2152 = vrot.lane.b32.xlu0 %v2129, 64
  %v2153 = vpop.permute.xlu0 %2152
  %2162 = vst.msk [vmem:[#allocation5] sm:$0xff] %vm69, %v2139
  %2163 = vst.msk [vmem:[#allocation5 + $0x8] sm:$0xff] %vm69, %v2141
  %2164 = vst.msk [vmem:[#allocation5 + $0x10] sm:$0xff] %vm69, %v2143
  %2165 = vst.msk [vmem:[#allocation5 + $0x18] sm:$0xff] %vm69, %v2145
  %2166 = vst.msk [vmem:[#allocation5 + $0x20] sm:$0xff] %vm69, %v2147
  %2167 = vst.msk [vmem:[#allocation5 + $0x28] sm:$0xff] %vm69, %v2149
  %2168 = vst.msk [vmem:[#allocation5 + $0x30] sm:$0xff] %vm69, %v2151
  %2169 = vst.msk [vmem:[#allocation5 + $0x38] sm:$0xff] %vm69, %v2153
  %v2170 = vld [vmem:[%s9] sm:$0xff]
  %v2171 = vld [vmem:[%s9 + $0x8] sm:$0xff]
  %v2172 = vld [vmem:[%s9 + $0x10] sm:$0xff]
  %v2173 = vld [vmem:[%s9 + $0x18] sm:$0xff]
  %v2174 = vld [vmem:[%s9 + $0x20] sm:$0xff]
  %v2175 = vld [vmem:[%s9 + $0x28] sm:$0xff]
  %v2176 = vld [vmem:[%s9 + $0x30] sm:$0xff]
  %v2177 = vld [vmem:[%s9 + $0x38] sm:$0xff]
  %2178 = vmatprep.subr.mxu0 0.0
  %2179 = vmatpush1.msra.mxu0 0.0
  %2180 = vmatprep.subr.mxu0 0.0
  %2181 = vmatpush1.msra.mxu0 0.0
  %2182 = vmatprep.subr.mxu0 0.0
  %2183 = vmatpush1.msra.mxu0 0.0
  %2184 = vmatprep.subr.mxu0 0.0
  %2185 = vmatpush1.msra.mxu0 0.0
  %2186 = vmatprep.subr.mxu0 0.0
  %2187 = vmatpush1.msra.mxu0 0.0
  %2188 = vmatprep.subr.mxu0 0.0
  %2189 = vmatpush1.msra.mxu0 0.0
  %2190 = vmatprep.subr.mxu0 0.0
  %2191 = vmatpush1.msra.mxu0 0.0
  %2192 = vmatprep.subr.mxu0 0.0
  %2193 = vmatpush1.msra.mxu0 0.0
  %2194 = vmatprep.subr.mxu0 0.0
  %2195 = vmatpush1.msra.mxu0 0.0
  %2196 = vmatprep.subr.mxu0 0.0
  %2197 = vmatpush1.msra.mxu0 0.0
  %2198 = vmatprep.subr.mxu0 0.0
  %2199 = vmatpush1.msra.mxu0 0.0
  %2200 = vmatprep.subr.mxu0 0.0
  %2201 = vmatpush1.msra.mxu0 0.0
  %2202 = vmatprep.subr.mxu0 0.0
  %2203 = vmatpush1.msra.mxu0 %v2177
  %2204 = vmatprep.subr.mxu0 0.0
  %2205 = vmatpush1.msra.mxu0 %v2176
  %2206 = vmatprep.subr.mxu0 0.0
  %2207 = vmatpush1.msra.mxu0 %v2175
  %2208 = vmatprep.subr.mxu0 0.0
  %2209 = vmatpush1.msra.mxu0 %v2174
  %2210 = vmatprep.subr.mxu0 0.0
  %2211 = vmatpush2.msra.mxu0 0.0
  %2212 = vmatprep.subr.mxu0 0.0
  %2213 = vmatpush2.msra.mxu0 0.0
  %2214 = vmatprep.subr.mxu0 0.0
  %2215 = vmatpush2.msra.mxu0 0.0
  %2216 = vmatprep.subr.mxu0 0.0
  %2217 = vmatpush2.msra.mxu0 0.0
  %2218 = vmatprep.subr.mxu0 0.0
  %2219 = vmatpush2.msra.mxu0 0.0
  %2220 = vmatprep.subr.mxu0 0.0
  %2221 = vmatpush2.msra.mxu0 0.0
  %2222 = vmatprep.subr.mxu0 0.0
  %2223 = vmatpush2.msra.mxu0 0.0
  %2224 = vmatprep.subr.mxu0 0.0
  %2225 = vmatpush2.msra.mxu0 0.0
  %2226 = vmatprep.subr.mxu0 0.0
  %2227 = vmatpush2.msra.mxu0 0.0
  %2228 = vmatprep.subr.mxu0 0.0
  %2229 = vmatpush2.msra.mxu0 0.0
  %2230 = vmatprep.subr.mxu0 0.0
  %2231 = vmatpush2.msra.mxu0 0.0
  %2232 = vmatprep.subr.mxu0 0.0
  %2233 = vmatpush2.msra.mxu0 0.0
  %2234 = vmatprep.subr.mxu0 0.0
  %2235 = vmatpush2.msra.mxu0 0.0
  %2236 = vmatprep.subr.mxu0 0.0
  %2237 = vmatpush2.msra.mxu0 0.0
  %2238 = vmatprep.subr.mxu0 0.0
  %2239 = vmatpush2.msra.mxu0 0.0
  %2240 = vmatprep.subr.mxu0 0.0
  %2241 = vmatpush2.msra.mxu0 0.0
  %2242 = vmatprep.mubr.f32.mxu0 0.0
  %2243 = vmatmul.mubr.f32.gmra.mxu0 %v1495
  %v2244 = vpop.f32.mrf.mxu0
  %v2245 = vadd.f32 0.0, %v2244
  %v2246 = vpop.f32.mrf.mxu0
  %2247 = vmatprep.mubr.f32.mxu0 0.0
  %2248 = vmatmul.mubr.f32.gmra.mxu0 %v1498
  %v2249 = vpop.f32.mrf.mxu0
  %v2250 = vadd.f32 0.0, %v2249
  %v2251 = vpop.f32.mrf.mxu0
  %2252 = vmatprep.mubr.f32.mxu0 0.0
  %2253 = vmatmul.mubr.f32.gmra.mxu0 %v1501
  %v2254 = vpop.f32.mrf.mxu0
  %v2255 = vadd.f32 0.0, %v2254
  %v2256 = vpop.f32.mrf.mxu0
  %2257 = vmatprep.mubr.f32.mxu0 0.0
  %2258 = vmatmul.mubr.f32.gmra.mxu0 %v1504
  %v2259 = vpop.f32.mrf.mxu0
  %v2260 = vadd.f32 0.0, %v2259
  %v2261 = vpop.f32.mrf.mxu0
  %2262 = vmatprep.mubr.f32.mxu0 0.0
  %2263 = vmatmul.mubr.f32.gmra.mxu0 %v1507
  %v2264 = vpop.f32.mrf.mxu0
  %v2265 = vadd.f32 0.0, %v2264
  %v2266 = vpop.f32.mrf.mxu0
  %2267 = vmatprep.mubr.f32.mxu0 0.0
  %2268 = vmatmul.mubr.f32.gmra.mxu0 %v1510
  %v2269 = vpop.f32.mrf.mxu0
  %v2270 = vadd.f32 0.0, %v2269
  %v2271 = vpop.f32.mrf.mxu0
  %2272 = vmatprep.mubr.f32.mxu0 0.0
  %2273 = vmatmul.mubr.f32.gmra.mxu0 %v1513
  %v2274 = vpop.f32.mrf.mxu0
  %v2275 = vadd.f32 0.0, %v2274
  %v2276 = vpop.f32.mrf.mxu0
  %2277 = vmatprep.mubr.f32.mxu0 0.0
  %2278 = vmatmul.mubr.f32.gmra.mxu0 %v1516
  %v2279 = vpop.f32.mrf.mxu0
  %v2280 = vadd.f32 0.0, %v2279
  %v2281 = vpop.f32.mrf.mxu0
  %2282 = vdwg.mxu0
  %2283 = vmatprep.subr.mxu0 0.0
  %2284 = vmatpush1.msra.mxu0 0.0
  %2285 = vmatprep.subr.mxu0 0.0
  %2286 = vmatpush1.msra.mxu0 0.0
  %2287 = vmatprep.subr.mxu0 0.0
  %2288 = vmatpush1.msra.mxu0 0.0
  %2289 = vmatprep.subr.mxu0 0.0
  %2290 = vmatpush1.msra.mxu0 0.0
  %2291 = vmatprep.subr.mxu0 0.0
  %2292 = vmatpush1.msra.mxu0 0.0
  %2293 = vmatprep.subr.mxu0 0.0
  %2294 = vmatpush1.msra.mxu0 0.0
  %2295 = vmatprep.subr.mxu0 0.0
  %2296 = vmatpush1.msra.mxu0 0.0
  %2297 = vmatprep.subr.mxu0 0.0
  %2298 = vmatpush1.msra.mxu0 0.0
  %2299 = vmatprep.subr.mxu0 0.0
  %2300 = vmatpush1.msra.mxu0 0.0
  %2301 = vmatprep.subr.mxu0 0.0
  %2302 = vmatpush1.msra.mxu0 0.0
  %2303 = vmatprep.subr.mxu0 0.0
  %2304 = vmatpush1.msra.mxu0 0.0
  %2305 = vmatprep.subr.mxu0 0.0
  %2306 = vmatpush1.msra.mxu0 0.0
  %2307 = vmatprep.subr.mxu0 0.0
  %2308 = vmatpush1.msra.mxu0 %v2173
  %2309 = vmatprep.subr.mxu0 0.0
  %2310 = vmatpush1.msra.mxu0 %v2172
  %2311 = vmatprep.subr.mxu0 0.0
  %2312 = vmatpush1.msra.mxu0 %v2171
  %2313 = vmatprep.subr.mxu0 0.0
  %2314 = vmatpush1.msra.mxu0 %v2170
  %2315 = vmatprep.subr.mxu0 0.0
  %2316 = vmatpush2.msra.mxu0 0.0
  %2317 = vmatprep.subr.mxu0 0.0
  %2318 = vmatpush2.msra.mxu0 0.0
  %2319 = vmatprep.subr.mxu0 0.0
  %2320 = vmatpush2.msra.mxu0 0.0
  %2321 = vmatprep.subr.mxu0 0.0
  %2322 = vmatpush2.msra.mxu0 0.0
  %2323 = vmatprep.subr.mxu0 0.0
  %2324 = vmatpush2.msra.mxu0 0.0
  %2325 = vmatprep.subr.mxu0 0.0
  %2326 = vmatpush2.msra.mxu0 0.0
  %2327 = vmatprep.subr.mxu0 0.0
  %2328 = vmatpush2.msra.mxu0 0.0
  %2329 = vmatprep.subr.mxu0 0.0
  %2330 = vmatpush2.msra.mxu0 0.0
  %2331 = vmatprep.subr.mxu0 0.0
  %2332 = vmatpush2.msra.mxu0 0.0
  %2333 = vmatprep.subr.mxu0 0.0
  %2334 = vmatpush2.msra.mxu0 0.0
  %2335 = vmatprep.subr.mxu0 0.0
  %2336 = vmatpush2.msra.mxu0 0.0
  %2337 = vmatprep.subr.mxu0 0.0
  %2338 = vmatpush2.msra.mxu0 0.0
  %2339 = vmatprep.subr.mxu0 0.0
  %2340 = vmatpush2.msra.mxu0 0.0
  %2341 = vmatprep.subr.mxu0 0.0
  %2342 = vmatpush2.msra.mxu0 0.0
  %2343 = vmatprep.subr.mxu0 0.0
  %2344 = vmatpush2.msra.mxu0 0.0
  %2345 = vmatprep.subr.mxu0 0.0
  %2346 = vmatpush2.msra.mxu0 0.0
  %2347 = vmatprep.mubr.f32.mxu0 0.0
  %2348 = vmatmul.mubr.f32.gmra.mxu0 %v1624
  %v2349 = vpop.f32.mrf.mxu0
  %v2350 = vadd.f32 %v2245, %v2349
  %v2351 = vpop.f32.mrf.mxu0
  %2352 = vmatprep.mubr.f32.mxu0 0.0
  %2353 = vmatmul.mubr.f32.gmra.mxu0 %v1627
  %v2354 = vpop.f32.mrf.mxu0
  %v2355 = vadd.f32 %v2250, %v2354
  %v2356 = vpop.f32.mrf.mxu0
  %2357 = vmatprep.mubr.f32.mxu0 0.0
  %2358 = vmatmul.mubr.f32.gmra.mxu0 %v1630
  %v2359 = vpop.f32.mrf.mxu0
  %v2360 = vadd.f32 %v2255, %v2359
  %v2361 = vpop.f32.mrf.mxu0
  %2362 = vmatprep.mubr.f32.mxu0 0.0
  %2363 = vmatmul.mubr.f32.gmra.mxu0 %v1633
  %v2364 = vpop.f32.mrf.mxu0
  %v2365 = vadd.f32 %v2260, %v2364
  %v2366 = vpop.f32.mrf.mxu0
  %2367 = vmatprep.mubr.f32.mxu0 0.0
  %2368 = vmatmul.mubr.f32.gmra.mxu0 %v1636
  %v2369 = vpop.f32.mrf.mxu0
  %v2370 = vadd.f32 %v2265, %v2369
  %v2371 = vpop.f32.mrf.mxu0
  %2372 = vmatprep.mubr.f32.mxu0 0.0
  %2373 = vmatmul.mubr.f32.gmra.mxu0 %v1639
  %v2374 = vpop.f32.mrf.mxu0
  %v2375 = vadd.f32 %v2270, %v2374
  %v2376 = vpop.f32.mrf.mxu0
  %2377 = vmatprep.mubr.f32.mxu0 0.0
  %2378 = vmatmul.mubr.f32.gmra.mxu0 %v1642
  %v2379 = vpop.f32.mrf.mxu0
  %v2380 = vadd.f32 %v2275, %v2379
  %v2381 = vpop.f32.mrf.mxu0
  %2382 = vmatprep.mubr.f32.mxu0 0.0
  %2383 = vmatmul.mubr.f32.gmra.mxu0 %v1645
  %v2384 = vpop.f32.mrf.mxu0
  %v2385 = vadd.f32 %v2280, %v2384
  %v2386 = vpop.f32.mrf.mxu0
  %2387 = vdwg.mxu0
  %v2388 = vld [vmem:[%s10] sm:$0x1]
  %v2389 = vlaneseq
  %v2390 = vshrl.u32 %v2389, 7
  %v2391 = vsub.s32 0, %v2390
  %v2392 = vrot.slane %v2388, %v2391
  %2394 = vrot.lane.b32.xlu0 %v2392, 32
  %v2395 = vpop.permute.xlu0 %2394
  %v2397 = vadd.f32 %v2350, %v2395
  %v2398 = vadd.f32 %v2355, %v2395
  %v2399 = vadd.f32 %v2360, %v2395
  %v2400 = vadd.f32 %v2365, %v2395
  %v2401 = vadd.f32 %v2370, %v2395
  %v2402 = vadd.f32 %v2375, %v2395
  %v2403 = vadd.f32 %v2380, %v2395
  %v2404 = vadd.f32 %v2385, %v2395
  %v2405 = vxor.u32 %v2397, 2147483648
  %v2406 = vxor.u32 %v2398, 2147483648
  %v2407 = vxor.u32 %v2399, 2147483648
  %v2408 = vxor.u32 %v2400, 2147483648
  %v2409 = vxor.u32 %v2401, 2147483648
  %v2410 = vxor.u32 %v2402, 2147483648
  %v2411 = vxor.u32 %v2403, 2147483648
  %v2412 = vxor.u32 %v2404, 2147483648
  %v2413 = vmul.f32 %v2405, 1.442695
  %v2414 = vpow.pop %v2413
  %v2415 = vmul.f32 %v2406, 1.442695
  %v2416 = vpow.pop %v2415
  %v2417 = vmul.f32 %v2407, 1.442695
  %v2418 = vpow.pop %v2417
  %v2419 = vmul.f32 %v2408, 1.442695
  %v2420 = vpow.pop %v2419
  %v2421 = vmul.f32 %v2409, 1.442695
  %v2422 = vpow.pop %v2421
  %v2423 = vmul.f32 %v2410, 1.442695
  %v2424 = vpow.pop %v2423
  %v2425 = vmul.f32 %v2411, 1.442695
  %v2426 = vpow.pop %v2425
  %v2427 = vmul.f32 %v2412, 1.442695
  %v2428 = vpow.pop %v2427
  %v2429 = vadd.f32 %v2414, 1.0
  %v2430 = vadd.f32 %v2416, 1.0
  %v2431 = vadd.f32 %v2418, 1.0
  %v2432 = vadd.f32 %v2420, 1.0
  %v2433 = vadd.f32 %v2422, 1.0
  %v2434 = vadd.f32 %v2424, 1.0
  %v2435 = vadd.f32 %v2426, 1.0
  %v2436 = vadd.f32 %v2428, 1.0
  %v2437 = vrcp.pop %v2429
  %v2438 = vmul.f32 1.0, %v2437
  %v2439 = vrcp.pop %v2430
  %v2440 = vmul.f32 1.0, %v2439
  %v2441 = vrcp.pop %v2431
  %v2442 = vmul.f32 1.0, %v2441
  %v2443 = vrcp.pop %v2432
  %v2444 = vmul.f32 1.0, %v2443
  %v2445 = vrcp.pop %v2433
  %v2446 = vmul.f32 1.0, %v2445
  %v2447 = vrcp.pop %v2434
  %v2448 = vmul.f32 1.0, %v2447
  %v2449 = vrcp.pop %v2435
  %v2450 = vmul.f32 1.0, %v2449
  %v2451 = vrcp.pop %v2436
  %v2452 = vmul.f32 1.0, %v2451
  %v2453 = vld [vmem:[%s10 + $0x1] sm:$0x1]
  %v2454 = vlaneseq
  %v2455 = vshrl.u32 %v2454, 7
  %v2456 = vsub.s32 0, %v2455
  %v2457 = vrot.slane %v2453, %v2456
  %2459 = vrot.lane.b32.xlu0 %v2457, 64
  %v2460 = vpop.permute.xlu0 %2459
  %v2462 = vadd.f32 %v2350, %v2460
  %v2463 = vadd.f32 %v2355, %v2460
  %v2464 = vadd.f32 %v2360, %v2460
  %v2465 = vadd.f32 %v2365, %v2460
  %v2466 = vadd.f32 %v2370, %v2460
  %v2467 = vadd.f32 %v2375, %v2460
  %v2468 = vadd.f32 %v2380, %v2460
  %v2469 = vadd.f32 %v2385, %v2460
  %v2470 = vxor.u32 %v2462, 2147483648
  %v2471 = vxor.u32 %v2463, 2147483648
  %v2472 = vxor.u32 %v2464, 2147483648
  %v2473 = vxor.u32 %v2465, 2147483648
  %v2474 = vxor.u32 %v2466, 2147483648
  %v2475 = vxor.u32 %v2467, 2147483648
  %v2476 = vxor.u32 %v2468, 2147483648
  %v2477 = vxor.u32 %v2469, 2147483648
  %v2478 = vmul.f32 %v2470, 1.442695
  %v2479 = vpow.pop %v2478
  %v2480 = vmul.f32 %v2471, 1.442695
  %v2481 = vpow.pop %v2480
  %v2482 = vmul.f32 %v2472, 1.442695
  %v2483 = vpow.pop %v2482
  %v2484 = vmul.f32 %v2473, 1.442695
  %v2485 = vpow.pop %v2484
  %v2486 = vmul.f32 %v2474, 1.442695
  %v2487 = vpow.pop %v2486
  %v2488 = vmul.f32 %v2475, 1.442695
  %v2489 = vpow.pop %v2488
  %v2490 = vmul.f32 %v2476, 1.442695
  %v2491 = vpow.pop %v2490
  %v2492 = vmul.f32 %v2477, 1.442695
  %v2493 = vpow.pop %v2492
  %v2494 = vadd.f32 %v2479, 1.0
  %v2495 = vadd.f32 %v2481, 1.0
  %v2496 = vadd.f32 %v2483, 1.0
  %v2497 = vadd.f32 %v2485, 1.0
  %v2498 = vadd.f32 %v2487, 1.0
  %v2499 = vadd.f32 %v2489, 1.0
  %v2500 = vadd.f32 %v2491, 1.0
  %v2501 = vadd.f32 %v2493, 1.0
  %v2502 = vrcp.pop %v2494
  %v2503 = vmul.f32 1.0, %v2502
  %v2504 = vrcp.pop %v2495
  %v2505 = vmul.f32 1.0, %v2504
  %v2506 = vrcp.pop %v2496
  %v2507 = vmul.f32 1.0, %v2506
  %v2508 = vrcp.pop %v2497
  %v2509 = vmul.f32 1.0, %v2508
  %v2510 = vrcp.pop %v2498
  %v2511 = vmul.f32 1.0, %v2510
  %v2512 = vrcp.pop %v2499
  %v2513 = vmul.f32 1.0, %v2512
  %v2514 = vrcp.pop %v2500
  %v2515 = vmul.f32 1.0, %v2514
  %v2516 = vrcp.pop %v2501
  %v2517 = vmul.f32 1.0, %v2516
  %v2518 = vmul.f32 %v2438, %v332
  %v2519 = vmul.f32 %v2440, %v337
  %v2520 = vmul.f32 %v2442, %v342
  %v2521 = vmul.f32 %v2444, %v347
  %v2522 = vmul.f32 %v2446, %v352
  %v2523 = vmul.f32 %v2448, %v357
  %v2524 = vmul.f32 %v2450, %v362
  %v2525 = vmul.f32 %v2452, %v367
  %v2526 = vadd.f32 %v2518, %v380
  %v2527 = vadd.f32 %v2519, %v385
  %v2528 = vadd.f32 %v2520, %v390
  %v2529 = vadd.f32 %v2521, %v395
  %v2530 = vadd.f32 %v2522, %v400
  %v2531 = vadd.f32 %v2523, %v405
  %v2532 = vadd.f32 %v2524, %v410
  %v2533 = vadd.f32 %v2525, %v415
  %2542 = vrot.lane.b32.xlu0 %v2526, 96
  %v2543 = vpop.permute.xlu0 %2542
  %2544 = vrot.lane.b32.xlu0 %v2527, 96
  %v2545 = vpop.permute.xlu0 %2544
  %2546 = vrot.lane.b32.xlu0 %v2528, 96
  %v2547 = vpop.permute.xlu0 %2546
  %2548 = vrot.lane.b32.xlu0 %v2529, 96
  %v2549 = vpop.permute.xlu0 %2548
  %2550 = vrot.lane.b32.xlu0 %v2530, 96
  %v2551 = vpop.permute.xlu0 %2550
  %2552 = vrot.lane.b32.xlu0 %v2531, 96
  %v2553 = vpop.permute.xlu0 %2552
  %2554 = vrot.lane.b32.xlu0 %v2532, 96
  %v2555 = vpop.permute.xlu0 %2554
  %2556 = vrot.lane.b32.xlu0 %v2533, 96
  %v2557 = vpop.permute.xlu0 %2556
  %2566 = vst.msk [vmem:[#allocation2 + $0x40] sm:$0xff] %vm69, %v2543
  %2567 = vst.msk [vmem:[#allocation2 + $0x48] sm:$0xff] %vm69, %v2545
  %2568 = vst.msk [vmem:[#allocation2 + $0x50] sm:$0xff] %vm69, %v2547
  %2569 = vst.msk [vmem:[#allocation2 + $0x58] sm:$0xff] %vm69, %v2549
  %2570 = vst.msk [vmem:[#allocation2 + $0x60] sm:$0xff] %vm69, %v2551
  %2571 = vst.msk [vmem:[#allocation2 + $0x68] sm:$0xff] %vm69, %v2553
  %2572 = vst.msk [vmem:[#allocation2 + $0x70] sm:$0xff] %vm69, %v2555
  %2573 = vst.msk [vmem:[#allocation2 + $0x78] sm:$0xff] %vm69, %v2557
  %v2574 = vsub.f32 1.0, %v2438
  %v2575 = vsub.f32 1.0, %v2440
  %v2576 = vsub.f32 1.0, %v2442
  %v2577 = vsub.f32 1.0, %v2444
  %v2578 = vsub.f32 1.0, %v2446
  %v2579 = vsub.f32 1.0, %v2448
  %v2580 = vsub.f32 1.0, %v2450
  %v2581 = vsub.f32 1.0, %v2452
  %v2582 = vmul.f32 %v332, %v2574
  %v2583 = vmul.f32 %v337, %v2575
  %v2584 = vmul.f32 %v342, %v2576
  %v2585 = vmul.f32 %v347, %v2577
  %v2586 = vmul.f32 %v352, %v2578
  %v2587 = vmul.f32 %v357, %v2579
  %v2588 = vmul.f32 %v362, %v2580
  %v2589 = vmul.f32 %v367, %v2581
  %2598 = vrot.lane.b32.xlu0 %v2350, 32
  %v2599 = vpop.permute.xlu0 %2598
  %2600 = vrot.lane.b32.xlu0 %v2355, 32
  %v2601 = vpop.permute.xlu0 %2600
  %2602 = vrot.lane.b32.xlu0 %v2360, 32
  %v2603 = vpop.permute.xlu0 %2602
  %2604 = vrot.lane.b32.xlu0 %v2365, 32
  %v2605 = vpop.permute.xlu0 %2604
  %2606 = vrot.lane.b32.xlu0 %v2370, 32
  %v2607 = vpop.permute.xlu0 %2606
  %2608 = vrot.lane.b32.xlu0 %v2375, 32
  %v2609 = vpop.permute.xlu0 %2608
  %2610 = vrot.lane.b32.xlu0 %v2380, 32
  %v2611 = vpop.permute.xlu0 %2610
  %2612 = vrot.lane.b32.xlu0 %v2385, 32
  %v2613 = vpop.permute.xlu0 %2612
  %v2622 = vmul.f32 %v2582, %v2599
  %v2623 = vmul.f32 %v2583, %v2601
  %v2624 = vmul.f32 %v2584, %v2603
  %v2625 = vmul.f32 %v2585, %v2605
  %v2626 = vmul.f32 %v2586, %v2607
  %v2627 = vmul.f32 %v2587, %v2609
  %v2628 = vmul.f32 %v2588, %v2611
  %v2629 = vmul.f32 %v2589, %v2613
  %2638 = vrot.lane.b32.xlu0 %v2622, 96
  %v2639 = vpop.permute.xlu0 %2638
  %2640 = vrot.lane.b32.xlu0 %v2623, 96
  %v2641 = vpop.permute.xlu0 %2640
  %2642 = vrot.lane.b32.xlu0 %v2624, 96
  %v2643 = vpop.permute.xlu0 %2642
  %2644 = vrot.lane.b32.xlu0 %v2625, 96
  %v2645 = vpop.permute.xlu0 %2644
  %2646 = vrot.lane.b32.xlu0 %v2626, 96
  %v2647 = vpop.permute.xlu0 %2646
  %2648 = vrot.lane.b32.xlu0 %v2627, 96
  %v2649 = vpop.permute.xlu0 %2648
  %2650 = vrot.lane.b32.xlu0 %v2628, 96
  %v2651 = vpop.permute.xlu0 %2650
  %2652 = vrot.lane.b32.xlu0 %v2629, 96
  %v2653 = vpop.permute.xlu0 %2652
  %2662 = vst.msk [vmem:[#allocation3 + $0x40] sm:$0xff] %vm69, %v2639
  %2663 = vst.msk [vmem:[#allocation3 + $0x48] sm:$0xff] %vm69, %v2641
  %2664 = vst.msk [vmem:[#allocation3 + $0x50] sm:$0xff] %vm69, %v2643
  %2665 = vst.msk [vmem:[#allocation3 + $0x58] sm:$0xff] %vm69, %v2645
  %2666 = vst.msk [vmem:[#allocation3 + $0x60] sm:$0xff] %vm69, %v2647
  %2667 = vst.msk [vmem:[#allocation3 + $0x68] sm:$0xff] %vm69, %v2649
  %2668 = vst.msk [vmem:[#allocation3 + $0x70] sm:$0xff] %vm69, %v2651
  %2669 = vst.msk [vmem:[#allocation3 + $0x78] sm:$0xff] %vm69, %v2653
  %v2670 = vmul.f32 %v332, %v2503
  %v2671 = vmul.f32 %v337, %v2505
  %v2672 = vmul.f32 %v342, %v2507
  %v2673 = vmul.f32 %v347, %v2509
  %v2674 = vmul.f32 %v352, %v2511
  %v2675 = vmul.f32 %v357, %v2513
  %v2676 = vmul.f32 %v362, %v2515
  %v2677 = vmul.f32 %v367, %v2517
  %2686 = vrot.lane.b32.xlu0 %v2670, 64
  %v2687 = vpop.permute.xlu0 %2686
  %2688 = vrot.lane.b32.xlu0 %v2671, 64
  %v2689 = vpop.permute.xlu0 %2688
  %2690 = vrot.lane.b32.xlu0 %v2672, 64
  %v2691 = vpop.permute.xlu0 %2690
  %2692 = vrot.lane.b32.xlu0 %v2673, 64
  %v2693 = vpop.permute.xlu0 %2692
  %2694 = vrot.lane.b32.xlu0 %v2674, 64
  %v2695 = vpop.permute.xlu0 %2694
  %2696 = vrot.lane.b32.xlu0 %v2675, 64
  %v2697 = vpop.permute.xlu0 %2696
  %2698 = vrot.lane.b32.xlu0 %v2676, 64
  %v2699 = vpop.permute.xlu0 %2698
  %2700 = vrot.lane.b32.xlu0 %v2677, 64
  %v2701 = vpop.permute.xlu0 %2700
  %2710 = vst.msk [vmem:[#allocation4 + $0x40] sm:$0xff] %vm69, %v2687
  %2711 = vst.msk [vmem:[#allocation4 + $0x48] sm:$0xff] %vm69, %v2689
  %2712 = vst.msk [vmem:[#allocation4 + $0x50] sm:$0xff] %vm69, %v2691
  %2713 = vst.msk [vmem:[#allocation4 + $0x58] sm:$0xff] %vm69, %v2693
  %2714 = vst.msk [vmem:[#allocation4 + $0x60] sm:$0xff] %vm69, %v2695
  %2715 = vst.msk [vmem:[#allocation4 + $0x68] sm:$0xff] %vm69, %v2697
  %2716 = vst.msk [vmem:[#allocation4 + $0x70] sm:$0xff] %vm69, %v2699
  %2717 = vst.msk [vmem:[#allocation4 + $0x78] sm:$0xff] %vm69, %v2701
  %v2718 = vsub.f32 1.0, %v2503
  %v2719 = vsub.f32 1.0, %v2505
  %v2720 = vsub.f32 1.0, %v2507
  %v2721 = vsub.f32 1.0, %v2509
  %v2722 = vsub.f32 1.0, %v2511
  %v2723 = vsub.f32 1.0, %v2513
  %v2724 = vsub.f32 1.0, %v2515
  %v2725 = vsub.f32 1.0, %v2517
  %v2726 = vmul.f32 %v332, %v2718
  %v2727 = vmul.f32 %v337, %v2719
  %v2728 = vmul.f32 %v342, %v2720
  %v2729 = vmul.f32 %v347, %v2721
  %v2730 = vmul.f32 %v352, %v2722
  %v2731 = vmul.f32 %v357, %v2723
  %v2732 = vmul.f32 %v362, %v2724
  %v2733 = vmul.f32 %v367, %v2725
  %2734 = vrot.lane.b32.xlu0 %v1478, 64
  %v2735 = vpop.permute.xlu0 %2734
  %2736 = vrot.lane.b32.xlu0 %v1479, 64
  %v2737 = vpop.permute.xlu0 %2736
  %2738 = vrot.lane.b32.xlu0 %v1480, 64
  %v2739 = vpop.permute.xlu0 %2738
  %2740 = vrot.lane.b32.xlu0 %v1481, 64
  %v2741 = vpop.permute.xlu0 %2740
  %2742 = vrot.lane.b32.xlu0 %v1482, 64
  %v2743 = vpop.permute.xlu0 %2742
  %2744 = vrot.lane.b32.xlu0 %v1483, 64
  %v2745 = vpop.permute.xlu0 %2744
  %2746 = vrot.lane.b32.xlu0 %v1484, 64
  %v2747 = vpop.permute.xlu0 %2746
  %2748 = vrot.lane.b32.xlu0 %v1485, 64
  %v2749 = vpop.permute.xlu0 %2748
  %v2758 = vmul.f32 %v2726, %v2735
  %v2759 = vmul.f32 %v2727, %v2737
  %v2760 = vmul.f32 %v2728, %v2739
  %v2761 = vmul.f32 %v2729, %v2741
  %v2762 = vmul.f32 %v2730, %v2743
  %v2763 = vmul.f32 %v2731, %v2745
  %v2764 = vmul.f32 %v2732, %v2747
  %v2765 = vmul.f32 %v2733, %v2749
  %2774 = vrot.lane.b32.xlu0 %v2758, 64
  %v2775 = vpop.permute.xlu0 %2774
  %2776 = vrot.lane.b32.xlu0 %v2759, 64
  %v2777 = vpop.permute.xlu0 %2776
  %2778 = vrot.lane.b32.xlu0 %v2760, 64
  %v2779 = vpop.permute.xlu0 %2778
  %2780 = vrot.lane.b32.xlu0 %v2761, 64
  %v2781 = vpop.permute.xlu0 %2780
  %2782 = vrot.lane.b32.xlu0 %v2762, 64
  %v2783 = vpop.permute.xlu0 %2782
  %2784 = vrot.lane.b32.xlu0 %v2763, 64
  %v2785 = vpop.permute.xlu0 %2784
  %2786 = vrot.lane.b32.xlu0 %v2764, 64
  %v2787 = vpop.permute.xlu0 %2786
  %2788 = vrot.lane.b32.xlu0 %v2765, 64
  %v2789 = vpop.permute.xlu0 %2788
  %2798 = vst.msk [vmem:[#allocation5 + $0x40] sm:$0xff] %vm69, %v2775
  %2799 = vst.msk [vmem:[#allocation5 + $0x48] sm:$0xff] %vm69, %v2777
  %2800 = vst.msk [vmem:[#allocation5 + $0x50] sm:$0xff] %vm69, %v2779
  %2801 = vst.msk [vmem:[#allocation5 + $0x58] sm:$0xff] %vm69, %v2781
  %2802 = vst.msk [vmem:[#allocation5 + $0x60] sm:$0xff] %vm69, %v2783
  %2803 = vst.msk [vmem:[#allocation5 + $0x68] sm:$0xff] %vm69, %v2785
  %2804 = vst.msk [vmem:[#allocation5 + $0x70] sm:$0xff] %vm69, %v2787
  %2805 = vst.msk [vmem:[#allocation5 + $0x78] sm:$0xff] %vm69, %v2789
  %v2806 = vld [vmem:[%s1 + $0x8] sm:$0xff]
  %v2807 = vld [vmem:[#allocation2] sm:$0xff]
  %v2808 = vmul.f32 %v2807, %v2806
  %v2809 = vld [vmem:[#allocation3] sm:$0xff]
  %v2810 = vadd.f32 %v2808, %v2809
  %v2811 = vld [vmem:[%s1229] sm:$0xff]
  %2813 = vrot.lane.b32.xlu0 %v2806, 96
  %v2814 = vpop.permute.xlu0 %2813
  %v2816 = vmul.f32 %v2811, %v2814
  %v2817 = vld [vmem:[%s1236] sm:$0xff]
  %v2818 = vadd.f32 %v2816, %v2817
  %v2819 = vld [vmem:[#allocation4] sm:$0xff]
  %v2820 = vtanh.pop %v2810
  %v2821 = vmul.f32 %v2819, %v2820
  %v2822 = vld [vmem:[#allocation5] sm:$0xff]
  %v2823 = vadd.f32 %v2821, %v2822
  %v2824 = vld [vmem:[%s1244] sm:$0xff]
  %v2825 = vtanh.pop %v2818
  %v2826 = vmul.f32 %v2824, %v2825
  %v2827 = vld [vmem:[%s1248] sm:$0xff]
  %v2828 = vadd.f32 %v2826, %v2827
  %2829 = vst.msk [vmem:[%s11] sm:$0xff] %vm69, %v2823
  %2830 = vst.msk [vmem:[%s1252] sm:$0xff] %vm69, %v2828
  %v2831 = vld [vmem:[%s1254] sm:$0xff]
  %v2832 = vmul.f32 %v2831, %v2810
  %v2833 = vld [vmem:[%s1257] sm:$0xff]
  %v2834 = vadd.f32 %v2832, %v2833
  %v2835 = vld [vmem:[%s1260] sm:$0xff]
  %v2836 = vmul.f32 %v2835, %v2818
  %v2837 = vld [vmem:[%s1263] sm:$0xff]
  %v2838 = vadd.f32 %v2836, %v2837
  %v2839 = vld [vmem:[%s1266] sm:$0xff]
  %v2840 = vtanh.pop %v2834
  %v2841 = vmul.f32 %v2839, %v2840
  %v2842 = vld [vmem:[%s1270] sm:$0xff]
  %v2843 = vadd.f32 %v2841, %v2842
  %v2844 = vld [vmem:[%s1273] sm:$0xff]
  %v2845 = vtanh.pop %v2838
  %v2846 = vmul.f32 %v2844, %v2845
  %v2847 = vld [vmem:[%s1277] sm:$0xff]
  %v2848 = vadd.f32 %v2846, %v2847
  %2849 = vst.msk [vmem:[%s1280] sm:$0xff] %vm69, %v2843
  %2850 = vst.msk [vmem:[%s1282] sm:$0xff] %vm69, %v2848
  %v2851 = vld [vmem:[%s1284] sm:$0xff]
  %v2852 = vmul.f32 %v2851, %v2834
  %v2853 = vld [vmem:[%s1287] sm:$0xff]
  %v2854 = vadd.f32 %v2852, %v2853
  %v2855 = vld [vmem:[%s1290] sm:$0xff]
  %v2856 = vmul.f32 %v2855, %v2838
  %v2857 = vld [vmem:[%s1293] sm:$0xff]
  %v2858 = vadd.f32 %v2856, %v2857
  %v2859 = vld [vmem:[%s1296] sm:$0xff]
  %v2860 = vtanh.pop %v2854
  %v2861 = vmul.f32 %v2859, %v2860
  %v2862 = vld [vmem:[%s1300] sm:$0xff]
  %v2863 = vadd.f32 %v2861, %v2862
  %v2864 = vld [vmem:[%s1303] sm:$0xff]
  %v2865 = vtanh.pop %v2858
  %v2866 = vmul.f32 %v2864, %v2865
  %v2867 = vld [vmem:[%s1307] sm:$0xff]
  %v2868 = vadd.f32 %v2866, %v2867
  %2869 = vst.msk [vmem:[%s1310] sm:$0xff] %vm69, %v2863
  %2870 = vst.msk [vmem:[%s1312] sm:$0xff] %vm69, %v2868
  %v2871 = vld [vmem:[%s1314] sm:$0xff]
  %v2872 = vmul.f32 %v2871, %v2854
  %v2873 = vld [vmem:[%s1317] sm:$0xff]
  %v2874 = vadd.f32 %v2872, %v2873
  %v2875 = vld [vmem:[%s1320] sm:$0xff]
  %v2876 = vmul.f32 %v2875, %v2858
  %v2877 = vld [vmem:[%s1323] sm:$0xff]
  %v2878 = vadd.f32 %v2876, %v2877
  %v2879 = vld [vmem:[%s1326] sm:$0xff]
  %v2880 = vtanh.pop %v2874
  %v2881 = vmul.f32 %v2879, %v2880
  %v2882 = vld [vmem:[%s1330] sm:$0xff]
  %v2883 = vadd.f32 %v2881, %v2882
  %v2884 = vld [vmem:[%s1333] sm:$0xff]
  %v2885 = vtanh.pop %v2878
  %v2886 = vmul.f32 %v2884, %v2885
  %v2887 = vld [vmem:[%s1337] sm:$0xff]
  %v2888 = vadd.f32 %v2886, %v2887
  %2889 = vst.msk [vmem:[%s1340] sm:$0xff] %vm69, %v2883
  %2890 = vst.msk [vmem:[%s1342] sm:$0xff] %vm69, %v2888
  %v2891 = vld [vmem:[%s1344] sm:$0xff]
  %v2892 = vmul.f32 %v2891, %v2874
  %v2893 = vld [vmem:[%s1347] sm:$0xff]
  %v2894 = vadd.f32 %v2892, %v2893
  %v2895 = vld [vmem:[%s1350] sm:$0xff]
  %v2896 = vmul.f32 %v2895, %v2878
  %v2897 = vld [vmem:[%s1353] sm:$0xff]
  %v2898 = vadd.f32 %v2896, %v2897
  %v2899 = vld [vmem:[%s1356] sm:$0xff]
  %v2900 = vtanh.pop %v2894
  %v2901 = vmul.f32 %v2899, %v2900
  %v2902 = vld [vmem:[%s1360] sm:$0xff]
  %v2903 = vadd.f32 %v2901, %v2902
  %v2904 = vld [vmem:[%s1363] sm:$0xff]
  %v2905 = vtanh.pop %v2898
  %v2906 = vmul.f32 %v2904, %v2905
  %v2907 = vld [vmem:[%s1367] sm:$0xff]
  %v2908 = vadd.f32 %v2906, %v2907
  %2909 = vst.msk [vmem:[%s1370] sm:$0xff] %vm69, %v2903
  %2910 = vst.msk [vmem:[%s1372] sm:$0xff] %vm69, %v2908
  %v2911 = vld [vmem:[%s1374] sm:$0xff]
  %v2912 = vmul.f32 %v2911, %v2894
  %v2913 = vld [vmem:[%s1377] sm:$0xff]
  %v2914 = vadd.f32 %v2912, %v2913
  %v2915 = vld [vmem:[%s1380] sm:$0xff]
  %v2916 = vmul.f32 %v2915, %v2898
  %v2917 = vld [vmem:[%s1383] sm:$0xff]
  %v2918 = vadd.f32 %v2916, %v2917
  %v2919 = vld [vmem:[%s1386] sm:$0xff]
  %v2920 = vtanh.pop %v2914
  %v2921 = vmul.f32 %v2919, %v2920
  %v2922 = vld [vmem:[%s1390] sm:$0xff]
  %v2923 = vadd.f32 %v2921, %v2922
  %v2924 = vld [vmem:[%s1393] sm:$0xff]
  %v2925 = vtanh.pop %v2918
  %v2926 = vmul.f32 %v2924, %v2925
  %v2927 = vld [vmem:[%s1397] sm:$0xff]
  %v2928 = vadd.f32 %v2926, %v2927
  %2929 = vst.msk [vmem:[%s1400] sm:$0xff] %vm69, %v2923
  %2930 = vst.msk [vmem:[%s1402] sm:$0xff] %vm69, %v2928
  %v2931 = vld [vmem:[%s1404] sm:$0xff]
  %v2932 = vmul.f32 %v2931, %v2914
  %v2933 = vld [vmem:[%s1407] sm:$0xff]
  %v2934 = vadd.f32 %v2932, %v2933
  %v2935 = vld [vmem:[%s1410] sm:$0xff]
  %v2936 = vmul.f32 %v2935, %v2918
  %v2937 = vld [vmem:[%s1413] sm:$0xff]
  %v2938 = vadd.f32 %v2936, %v2937
  %v2939 = vld [vmem:[%s1416] sm:$0xff]
  %v2940 = vtanh.pop %v2934
  %v2941 = vmul.f32 %v2939, %v2940
  %v2942 = vld [vmem:[%s1420] sm:$0xff]
  %v2943 = vadd.f32 %v2941, %v2942
  %v2944 = vld [vmem:[%s1423] sm:$0xff]
  %v2945 = vtanh.pop %v2938
  %v2946 = vmul.f32 %v2944, %v2945
  %v2947 = vld [vmem:[%s1427] sm:$0xff]
  %v2948 = vadd.f32 %v2946, %v2947
  %2949 = vst.msk [vmem:[%s1430] sm:$0xff] %vm69, %v2943
  %2950 = vst.msk [vmem:[%s1432] sm:$0xff] %vm69, %v2948
  %v2951 = vld [vmem:[%s1434] sm:$0xff]
  %v2952 = vmul.f32 %v2951, %v2934
  %v2953 = vld [vmem:[%s1437] sm:$0xff]
  %v2954 = vadd.f32 %v2952, %v2953
  %v2955 = vld [vmem:[%s1440] sm:$0xff]
  %v2956 = vmul.f32 %v2955, %v2938
  %v2957 = vld [vmem:[%s1443] sm:$0xff]
  %v2958 = vadd.f32 %v2956, %v2957
  %v2959 = vld [vmem:[%s1446] sm:$0xff]
  %v2960 = vtanh.pop %v2954
  %v2961 = vmul.f32 %v2959, %v2960
  %v2962 = vld [vmem:[%s1450] sm:$0xff]
  %v2963 = vadd.f32 %v2961, %v2962
  %v2964 = vld [vmem:[%s1453] sm:$0xff]
  %v2965 = vtanh.pop %v2958
  %v2966 = vmul.f32 %v2964, %v2965
  %v2967 = vld [vmem:[%s1457] sm:$0xff]
  %v2968 = vadd.f32 %v2966, %v2967
  %2969 = vst.msk [vmem:[%s1460] sm:$0xff] %vm69, %v2963
  %2970 = vst.msk [vmem:[%s12] sm:$0xff] %vm69, %v2968
  %2971 = vst.msk [vmem:[%s13 + $0x8] sm:$0xff] %vm69, %v2954
  %2973 = vrot.lane.b32.xlu0 %v2958, 32
  %v2974 = vpop.permute.xlu0 %2973
  %2976 = vst.msk [vmem:[%s13 + $0x8] sm:$0xff] %vm1468, %v2974
  // Predicated region
  $region46: #{model_forward.1} parent=0 // pred_check
    _
  $region47: #{model_forward.1} parent=0 // pred_check_branch
    %2978 = sbr.rel (0) target = $region49
  $region48: #{model_forward.1} parent=0 // pred_region
    _
  $region49: #{model_forward.1} parent=0 // pred_fallthru
    _
  // Predicated region
  $region50: #{model_forward.1} parent=0 // pred_check
    _
  $region51: #{model_forward.1} parent=0 // pred_check_branch
    %2980 = sbr.rel (0) target = $region53
  $region52: #{model_forward.1} parent=0 // pred_region
    _
  $region53: #{model_forward.1} parent=0 // pred_fallthru
    _
  // Predicated region
  $region54: #{model_forward.1} parent=0 // pred_check
    _
  $region55: #{model_forward.1} parent=0 // pred_check_branch
    %2982 = sbr.rel (0) target = $region57
  $region56: #{model_forward.1} parent=0 // pred_region
    _
  $region57: #{model_forward.1} parent=0 // pred_fallthru
    _
  // Predicated region
  $region58: #{model_forward.1} parent=0 // pred_check
    _
  $region59: #{model_forward.1} parent=0 // pred_check_branch
    %2984 = sbr.rel (0) target = $region61
  $region60: #{model_forward.1} parent=0 // pred_region
    _
  $region61: #{model_forward.1} parent=0 // pred_fallthru
    _
  // Predicated region
  $region62: #{model_forward.1} parent=0 // pred_check
    _
  $region63: #{model_forward.1} parent=0 // pred_check_branch
    %2986 = sbr.rel (0) target = $region65
  $region64: #{model_forward.1} parent=0 // pred_region
    _
  $region65: #{model_forward.1} parent=0 // pred_fallthru
    _
  // Predicated region
  $region66: #{model_forward.1} parent=0 // pred_check
    _
  $region67: #{model_forward.1} parent=0 // pred_check_branch
    %2988 = sbr.rel (0) target = $region69
  $region68: #{model_forward.1} parent=0 // pred_region
    _
  $region69: #{model_forward.1} parent=0 // pred_fallthru
    _

</llo_original>
